<compile_context>
chip_gen: v7x
topology: tpu7x:2x2x1
jax: 0.10.0
libtpu: 0.0.40
codegen_flags: <defaults>
</compile_context>

<pallas_src>
import functools

import jax
import jax.numpy as jnp
from jax.experimental import pallas as pl
from jax.experimental.pallas import tpu as pltpu


def _round_up(x, m):
    return (x + m - 1) // m * m


def _pick_batch_tile(n, max_tile=8):
    """Largest divisor of n that is <= max_tile and keeps >= 2 grid steps."""
    target = max(1, min(max_tile, n // 2))
    for bt in range(target, 0, -1):
        if n % bt == 0:
            return bt
    return 1


# ---------------------------------------------------------------------------
# Fused kernel: conv1 + ReLU + conv2 + ReLU + GAP + classifier + sigmoid
# ---------------------------------------------------------------------------
def _fused_kernel(xcol_ref, w1_ref, b1_ref, w2_ref, b2_ref, wc_ref, bc_ref,
                  probs_ref, h1p_ref, *, H, W):
    B, HW, K1 = xcol_ref.shape               # (B_tile, H*W, 9*Cin padded)
    cm = w1_ref.shape[-1]                     # padded C_mid (128)
    M = B * HW
    inv_hw = 1.0 / float(H * W)

    # ---- conv1: ONE dense (M, K1) @ (K1, cm) matmul (im2col built outside) ---
    a = xcol_ref[...].reshape(M, K1)                                     # bf16
    h1 = jnp.maximum(
        jnp.dot(a, w1_ref[...], preferred_element_type=jnp.float32)
        + b1_ref[...], 0.0)                                              # f32 (M, cm)

    # ---- stage h1 (bf16) with a zero HALO RING == 'same' padding -------------
    # Only the ring is zeroed; the interior is fully overwritten every step.
    zr = jnp.zeros((B, 1, W + 2, cm), h1p_ref.dtype)
    zc = jnp.zeros((B, H, 1, cm), h1p_ref.dtype)
    h1p_ref[:, 0:1, :, :] = zr
    h1p_ref[:, H + 1:H + 2, :, :] = zr
    h1p_ref[:, 1:H + 1, 0:1, :] = zc
    h1p_ref[:, 1:H + 1, W + 1:W + 2, :] = zc
    h1p_ref[:, 1:H + 1, 1:W + 1, :] = h1.reshape(B, H, W, cm).astype(h1p_ref.dtype)

    # ---- conv2: build (M, 9*cm) im2col in VMEM, ONE K=9*cm matmul -------------
    col = jnp.concatenate(
        [h1p_ref[:, dy:dy + H, dx:dx + W, :].reshape(M, cm)
         for dy in range(3) for dx in range(3)], axis=-1)                # bf16 (M, 9*cm)
    h2 = jnp.maximum(
        jnp.dot(col, w2_ref[...], preferred_element_type=jnp.float32)
        + b2_ref[...], 0.0)                                              # f32 (M, cm)

    # ---- global average pool (blob_conv never leaves VMEM) -------------------
    pooled = jnp.sum(h2.reshape(B, HW, cm), axis=1) * inv_hw             # f32 (B, cm)

    # ---- fused classifier head + sigmoid --------------------------------------
    logits = jnp.dot(pooled.astype(jnp.bfloat16), wc_ref[...],
                     preferred_element_type=jnp.float32) + bc_ref[...]   # (B, nc_p)
    probs_ref[...] = jax.nn.sigmoid(logits).astype(probs_ref.dtype)


def fused_forward(xcol, w1, b1, w2, b2, wc, bc, *, H, W, b_tile):
    """xcol: [N, H*W, K1] bf16 -> sigmoid probs [N, nc_p] f32."""
    N, HW, K1 = xcol.shape
    cm = w1.shape[-1]
    nc_p = wc.shape[-1]
    num_tiles = N // b_tile

    flops = 2 * N * HW * (K1 * cm + 9 * cm * cm) + 2 * N * cm * nc_p
    transcendentals = N * nc_p
    bytes_accessed = (xcol.size * 2 + w1.size * 2 + w2.size * 2 + wc.size * 2
                      + (b1.size + b2.size + bc.size) * 4 + N * nc_p * 4)

    kernel = functools.partial(_fused_kernel, H=H, W=W)
    probs = pl.pallas_call(
        kernel,
        out_shape=jax.ShapeDtypeStruct((num_tiles, b_tile, nc_p), jnp.float32),
        grid=(num_tiles,),
        in_specs=[
            pl.BlockSpec((b_tile, HW, K1), lambda n: (n, 0, 0)),
            # Constant-index-map weights: Pallas keeps them resident (re-DMA
            # avoided); total weight VMEM < 1 MiB so double-buffer headroom is
            # a non-issue at these sizes (re-budget before scaling on v7x).
            pl.BlockSpec((K1, cm), lambda n: (0, 0)),
            pl.BlockSpec((1, cm), lambda n: (0, 0)),
            pl.BlockSpec((9 * cm, cm), lambda n: (0, 0)),
            pl.BlockSpec((1, cm), lambda n: (0, 0)),
            pl.BlockSpec((cm, nc_p), lambda n: (0, 0)),
            pl.BlockSpec((1, nc_p), lambda n: (0, 0)),
        ],
        out_specs=pl.BlockSpec((None, b_tile, nc_p), lambda n: (n, 0, 0)),
        scratch_shapes=[pltpu.VMEM((b_tile, H + 2, W + 2, cm), jnp.bfloat16)],
        compiler_params=pltpu.CompilerParams(
            dimension_semantics=("parallel",),      # v7x: split batch over 2 TCs
            vmem_limit_bytes=32 * 1024 * 1024,      # safe on v7x's smaller VMEM
        ),
        cost_estimate=pl.CostEstimate(
            flops=int(flops), transcendentals=int(transcendentals),
            bytes_accessed=int(bytes_accessed)),
    )(xcol, w1, b1, w2, b2, wc, bc)
    return probs.reshape(N, nc_p)


# ------------------------------- parameters --------------------------------
def init_params(key, c_in, c_mid, num_classes):
    k1, k2, k3 = jax.random.split(key, 3)
    return {
        # Conv body (vgg-style trunk, 2x conv3x3 + ReLU, 'same' padding)
        "w1": 0.05 * jax.random.normal(k1, (3, 3, c_in, c_mid), jnp.float32),
        "b1": jnp.zeros((c_mid,), jnp.float32),
        "w2": 0.05 * jax.random.normal(k2, (3, 3, c_mid, c_mid), jnp.float32),
        "b2": jnp.zeros((c_mid,), jnp.float32),
        # ADL classifier head (1x1 conv to num_classes + GAP == GAP + linear)
        "wc": 0.05 * jax.random.normal(k3, (c_mid, num_classes), jnp.float32),
        "bc": jnp.zeros((num_classes,), jnp.float32),
    }


def prepare_params(params, *, c_in, c_mid, num_classes):
    """Pad channel dims to 128 lanes, pre-reshape taps to im2col weight matrices,
    cast matmul operands to bf16."""
    cm_p = _round_up(c_mid, 128)
    nc_p = _round_up(num_classes, 128)
    k1 = 9 * c_in
    k1_p = _round_up(k1, 128)                 # lane-dense conv1 K (zero-padded)

    w1 = jnp.pad(params["w1"], ((0, 0), (0, 0), (0, 0), (0, cm_p - c_mid)))
    w1_col = jnp.pad(w1.reshape(k1, cm_p), ((0, k1_p - k1), (0, 0)))
    w2 = jnp.pad(params["w2"],
                 ((0, 0), (0, 0), (0, cm_p - c_mid), (0, cm_p - c_mid)))
    w2_col = w2.reshape(9 * cm_p, cm_p)       # (1152, 128): tap-major, ci-minor
    wc = jnp.pad(params["wc"], ((0, cm_p - c_mid), (0, nc_p - num_classes)))

    return {
        "w1": w1_col.astype(jnp.bfloat16),
        "b1": jnp.pad(params["b1"], (0, cm_p - c_mid)).reshape(1, cm_p),
        "w2": w2_col.astype(jnp.bfloat16),
        "b2": jnp.pad(params["b2"], (0, cm_p - c_mid)).reshape(1, cm_p),
        "wc": wc.astype(jnp.bfloat16),
        "bc": jnp.pad(params["bc"], (0, nc_p - num_classes)).reshape(1, nc_p),
        "num_classes": num_classes,
        "nc_p": nc_p,
        "k1_p": k1_p,
    }


def build_conv1_im2col(data, k1_p):
    """data: [N, C, H, W] NCHW f32 -> conv1 im2col [N, H*W, k1_p] bf16 (in XLA)."""
    x = jnp.transpose(data, (0, 2, 3, 1))                    # NCHW -> NHWC
    N, H, W, c_in = x.shape
    xp = jnp.pad(x, ((0, 0), (1, 1), (1, 1), (0, 0)))        # 'same' padding
    cols = [xp[:, dy:dy + H, dx:dx + W, :]
            for dy in range(3) for dx in range(3)]           # tap-major, ci-minor
    xcol = jnp.concatenate(cols, axis=-1).reshape(N, H * W, 9 * c_in)
    xcol = jnp.pad(xcol, ((0, 0), (0, 0), (0, k1_p - 9 * c_in)))
    return xcol.astype(jnp.bfloat16)


# ------------------------------- forward -----------------------------------
def adl_builder_forward(prep, data, rois, labels, *, training):
    """Mirrors adl_builder._forward.

    data  : [N, C, H, W]  (NCHW, like the PyTorch module)
    rois  : unused by the compute path (only squeezed/cast in the original)
    labels: [N, num_classes] multi-label targets (training only)
    """
    del rois
    num_classes = prep["num_classes"]
    N, _, H, W = data.shape

    xcol = build_conv1_im2col(data, prep["k1_p"])
    b_tile = _pick_batch_tile(N)

    probs_full = fused_forward(xcol, prep["w1"], prep["b1"], prep["w2"],
                               prep["b2"], prep["wc"], prep["bc"],
                               H=H, W=W, b_tile=b_tile)
    probs = probs_full[:, :num_classes]                      # drop padded classes

    return_dict = {}
    if training:
        # BCE on (N, 20) values: cheaper in plain jnp than another pallas_call.
        y = labels.astype(jnp.float32)
        logp = jnp.maximum(jnp.log(probs), -100.0)           # torch BCELoss clamp
        log1mp = jnp.maximum(jnp.log(1.0 - probs), -100.0)
        loss = -jnp.mean(y * logp + (1.0 - y) * log1mp)
        return_dict["losses"] = {"loss": loss.reshape(1)}    # loss.unsqueeze(0)
    else:
        return_dict["logits"] = probs                        # sigmoid(logits)
    return return_dict


# ------------------------- pure-JAX f32 reference ---------------------------
def _reference_probs(params, data):
    x = jnp.transpose(data, (0, 2, 3, 1))
    N, H, W, _ = x.shape

    def conv(xp, w, b):
        acc = 0.0
        for dy in range(3):
            for dx in range(3):
                acc = acc + jnp.einsum("nhwc,cf->nhwf",
                                       xp[:, dy:dy + H, dx:dx + W, :], w[dy, dx])
        return jnp.maximum(acc + b, 0.0)

    h1 = conv(jnp.pad(x, ((0, 0), (1, 1), (1, 1), (0, 0))), params["w1"], params["b1"])
    h2 = conv(jnp.pad(h1, ((0, 0), (1, 1), (1, 1), (0, 0))), params["w2"], params["b2"])
    pooled = jnp.mean(h2, axis=(1, 2))
    logits = pooled @ params["wc"] + params["bc"]
    return jax.nn.sigmoid(logits)


# --------------------------------- main -------------------------------------
if __name__ == "__main__":
    N, C_in, H, W = 2, 4, 16, 16
    C_mid = 32
    num_classes = 20

    root = jax.random.PRNGKey(0)
    k_data, k_lab, k_par = jax.random.split(root, 3)

    data = jax.random.normal(k_data, (N, C_in, H, W), jnp.float32)        # NCHW
    labels = (jax.random.uniform(k_lab, (N, num_classes)) > 0.5).astype(jnp.float32)
    rois = jnp.zeros((1, N, 5), jnp.float32)                              # unused

    params = init_params(k_par, C_in, C_mid, num_classes)
    prep = prepare_params(params, c_in=C_in, c_mid=C_mid, num_classes=num_classes)

    out_train = adl_builder_forward(prep, data, rois, labels, training=True)
    out_infer = adl_builder_forward(prep, data, rois, labels, training=False)

    jax.block_until_ready(out_train["losses"]["loss"])
    jax.block_until_ready(out_infer["logits"])

    assert out_train["losses"]["loss"].shape == (1,)
    assert out_infer["logits"].shape == (N, num_classes)
    assert bool(jnp.all(jnp.isfinite(out_train["losses"]["loss"])))
    assert bool(jnp.all((out_infer["logits"] >= 0.0) & (out_infer["logits"] <= 1.0)))

    # Parity check against a pure-JAX f32 reference (bf16-MXU tolerance).
    ref = _reference_probs(params, data)
    max_err = float(jnp.max(jnp.abs(out_infer["logits"] - ref)))
    assert max_err < 5e-2, f"max abs diff vs f32 reference too large: {max_err}"

    print("KERNEL_OK")
</pallas_src>

<mosaic_0001>
module attributes {stable_mosaic.version = 11 : i64} {
  func.func @_fused_kernel(%arg0: i32, %arg1: memref<1x256x128xbf16, #tpu.memory_space<vmem>>, %arg2: memref<128x128xbf16, #tpu.memory_space<vmem>>, %arg3: memref<1x128xf32, #tpu.memory_space<vmem>>, %arg4: memref<1152x128xbf16, #tpu.memory_space<vmem>>, %arg5: memref<1x128xf32, #tpu.memory_space<vmem>>, %arg6: memref<128x128xbf16, #tpu.memory_space<vmem>>, %arg7: memref<1x128xf32, #tpu.memory_space<vmem>>, %arg8: memref<1x1x128xf32, #tpu.memory_space<vmem>>, %arg9: memref<1x18x18x128xbf16, #tpu.memory_space<vmem>>) attributes {dimension_semantics = [#tpu.dimension_semantics<parallel>], iteration_bounds = array<i64: 2>, scalar_prefetch = 0 : i64, scratch_operands = 1 : i64, tpu.core_type = #tpu.core_type<tc>, window_params = [{transform_indices = @transform_0, window_bounds = array<i64: 1, 256, 128>}, {pipeline_mode = #tpu.pipeline_mode<synchronous>, transform_indices = @transform_1, window_bounds = array<i64: 128, 128>}, {pipeline_mode = #tpu.pipeline_mode<synchronous>, transform_indices = @transform_2, window_bounds = array<i64: 1, 128>}, {pipeline_mode = #tpu.pipeline_mode<synchronous>, transform_indices = @transform_3, window_bounds = array<i64: 1152, 128>}, {pipeline_mode = #tpu.pipeline_mode<synchronous>, transform_indices = @transform_4, window_bounds = array<i64: 1, 128>}, {pipeline_mode = #tpu.pipeline_mode<synchronous>, transform_indices = @transform_5, window_bounds = array<i64: 128, 128>}, {pipeline_mode = #tpu.pipeline_mode<synchronous>, transform_indices = @transform_6, window_bounds = array<i64: 1, 128>}, {transform_indices = @transform_7, window_bounds = array<i64: 1, 1, 128>}]} {
    %c0 = arith.constant 0 : index
    %c0_0 = arith.constant 0 : index
    %c0_1 = arith.constant 0 : index
    %0 = vector.load %arg1[%c0, %c0_0, %c0_1] : memref<1x256x128xbf16, #tpu.memory_space<vmem>>, vector<1x256x128xbf16>
    %1 = vector.shape_cast %0 : vector<1x256x128xbf16> to vector<256x128xbf16>
    %c0_2 = arith.constant 0 : index
    %c0_3 = arith.constant 0 : index
    %2 = vector.load %arg2[%c0_2, %c0_3] : memref<128x128xbf16, #tpu.memory_space<vmem>>, vector<128x128xbf16>
    %cst = arith.constant dense<0.000000e+00> : vector<256x128xf32>
    %3 = tpu.matmul %1, %2, %cst {dimension_numbers = #tpu.dot_dimension_numbers<[1], [0], [0], [1], [0, 0, 1, 1], [], []>} : vector<256x128xbf16>, vector<128x128xbf16>, vector<256x128xf32> -> vector<256x128xf32>
    %c0_4 = arith.constant 0 : index
    %c0_5 = arith.constant 0 : index
    %4 = vector.load %arg3[%c0_4, %c0_5] : memref<1x128xf32, #tpu.memory_space<vmem>>, vector<1x128xf32>
    %5 = vector.broadcast %4 : vector<1x128xf32> to vector<256x128xf32>
    %6 = arith.addf %3, %5 : vector<256x128xf32>
    %cst_6 = arith.constant 0.000000e+00 : f32
    %7 = vector.broadcast %cst_6 : f32 to vector<256x128xf32>
    %8 = arith.maximumf %6, %7 : vector<256x128xf32>
    %cst_7 = arith.constant 0.000000e+00 : bf16
    %9 = vector.broadcast %cst_7 : bf16 to vector<1x1x18x128xbf16>
    %cst_8 = arith.constant 0.000000e+00 : bf16
    %10 = vector.broadcast %cst_8 : bf16 to vector<1x16x1x128xbf16>
    %c0_9 = arith.constant 0 : index
    %c0_10 = arith.constant 0 : index
    %c0_11 = arith.constant 0 : index
    %c0_12 = arith.constant 0 : index
    %11 = vector.load %arg9[%c0_9, %c0_10, %c0_11, %c0_12] : memref<1x18x18x128xbf16, #tpu.memory_space<vmem>>, vector<1x1x18x128xbf16>
    tpu.vector_store %arg9[%c0_9, %c0_10, %c0_11, %c0_12], %9 {strides = array<i32>} : memref<1x18x18x128xbf16, #tpu.memory_space<vmem>>, vector<1x1x18x128xbf16>,
    %c0_13 = arith.constant 0 : index
    %c17 = arith.constant 17 : index
    %c0_14 = arith.constant 0 : index
    %c0_15 = arith.constant 0 : index
    %12 = vector.load %arg9[%c0_13, %c17, %c0_14, %c0_15] : memref<1x18x18x128xbf16, #tpu.memory_space<vmem>>, vector<1x1x18x128xbf16>
    tpu.vector_store %arg9[%c0_13, %c17, %c0_14, %c0_15], %9 {strides = array<i32>} : memref<1x18x18x128xbf16, #tpu.memory_space<vmem>>, vector<1x1x18x128xbf16>,
    %c0_16 = arith.constant 0 : index
    %c1 = arith.constant 1 : index
    %c0_17 = arith.constant 0 : index
    %c0_18 = arith.constant 0 : index
    %13 = vector.load %arg9[%c0_16, %c1, %c0_17, %c0_18] : memref<1x18x18x128xbf16, #tpu.memory_space<vmem>>, vector<1x16x1x128xbf16>
    tpu.vector_store %arg9[%c0_16, %c1, %c0_17, %c0_18], %10 {strides = array<i32>} : memref<1x18x18x128xbf16, #tpu.memory_space<vmem>>, vector<1x16x1x128xbf16>,
    %c0_19 = arith.constant 0 : index
    %c1_20 = arith.constant 1 : index
    %c17_21 = arith.constant 17 : index
    %c0_22 = arith.constant 0 : index
    %14 = vector.load %arg9[%c0_19, %c1_20, %c17_21, %c0_22] : memref<1x18x18x128xbf16, #tpu.memory_space<vmem>>, vector<1x16x1x128xbf16>
    tpu.vector_store %arg9[%c0_19, %c1_20, %c17_21, %c0_22], %10 {strides = array<i32>} : memref<1x18x18x128xbf16, #tpu.memory_space<vmem>>, vector<1x16x1x128xbf16>,
    %15 = vector.shape_cast %8 : vector<256x128xf32> to vector<1x16x16x128xf32>
    %16 = arith.truncf %15 : vector<1x16x16x128xf32> to vector<1x16x16x128xbf16>
    %c0_23 = arith.constant 0 : index
    %c1_24 = arith.constant 1 : index
    %c1_25 = arith.constant 1 : index
    %c0_26 = arith.constant 0 : index
    %17 = vector.load %arg9[%c0_23, %c1_24, %c1_25, %c0_26] : memref<1x18x18x128xbf16, #tpu.memory_space<vmem>>, vector<1x16x16x128xbf16>
    tpu.vector_store %arg9[%c0_23, %c1_24, %c1_25, %c0_26], %16 {strides = array<i32>} : memref<1x18x18x128xbf16, #tpu.memory_space<vmem>>, vector<1x16x16x128xbf16>,
    %c0_27 = arith.constant 0 : index
    %c0_28 = arith.constant 0 : index
    %c0_29 = arith.constant 0 : index
    %c0_30 = arith.constant 0 : index
    %18 = vector.load %arg9[%c0_27, %c0_28, %c0_29, %c0_30] : memref<1x18x18x128xbf16, #tpu.memory_space<vmem>>, vector<1x16x16x128xbf16>
    %19 = vector.shape_cast %18 : vector<1x16x16x128xbf16> to vector<256x128xbf16>
    %c0_31 = arith.constant 0 : index
    %c0_32 = arith.constant 0 : index
    %c1_33 = arith.constant 1 : index
    %c0_34 = arith.constant 0 : index
    %20 = vector.load %arg9[%c0_31, %c0_32, %c1_33, %c0_34] : memref<1x18x18x128xbf16, #tpu.memory_space<vmem>>, vector<1x16x16x128xbf16>
    %21 = vector.shape_cast %20 : vector<1x16x16x128xbf16> to vector<256x128xbf16>
    %c0_35 = arith.constant 0 : index
    %c0_36 = arith.constant 0 : index
    %c2 = arith.constant 2 : index
    %c0_37 = arith.constant 0 : index
    %22 = vector.load %arg9[%c0_35, %c0_36, %c2, %c0_37] : memref<1x18x18x128xbf16, #tpu.memory_space<vmem>>, vector<1x16x16x128xbf16>
    %23 = vector.shape_cast %22 : vector<1x16x16x128xbf16> to vector<256x128xbf16>
    %c0_38 = arith.constant 0 : index
    %c1_39 = arith.constant 1 : index
    %c0_40 = arith.constant 0 : index
    %c0_41 = arith.constant 0 : index
    %24 = vector.load %arg9[%c0_38, %c1_39, %c0_40, %c0_41] : memref<1x18x18x128xbf16, #tpu.memory_space<vmem>>, vector<1x16x16x128xbf16>
    %25 = vector.shape_cast %24 : vector<1x16x16x128xbf16> to vector<256x128xbf16>
    %c0_42 = arith.constant 0 : index
    %c1_43 = arith.constant 1 : index
    %c1_44 = arith.constant 1 : index
    %c0_45 = arith.constant 0 : index
    %26 = vector.load %arg9[%c0_42, %c1_43, %c1_44, %c0_45] : memref<1x18x18x128xbf16, #tpu.memory_space<vmem>>, vector<1x16x16x128xbf16>
    %27 = vector.shape_cast %26 : vector<1x16x16x128xbf16> to vector<256x128xbf16>
    %c0_46 = arith.constant 0 : index
    %c1_47 = arith.constant 1 : index
    %c2_48 = arith.constant 2 : index
    %c0_49 = arith.constant 0 : index
    %28 = vector.load %arg9[%c0_46, %c1_47, %c2_48, %c0_49] : memref<1x18x18x128xbf16, #tpu.memory_space<vmem>>, vector<1x16x16x128xbf16>
    %29 = vector.shape_cast %28 : vector<1x16x16x128xbf16> to vector<256x128xbf16>
    %c0_50 = arith.constant 0 : index
    %c2_51 = arith.constant 2 : index
    %c0_52 = arith.constant 0 : index
    %c0_53 = arith.constant 0 : index
    %30 = vector.load %arg9[%c0_50, %c2_51, %c0_52, %c0_53] : memref<1x18x18x128xbf16, #tpu.memory_space<vmem>>, vector<1x16x16x128xbf16>
    %31 = vector.shape_cast %30 : vector<1x16x16x128xbf16> to vector<256x128xbf16>
    %c0_54 = arith.constant 0 : index
    %c2_55 = arith.constant 2 : index
    %c1_56 = arith.constant 1 : index
    %c0_57 = arith.constant 0 : index
    %32 = vector.load %arg9[%c0_54, %c2_55, %c1_56, %c0_57] : memref<1x18x18x128xbf16, #tpu.memory_space<vmem>>, vector<1x16x16x128xbf16>
    %33 = vector.shape_cast %32 : vector<1x16x16x128xbf16> to vector<256x128xbf16>
    %c0_58 = arith.constant 0 : index
    %c2_59 = arith.constant 2 : index
    %c2_60 = arith.constant 2 : index
    %c0_61 = arith.constant 0 : index
    %34 = vector.load %arg9[%c0_58, %c2_59, %c2_60, %c0_61] : memref<1x18x18x128xbf16, #tpu.memory_space<vmem>>, vector<1x16x16x128xbf16>
    %35 = vector.shape_cast %34 : vector<1x16x16x128xbf16> to vector<256x128xbf16>
    %36 = tpu.concatenate %19, %21, %23, %25, %27, %29, %31, %33, %35 in 1 : vector<256x128xbf16>, vector<256x128xbf16>, vector<256x128xbf16>, vector<256x128xbf16>, vector<256x128xbf16>, vector<256x128xbf16>, vector<256x128xbf16>, vector<256x128xbf16>, vector<256x128xbf16> -> vector<256x1152xbf16>
    %c0_62 = arith.constant 0 : index
    %c0_63 = arith.constant 0 : index
    %37 = vector.load %arg4[%c0_62, %c0_63] : memref<1152x128xbf16, #tpu.memory_space<vmem>>, vector<1152x128xbf16>
    %cst_64 = arith.constant dense<0.000000e+00> : vector<256x128xf32>
    %38 = tpu.matmul %36, %37, %cst_64 {dimension_numbers = #tpu.dot_dimension_numbers<[1], [0], [0], [1], [0, 0, 1, 1], [], []>} : vector<256x1152xbf16>, vector<1152x128xbf16>, vector<256x128xf32> -> vector<256x128xf32>
    %c0_65 = arith.constant 0 : index
    %c0_66 = arith.constant 0 : index
    %39 = vector.load %arg5[%c0_65, %c0_66] : memref<1x128xf32, #tpu.memory_space<vmem>>, vector<1x128xf32>
    %40 = vector.broadcast %39 : vector<1x128xf32> to vector<256x128xf32>
    %41 = arith.addf %38, %40 : vector<256x128xf32>
    %cst_67 = arith.constant 0.000000e+00 : f32
    %42 = vector.broadcast %cst_67 : f32 to vector<256x128xf32>
    %43 = arith.maximumf %41, %42 : vector<256x128xf32>
    %44 = vector.shape_cast %43 : vector<256x128xf32> to vector<1x256x128xf32>
    %cst_68 = arith.constant dense<0.000000e+00> : vector<1x128xf32>
    %45 = vector.multi_reduction <add>, %44, %cst_68 [1] : vector<1x256x128xf32> to vector<1x128xf32>
    %cst_69 = arith.constant 3.906250e-03 : f32
    %46 = vector.broadcast %cst_69 : f32 to vector<1x128xf32>
    %47 = arith.mulf %45, %46 : vector<1x128xf32>
    %48 = arith.truncf %47 : vector<1x128xf32> to vector<1x128xbf16>
    %c0_70 = arith.constant 0 : index
    %c0_71 = arith.constant 0 : index
    %49 = vector.load %arg6[%c0_70, %c0_71] : memref<128x128xbf16, #tpu.memory_space<vmem>>, vector<128x128xbf16>
    %cst_72 = arith.constant dense<0.000000e+00> : vector<1x128xf32>
    %50 = tpu.matmul %48, %49, %cst_72 {dimension_numbers = #tpu.dot_dimension_numbers<[1], [0], [0], [1], [0, 0, 1, 1], [], []>} : vector<1x128xbf16>, vector<128x128xbf16>, vector<1x128xf32> -> vector<1x128xf32>
    %c0_73 = arith.constant 0 : index
    %c0_74 = arith.constant 0 : index
    %51 = vector.load %arg7[%c0_73, %c0_74] : memref<1x128xf32, #tpu.memory_space<vmem>>, vector<1x128xf32>
    %52 = arith.addf %50, %51 : vector<1x128xf32>
    %53 = arith.negf %52 : vector<1x128xf32>
    %54 = math.exp %53 : vector<1x128xf32>
    %cst_75 = arith.constant 1.000000e+00 : f32
    %55 = vector.broadcast %cst_75 : f32 to vector<1x128xf32>
    %56 = arith.addf %55, %54 : vector<1x128xf32>
    %57 = arith.divf %55, %56 : vector<1x128xf32>
    %c0_76 = arith.constant 0 : index
    %c0_77 = arith.constant 0 : index
    %c0_78 = arith.constant 0 : index
    %58 = vector.load %arg8[%c0_76, %c0_77, %c0_78] : memref<1x1x128xf32, #tpu.memory_space<vmem>>, vector<1x1x128xf32>
    %59 = vector.shape_cast %58 : vector<1x1x128xf32> to vector<1x128xf32>
    %60 = vector.shape_cast %57 : vector<1x128xf32> to vector<1x1x128xf32>
    tpu.vector_store %arg8[%c0_76, %c0_77, %c0_78], %60 {strides = array<i32>} : memref<1x1x128xf32, #tpu.memory_space<vmem>>, vector<1x1x128xf32>,
    return
  }
  func.func @transform_0(%arg0: i32) -> (i32, i32, i32) {
    %c0_i32 = arith.constant 0 : i32
    %c0_i32_0 = arith.constant 0 : i32
    %c0_i32_1 = arith.constant 0 : i32
    return %arg0, %c0_i32, %c0_i32_0 : i32, i32, i32
  }
  func.func @transform_1(%arg0: i32) -> (i32, i32) {
    %c0_i32 = arith.constant 0 : i32
    %c0_i32_0 = arith.constant 0 : i32
    %c0_i32_1 = arith.constant 0 : i32
    return %c0_i32, %c0_i32_0 : i32, i32
  }
  func.func @transform_2(%arg0: i32) -> (i32, i32) {
    %c0_i32 = arith.constant 0 : i32
    %c0_i32_0 = arith.constant 0 : i32
    %c0_i32_1 = arith.constant 0 : i32
    return %c0_i32, %c0_i32_0 : i32, i32
  }
  func.func @transform_3(%arg0: i32) -> (i32, i32) {
    %c0_i32 = arith.constant 0 : i32
    %c0_i32_0 = arith.constant 0 : i32
    %c0_i32_1 = arith.constant 0 : i32
    return %c0_i32, %c0_i32_0 : i32, i32
  }
  func.func @transform_4(%arg0: i32) -> (i32, i32) {
    %c0_i32 = arith.constant 0 : i32
    %c0_i32_0 = arith.constant 0 : i32
    %c0_i32_1 = arith.constant 0 : i32
    return %c0_i32, %c0_i32_0 : i32, i32
  }
  func.func @transform_5(%arg0: i32) -> (i32, i32) {
    %c0_i32 = arith.constant 0 : i32
    %c0_i32_0 = arith.constant 0 : i32
    %c0_i32_1 = arith.constant 0 : i32
    return %c0_i32, %c0_i32_0 : i32, i32
  }
  func.func @transform_6(%arg0: i32) -> (i32, i32) {
    %c0_i32 = arith.constant 0 : i32
    %c0_i32_0 = arith.constant 0 : i32
    %c0_i32_1 = arith.constant 0 : i32
    return %c0_i32, %c0_i32_0 : i32, i32
  }
  func.func @transform_7(%arg0: i32) -> (i32, i32, i32) {
    %c0_i32 = arith.constant 0 : i32
    %c0_i32_0 = arith.constant 0 : i32
    %c0_i32_1 = arith.constant 0 : i32
    return %arg0, %c0_i32, %c0_i32_0 : i32, i32, i32
  }
}

</mosaic_0001>

<llo_original>
// kernel: tpu_custom_call.1
$region0: #{tpu_custom_call.1}
  #allocation0 [shape = 'u32[]', space=smem, size = 0x4, offset = 0x4, fixed_abs, tag = 'smem constant byte address 0x4 - core index']
  #allocation1 [shape = 'u32[144,128]{1,0:T(1,128)}', space=vmem, size = 0x12000, scoped, tag = 'internal scratch']
  #allocation2 [shape = 'bf16[1,18,18,128]{3,2,1,0:T(8,128)(2,1)}', space=vmem, size = 0x1b000, scoped, tag = 'scratch operand']
  %s0 = inlined_call_operand.hbm [shape: bf16[2,256,128], index: 0, kind: input, shape index: {}]
  %s1 = inlined_call_operand.hbm [shape: bf16[128,128], index: 1, kind: input, shape index: {}]
  %s2 = inlined_call_operand.vmem [shape: f32[1,128], index: 2, kind: input, shape index: {}]
  %s3 = inlined_call_operand.hbm [shape: bf16[1152,128], index: 3, kind: input, shape index: {}]
  %s4 = inlined_call_operand.vmem [shape: f32[1,128], index: 4, kind: input, shape index: {}]
  %s5 = inlined_call_operand.hbm [shape: bf16[128,128], index: 5, kind: input, shape index: {}]
  %s6 = inlined_call_operand.vmem [shape: f32[1,128], index: 6, kind: input, shape index: {}]
  %s7 = inlined_call_operand.hbm [shape: f32[2,1,128], index: 7, kind: output, shape index: {}]
  %s8 = sld [smem:[#allocation0]]
  $region77: #{tpu_custom_call.1} parent=0
    _
  %s10 = ssub.s32 1, %s8
  %s11 = scalar_select 0, %s10, %s8
  $region1: #{tpu_custom_call.1} parent=0
    #allocation3 [shape = 'u8[131072]{0}', space=vmem, size = 0x20000, scoped, tag = 'input window, operand 0']
    #allocation4 [shape = 's32[2]{0}', space=sflag, size = 0x8, scoped, tag = 'scoped memory for tpu_custom_call.1']
    #allocation5 [shape = 's32[2]{0}', space=sflag, size = 0x8, scoped, tag = 'scoped memory for tpu_custom_call.1']
    #allocation6 [shape = 'u8[32768]{0}', space=vmem, size = 0x8000, scoped, tag = 'input window, operand 1, single buffered']
    #allocation7 [shape = 's32[1]{0}', space=sflag, size = 0x4, scoped, tag = 'scoped memory for tpu_custom_call.1']
    #allocation8 [shape = 'u8[294912]{0}', space=vmem, size = 0x48000, scoped, tag = 'input window, operand 3, single buffered']
    #allocation9 [shape = 'u8[32768]{0}', space=vmem, size = 0x8000, scoped, tag = 'input window, operand 5, single buffered']
    #allocation10 [shape = 's32[1]{0}', space=sflag, size = 0x4, scoped, tag = 'scoped memory for tpu_custom_call.1']
    #allocation11 [shape = 'u8[1024]{0}', space=vmem, size = 0x400, scoped, tag = 'output window, operand 0']
    %12 = vsyncpa [#allocation4], 0
    %s13 = scalar_lea.sflag [#allocation4], 1
    %14 = vsyncpa %s13, 0
    %15 = vsyncpa [#allocation7], 0
    %16 = vsyncpa [#allocation10], 0
    %17 = vsyncpa [#allocation5], 0
    %s18 = scalar_lea.sflag [#allocation5], 1
    %19 = vsyncpa %s18, 0
    loop: start=0, step=1, limit=4
    $region2: #{tpu_custom_call.1} parent=1 // loop_pre_header
      _
    $region3: #{tpu_custom_call.1} parent=1 // loop_header
      %s21 = sphi 0, %s25
      %p22 = scmp.ge.s32.totalorder %s21, 4
      %s31 = sphi 0, %s33
      %s34 = sphi 0, %s31
      %s35 = sphi 0, %s34
      %s51 = sphi 0, %s35
      %s55 = sphi 0, %s55
      %s57 = sphi 0, %s55
      %s58 = sphi 0, %s57
      %s72 = sphi 0, %s58
      %s76 = sphi 0, %s76
      %s78 = sphi 0, %s76
      %s79 = sphi 0, %s78
      %s93 = sphi 0, %s79
      %s97 = sphi 0, %s97
      %s99 = sphi 0, %s97
      %s100 = sphi 0, %s99
      %s114 = sphi 0, %s100
      %s118 = sphi 0, %s118
      %s120 = sphi 0, %s118
      %s121 = sphi 0, %s120
      %s135 = sphi 0, %s121
      %s139 = sphi 0, %s139
      %s141 = sphi 0, %s139
      %s142 = sphi 0, %s141
      %s156 = sphi 0, %s142
      %s160 = sphi 0, %s160
      %s162 = sphi 0, %s160
      %s163 = sphi 0, %s162
      %s177 = sphi 0, %s163
      %s183 = sphi 0, %s185
      %s186 = sphi 0, %s183
      %s187 = sphi 0, %s186
      %s203 = sphi 0, %s187
    $region4: #{tpu_custom_call.1} parent=1 // loop_header_branch
      %24 = sbr.rel (%p22) target = $region8
    $region5: #{tpu_custom_call.1} parent=1 // loop_body
      %s26 = ssub.s32 %s21, 1
      %s27 = ssub.s32 %s21, 2
      %s28 = sadd.s32 %s21, 1
      %s29 = ssub.s32 %s21, %s28
      %p30 = scmp.eq.s32.totalorder %s29, 0
      %s32 = sadd.s32 %s31, 1
      %s33 = scalar_select %p30, %s31, %s32
      %p36 = pneg %p30
      %p37 = scmp.eq.s32.totalorder %s21, 1
      %p38 = por %p36, %p37
      %p39 = scmp.ne.s32.totalorder %s31, %s34
      %p40 = scmp.eq.s32.totalorder %s21, 0
      %p41 = por %p39, %p40
      %p42 = scmp.ne.s32.totalorder %s31, %s34
      %p43 = scmp.eq.s32.totalorder %s26, 1
      %p44 = por %p42, %p43
      %p45 = scmp.ne.s32.totalorder %s34, %s35
      %p46 = scmp.eq.s32.totalorder %s26, 0
      %p47 = por %p45, %p46
      %p48 = scmp.ne.s32.totalorder %s34, %s35
      %p49 = scmp.eq.s32.totalorder %s27, 1
      %p50 = por %p48, %p49
      %p52 = scmp.ne.s32.totalorder %s35, %s51
      %p53 = scmp.eq.s32.totalorder %s27, 0
      %p54 = por %p52, %p53
      %s56 = sadd.s32 %s55, 1
      %p59 = scmp.eq.s32.totalorder %s21, 1
      %p60 = scmp.ne.s32.totalorder %s55, %s57
      %p61 = scmp.eq.s32.totalorder %s21, 0
      %p62 = por %p60, %p61
      %p63 = scmp.ne.s32.totalorder %s55, %s57
      %p64 = scmp.eq.s32.totalorder %s26, 1
      %p65 = por %p63, %p64
      %p66 = scmp.ne.s32.totalorder %s57, %s58
      %p67 = scmp.eq.s32.totalorder %s26, 0
      %p68 = por %p66, %p67
      %p69 = scmp.ne.s32.totalorder %s57, %s58
      %p70 = scmp.eq.s32.totalorder %s27, 1
      %p71 = por %p69, %p70
      %p73 = scmp.ne.s32.totalorder %s58, %s72
      %p74 = scmp.eq.s32.totalorder %s27, 0
      %p75 = por %p73, %p74
      %s77 = sadd.s32 %s76, 1
      %p80 = scmp.eq.s32.totalorder %s21, 1
      %p81 = scmp.ne.s32.totalorder %s76, %s78
      %p82 = scmp.eq.s32.totalorder %s21, 0
      %p83 = por %p81, %p82
      %p84 = scmp.ne.s32.totalorder %s76, %s78
      %p85 = scmp.eq.s32.totalorder %s26, 1
      %p86 = por %p84, %p85
      %p87 = scmp.ne.s32.totalorder %s78, %s79
      %p88 = scmp.eq.s32.totalorder %s26, 0
      %p89 = por %p87, %p88
      %p90 = scmp.ne.s32.totalorder %s78, %s79
      %p91 = scmp.eq.s32.totalorder %s27, 1
      %p92 = por %p90, %p91
      %p94 = scmp.ne.s32.totalorder %s79, %s93
      %p95 = scmp.eq.s32.totalorder %s27, 0
      %p96 = por %p94, %p95
      %s98 = sadd.s32 %s97, 1
      %p101 = scmp.eq.s32.totalorder %s21, 1
      %p102 = scmp.ne.s32.totalorder %s97, %s99
      %p103 = scmp.eq.s32.totalorder %s21, 0
      %p104 = por %p102, %p103
      %p105 = scmp.ne.s32.totalorder %s97, %s99
      %p106 = scmp.eq.s32.totalorder %s26, 1
      %p107 = por %p105, %p106
      %p108 = scmp.ne.s32.totalorder %s99, %s100
      %p109 = scmp.eq.s32.totalorder %s26, 0
      %p110 = por %p108, %p109
      %p111 = scmp.ne.s32.totalorder %s99, %s100
      %p112 = scmp.eq.s32.totalorder %s27, 1
      %p113 = por %p111, %p112
      %p115 = scmp.ne.s32.totalorder %s100, %s114
      %p116 = scmp.eq.s32.totalorder %s27, 0
      %p117 = por %p115, %p116
      %s119 = sadd.s32 %s118, 1
      %p122 = scmp.eq.s32.totalorder %s21, 1
      %p123 = scmp.ne.s32.totalorder %s118, %s120
      %p124 = scmp.eq.s32.totalorder %s21, 0
      %p125 = por %p123, %p124
      %p126 = scmp.ne.s32.totalorder %s118, %s120
      %p127 = scmp.eq.s32.totalorder %s26, 1
      %p128 = por %p126, %p127
      %p129 = scmp.ne.s32.totalorder %s120, %s121
      %p130 = scmp.eq.s32.totalorder %s26, 0
      %p131 = por %p129, %p130
      %p132 = scmp.ne.s32.totalorder %s120, %s121
      %p133 = scmp.eq.s32.totalorder %s27, 1
      %p134 = por %p132, %p133
      %p136 = scmp.ne.s32.totalorder %s121, %s135
      %p137 = scmp.eq.s32.totalorder %s27, 0
      %p138 = por %p136, %p137
      %s140 = sadd.s32 %s139, 1
      %p143 = scmp.eq.s32.totalorder %s21, 1
      %p144 = scmp.ne.s32.totalorder %s139, %s141
      %p145 = scmp.eq.s32.totalorder %s21, 0
      %p146 = por %p144, %p145
      %p147 = scmp.ne.s32.totalorder %s139, %s141
      %p148 = scmp.eq.s32.totalorder %s26, 1
      %p149 = por %p147, %p148
      %p150 = scmp.ne.s32.totalorder %s141, %s142
      %p151 = scmp.eq.s32.totalorder %s26, 0
      %p152 = por %p150, %p151
      %p153 = scmp.ne.s32.totalorder %s141, %s142
      %p154 = scmp.eq.s32.totalorder %s27, 1
      %p155 = por %p153, %p154
      %p157 = scmp.ne.s32.totalorder %s142, %s156
      %p158 = scmp.eq.s32.totalorder %s27, 0
      %p159 = por %p157, %p158
      %s161 = sadd.s32 %s160, 1
      %p164 = scmp.eq.s32.totalorder %s21, 1
      %p165 = scmp.ne.s32.totalorder %s160, %s162
      %p166 = scmp.eq.s32.totalorder %s21, 0
      %p167 = por %p165, %p166
      %p168 = scmp.ne.s32.totalorder %s160, %s162
      %p169 = scmp.eq.s32.totalorder %s26, 1
      %p170 = por %p168, %p169
      %p171 = scmp.ne.s32.totalorder %s162, %s163
      %p172 = scmp.eq.s32.totalorder %s26, 0
      %p173 = por %p171, %p172
      %p174 = scmp.ne.s32.totalorder %s162, %s163
      %p175 = scmp.eq.s32.totalorder %s27, 1
      %p176 = por %p174, %p175
      %p178 = scmp.ne.s32.totalorder %s163, %s177
      %p179 = scmp.eq.s32.totalorder %s27, 0
      %p180 = por %p178, %p179
      %s181 = ssub.s32 %s21, %s28
      %p182 = scmp.eq.s32.totalorder %s181, 0
      %s184 = sadd.s32 %s183, 1
      %s185 = scalar_select %p182, %s183, %s184
      %p188 = pneg %p182
      %p189 = scmp.eq.s32.totalorder %s21, 1
      %p190 = por %p188, %p189
      %p191 = scmp.ne.s32.totalorder %s183, %s186
      %p192 = scmp.eq.s32.totalorder %s21, 0
      %p193 = por %p191, %p192
      %p194 = scmp.ne.s32.totalorder %s183, %s186
      %p195 = scmp.eq.s32.totalorder %s26, 1
      %p196 = por %p194, %p195
      %p197 = scmp.ne.s32.totalorder %s186, %s187
      %p198 = scmp.eq.s32.totalorder %s26, 0
      %p199 = por %p197, %p198
      %p200 = scmp.ne.s32.totalorder %s186, %s187
      %p201 = scmp.eq.s32.totalorder %s27, 1
      %p202 = por %p200, %p201
      %p204 = scmp.ne.s32.totalorder %s187, %s203
      %p205 = scmp.eq.s32.totalorder %s27, 0
      %p206 = por %p204, %p205
      %p207 = scmp.le.s32.totalorder 1, %s21
      %p208 = scmp.lt.s32.totalorder %s21, 3
      %p209 = pnand %p207, %p208
      %p210 = pneg %p209
      // Predicated region
      $region9: #{tpu_custom_call.1} parent=5 // pred_check
        _
      $region10: #{tpu_custom_call.1} parent=5 // pred_check_branch
        %212 = sbr.rel (%p209) target = $region12
      $region11: #{tpu_custom_call.1} parent=5 // pred_region
        %s213 = ssub.s32 %s21, 1
        // Predicated region
        $region13: #{tpu_custom_call.1} parent=11 // pred_check
          %p214 = pneg %p68
        $region14: #{tpu_custom_call.1} parent=11 // pred_check_branch
          %216 = sbr.rel (%p214) target = $region16
        $region15: #{tpu_custom_call.1} parent=11 // pred_region
          %s218 = ssub.s32 1024, 1024
          %219 = vsyncadd [#allocation7], %s218
          %s220 = sshll.u32 [#allocation6], 4
          %s221 = int_to_ptr.vmem [resolvable:$true] %s220
          %226 = dma.hbm_to_vmem [thread:$0]  %s1, 1024, %s221, [#allocation7], 64, 64, 4
        $region16: #{tpu_custom_call.1} parent=11 // pred_fallthru
          _
        // Predicated region
        $region17: #{tpu_custom_call.1} parent=11 // pred_check
          %p227 = pneg %p89
        $region18: #{tpu_custom_call.1} parent=11 // pred_check_branch
          %229 = sbr.rel (%p227) target = $region20
        $region19: #{tpu_custom_call.1} parent=11 // pred_region
          _
        $region20: #{tpu_custom_call.1} parent=11 // pred_fallthru
          _
        // Predicated region
        $region21: #{tpu_custom_call.1} parent=11 // pred_check
          %p230 = pneg %p110
        $region22: #{tpu_custom_call.1} parent=11 // pred_check_branch
          %232 = sbr.rel (%p230) target = $region24
        $region23: #{tpu_custom_call.1} parent=11 // pred_region
          %s234 = ssub.s32 9216, 9216
          %235 = vsyncadd [#allocation7], %s234
          %s236 = sshll.u32 [#allocation8], 4
          %s237 = int_to_ptr.vmem [resolvable:$true] %s236
          %242 = dma.hbm_to_vmem [thread:$0]  %s3, 9216, %s237, [#allocation7], 64, 64, 4
        $region24: #{tpu_custom_call.1} parent=11 // pred_fallthru
          _
        // Predicated region
        $region25: #{tpu_custom_call.1} parent=11 // pred_check
          %p243 = pneg %p131
        $region26: #{tpu_custom_call.1} parent=11 // pred_check_branch
          %245 = sbr.rel (%p243) target = $region28
        $region27: #{tpu_custom_call.1} parent=11 // pred_region
          _
        $region28: #{tpu_custom_call.1} parent=11 // pred_fallthru
          _
        // Predicated region
        $region29: #{tpu_custom_call.1} parent=11 // pred_check
          %p246 = pneg %p152
        $region30: #{tpu_custom_call.1} parent=11 // pred_check_branch
          %248 = sbr.rel (%p246) target = $region32
        $region31: #{tpu_custom_call.1} parent=11 // pred_region
          %s250 = ssub.s32 1024, 1024
          %251 = vsyncadd [#allocation10], %s250
          %s252 = sshll.u32 [#allocation9], 4
          %s253 = int_to_ptr.vmem [resolvable:$true] %s252
          %258 = dma.hbm_to_vmem [thread:$0]  %s5, 1024, %s253, [#allocation10], 64, 64, 4
        $region32: #{tpu_custom_call.1} parent=11 // pred_fallthru
          _
        // Predicated region
        $region33: #{tpu_custom_call.1} parent=11 // pred_check
          %p259 = pneg %p173
        $region34: #{tpu_custom_call.1} parent=11 // pred_check_branch
          %261 = sbr.rel (%p259) target = $region36
        $region35: #{tpu_custom_call.1} parent=11 // pred_region
          _
        $region36: #{tpu_custom_call.1} parent=11 // pred_fallthru
          _
      $region12: #{tpu_custom_call.1} parent=5 // pred_fallthru
        _
      %p262 = scmp.lt.s32.totalorder %s21, 2
      // Predicated region
      $region37: #{tpu_custom_call.1} parent=5 // pred_check
        %p263 = pneg %p262
      $region38: #{tpu_custom_call.1} parent=5 // pred_check_branch
        %265 = sbr.rel (%p263) target = $region40
      $region39: #{tpu_custom_call.1} parent=5 // pred_region
        // Predicated region
        $region41: #{tpu_custom_call.1} parent=39 // pred_check
          %p266 = pneg %p41
        $region42: #{tpu_custom_call.1} parent=39 // pred_check_branch
          %268 = sbr.rel (%p266) target = $region44
        $region43: #{tpu_custom_call.1} parent=39 // pred_region
          %s269 = sand.u32 %s31, 1
          %s270 = scalar_lea.sflag [#allocation4], %s269
          %s271 = sand.u32 %s31, 1
          %s272 = smul.addr %s271, 128
          %s273 = scalar_lea.vmem [#allocation3], %s272
          %s275 = ssub.s32 2048, 2048
          %276 = vsyncadd %s270, %s275
          %s277 = smul.addr %s21, 32
          %s278 = smul.addr %s277, 64
          %s279 = scalar_lea.hbm %s0, %s278
          %s280 = sshll.u32 %s273, 4
          %s281 = int_to_ptr.vmem [resolvable:$true] %s280
          %286 = dma.hbm_to_vmem [thread:$0]  %s279, 2048, %s281, %s270, 64, 64, 4
        $region44: #{tpu_custom_call.1} parent=39 // pred_fallthru
          _
      $region40: #{tpu_custom_call.1} parent=5 // pred_fallthru
        _
      %p287 = scmp.le.s32.totalorder 1, %s21
      %p288 = scmp.lt.s32.totalorder %s21, 3
      %p289 = pnand %p287, %p288
      %p290 = pneg %p289
      // Predicated region
      $region45: #{tpu_custom_call.1} parent=5 // pred_check
        _
      $region46: #{tpu_custom_call.1} parent=5 // pred_check_branch
        %292 = sbr.rel (%p289) target = $region48
      $region47: #{tpu_custom_call.1} parent=5 // pred_region
        %s293 = ssub.s32 %s21, 1
        %s294 = sand.u32 %s34, 1
        %s295 = scalar_lea.sflag [#allocation4], %s294
        %s296 = sand.u32 %s34, 1
        %s297 = smul.addr %s296, 128
        %s298 = scalar_lea.vmem [#allocation3], %s297
        // Predicated region
        $region49: #{tpu_custom_call.1} parent=47 // pred_check
          %p299 = pneg %p47
        $region50: #{tpu_custom_call.1} parent=47 // pred_check_branch
          %301 = sbr.rel (%p299) target = $region52
        $region51: #{tpu_custom_call.1} parent=47 // pred_region
          %302 = dma.done %s295, 2048
        $region52: #{tpu_custom_call.1} parent=47 // pred_fallthru
          _
        // Predicated region
        $region53: #{tpu_custom_call.1} parent=47 // pred_check
          %p303 = pneg %p68
        $region54: #{tpu_custom_call.1} parent=47 // pred_check_branch
          %305 = sbr.rel (%p303) target = $region56
        $region55: #{tpu_custom_call.1} parent=47 // pred_region
          %306 = dma.done [#allocation7], 1024
        $region56: #{tpu_custom_call.1} parent=47 // pred_fallthru
          _
        // Predicated region
        $region57: #{tpu_custom_call.1} parent=47 // pred_check
          %p307 = pneg %p110
        $region58: #{tpu_custom_call.1} parent=47 // pred_check_branch
          %309 = sbr.rel (%p307) target = $region60
        $region59: #{tpu_custom_call.1} parent=47 // pred_region
          %310 = dma.done [#allocation7], 9216
        $region60: #{tpu_custom_call.1} parent=47 // pred_fallthru
          _
        // Predicated region
        $region61: #{tpu_custom_call.1} parent=47 // pred_check
          %p311 = pneg %p152
        $region62: #{tpu_custom_call.1} parent=47 // pred_check_branch
          %313 = sbr.rel (%p311) target = $region64
        $region63: #{tpu_custom_call.1} parent=47 // pred_region
          %314 = dma.done [#allocation10], 1024
        $region64: #{tpu_custom_call.1} parent=47 // pred_fallthru
          _
        %s315 = sand.u32 %s34, 1
        %s316 = scalar_lea.sflag [#allocation4], %s315
        %s317 = sand.u32 %s34, 1
        %s318 = smul.addr %s317, 128
        %s319 = scalar_lea.vmem [#allocation3], %s318
        %p320 = pneg %p47
        %p321 = pneg %p44
        %p322 = pneg %p68
        %p323 = pneg %p65
        %p324 = pneg %p89
        %p325 = pneg %p86
        %p326 = pneg %p110
        %p327 = pneg %p107
        %p328 = pneg %p131
        %p329 = pneg %p128
        %p330 = pneg %p152
        %p331 = pneg %p149
        %p332 = pneg %p173
        %p333 = pneg %p170
        %p334 = pneg %p199
        %p335 = pneg %p196
        %s336 = sand.u32 %s186, 1
        %s337 = scalar_lea.sflag [#allocation5], %s336
        %s338 = sand.u32 %s186, 1
        %s339 = scalar_lea.vmem [#allocation11], %s338
        %v341 = vld [vmem:[%s298] sm:$0xf]
        %v342 = vld [vmem:[%s298 + $0x4] sm:$0xf]
        %v343 = vld [vmem:[%s298 + $0x8] sm:$0xf]
        %v344 = vld [vmem:[%s298 + $0xc] sm:$0xf]
        %v345 = vld [vmem:[%s298 + $0x10] sm:$0xf]
        %v346 = vld [vmem:[%s298 + $0x14] sm:$0xf]
        %v347 = vld [vmem:[%s298 + $0x18] sm:$0xf]
        %v348 = vld [vmem:[%s298 + $0x1c] sm:$0xf]
        %v349 = vld [vmem:[%s298 + $0x20] sm:$0xf]
        %v350 = vld [vmem:[%s298 + $0x24] sm:$0xf]
        %v351 = vld [vmem:[%s298 + $0x28] sm:$0xf]
        %v352 = vld [vmem:[%s298 + $0x2c] sm:$0xf]
        %v353 = vld [vmem:[%s298 + $0x30] sm:$0xf]
        %v354 = vld [vmem:[%s298 + $0x34] sm:$0xf]
        %v355 = vld [vmem:[%s298 + $0x38] sm:$0xf]
        %v356 = vld [vmem:[%s298 + $0x3c] sm:$0xf]
        %v357 = vld [vmem:[%s298 + $0x40] sm:$0xf]
        %v358 = vld [vmem:[%s298 + $0x44] sm:$0xf]
        %v359 = vld [vmem:[%s298 + $0x48] sm:$0xf]
        %v360 = vld [vmem:[%s298 + $0x4c] sm:$0xf]
        %v361 = vld [vmem:[%s298 + $0x50] sm:$0xf]
        %v362 = vld [vmem:[%s298 + $0x54] sm:$0xf]
        %v363 = vld [vmem:[%s298 + $0x58] sm:$0xf]
        %v364 = vld [vmem:[%s298 + $0x5c] sm:$0xf]
        %v365 = vld [vmem:[%s298 + $0x60] sm:$0xf]
        %v366 = vld [vmem:[%s298 + $0x64] sm:$0xf]
        %v367 = vld [vmem:[%s298 + $0x68] sm:$0xf]
        %v368 = vld [vmem:[%s298 + $0x6c] sm:$0xf]
        %v369 = vld [vmem:[%s298 + $0x70] sm:$0xf]
        %v370 = vld [vmem:[%s298 + $0x74] sm:$0xf]
        %v371 = vld [vmem:[%s298 + $0x78] sm:$0xf]
        %v372 = vld [vmem:[%s298 + $0x7c] sm:$0xf]
        %v373 = vld [vmem:[#allocation6] sm:$0xf]
        %v374 = vld [vmem:[#allocation6 + $0x4] sm:$0xf]
        %v375 = vld [vmem:[#allocation6 + $0x8] sm:$0xf]
        %v376 = vld [vmem:[#allocation6 + $0xc] sm:$0xf]
        %v377 = vld [vmem:[#allocation6 + $0x10] sm:$0xf]
        %v378 = vld [vmem:[#allocation6 + $0x14] sm:$0xf]
        %v379 = vld [vmem:[#allocation6 + $0x18] sm:$0xf]
        %v380 = vld [vmem:[#allocation6 + $0x1c] sm:$0xf]
        %v381 = vld [vmem:[#allocation6 + $0x20] sm:$0xf]
        %v382 = vld [vmem:[#allocation6 + $0x24] sm:$0xf]
        %v383 = vld [vmem:[#allocation6 + $0x28] sm:$0xf]
        %v384 = vld [vmem:[#allocation6 + $0x2c] sm:$0xf]
        %v385 = vld [vmem:[#allocation6 + $0x30] sm:$0xf]
        %v386 = vld [vmem:[#allocation6 + $0x34] sm:$0xf]
        %v387 = vld [vmem:[#allocation6 + $0x38] sm:$0xf]
        %v388 = vld [vmem:[#allocation6 + $0x3c] sm:$0xf]
        %v389 = vld [vmem:[%s2] sm:$0x1]
        %v391 = vlaneseq
        %v392 = vshrl.u32 %v391, 7
        %v393 = vsub.s32 0, %v392
        %v394 = vrot.slane %v389, %v393
        %v428 = vunpack.c.l.b16 %v341
        %v429 = vunpack.c.l.b16 %v342
        %v430 = vunpack.c.l.b16 %v343
        %v431 = vunpack.c.l.b16 %v344
        %v432 = vunpack.c.l.b16 %v345
        %v433 = vunpack.c.l.b16 %v346
        %v434 = vunpack.c.l.b16 %v347
        %v435 = vunpack.c.l.b16 %v348
        %v436 = vunpack.c.l.b16 %v349
        %v437 = vunpack.c.l.b16 %v350
        %v438 = vunpack.c.l.b16 %v351
        %v439 = vunpack.c.l.b16 %v352
        %v440 = vunpack.c.l.b16 %v353
        %v441 = vunpack.c.l.b16 %v354
        %v442 = vunpack.c.l.b16 %v355
        %v443 = vunpack.c.l.b16 %v356
        %v444 = vunpack.c.l.b16 %v357
        %v445 = vunpack.c.l.b16 %v358
        %v446 = vunpack.c.l.b16 %v359
        %v447 = vunpack.c.l.b16 %v360
        %v448 = vunpack.c.l.b16 %v361
        %v449 = vunpack.c.l.b16 %v362
        %v450 = vunpack.c.l.b16 %v363
        %v451 = vunpack.c.l.b16 %v364
        %v452 = vunpack.c.l.b16 %v365
        %v453 = vunpack.c.l.b16 %v366
        %v454 = vunpack.c.l.b16 %v367
        %v455 = vunpack.c.l.b16 %v368
        %v456 = vunpack.c.l.b16 %v369
        %v457 = vunpack.c.l.b16 %v370
        %v458 = vunpack.c.l.b16 %v371
        %v459 = vunpack.c.l.b16 %v372
        %v460 = vpack.c.b16 %v429, %v428
        %v461 = vpack.c.b16 %v431, %v430
        %v462 = vpack.c.b16 %v433, %v432
        %v463 = vpack.c.b16 %v435, %v434
        %v464 = vpack.c.b16 %v437, %v436
        %v465 = vpack.c.b16 %v439, %v438
        %v466 = vpack.c.b16 %v441, %v440
        %v467 = vpack.c.b16 %v443, %v442
        %v468 = vpack.c.b16 %v445, %v444
        %v469 = vpack.c.b16 %v447, %v446
        %v470 = vpack.c.b16 %v449, %v448
        %v471 = vpack.c.b16 %v451, %v450
        %v472 = vpack.c.b16 %v453, %v452
        %v473 = vpack.c.b16 %v455, %v454
        %v474 = vpack.c.b16 %v457, %v456
        %v475 = vpack.c.b16 %v459, %v458
        %v508 = vunpack.c.l.b16 %v373
        %v509 = vunpack.c.l.b16 %v374
        %v510 = vunpack.c.l.b16 %v375
        %v511 = vunpack.c.l.b16 %v376
        %v512 = vunpack.c.l.b16 %v377
        %v513 = vunpack.c.l.b16 %v378
        %v514 = vunpack.c.l.b16 %v379
        %v515 = vunpack.c.l.b16 %v380
        %v516 = vunpack.c.l.b16 %v381
        %v517 = vunpack.c.l.b16 %v382
        %v518 = vunpack.c.l.b16 %v383
        %v519 = vunpack.c.l.b16 %v384
        %v520 = vunpack.c.l.b16 %v385
        %v521 = vunpack.c.l.b16 %v386
        %v522 = vunpack.c.l.b16 %v387
        %v523 = vunpack.c.l.b16 %v388
        %v524 = vpack.c.b16 %v509, %v508
        %v525 = vpack.c.b16 %v511, %v510
        %v526 = vpack.c.b16 %v513, %v512
        %v527 = vpack.c.b16 %v515, %v514
        %v528 = vpack.c.b16 %v517, %v516
        %v529 = vpack.c.b16 %v519, %v518
        %v530 = vpack.c.b16 %v521, %v520
        %v531 = vpack.c.b16 %v523, %v522
        %540 = vmatprep.subr.bf16.mxu0 0
        %541 = vmatpush1.bf16.msra.mxu0 %v524
        %542 = vmatprep.subr.bf16.mxu0 0
        %543 = vmatpush1.bf16.msra.mxu0 %v525
        %544 = vmatprep.subr.bf16.mxu0 0
        %545 = vmatpush1.bf16.msra.mxu0 %v526
        %546 = vmatprep.subr.bf16.mxu0 0
        %547 = vmatpush1.bf16.msra.mxu0 %v527
        %548 = vmatprep.subr.bf16.mxu0 0
        %549 = vmatpush1.bf16.msra.mxu0 %v528
        %550 = vmatprep.subr.bf16.mxu0 0
        %551 = vmatpush1.bf16.msra.mxu0 %v529
        %552 = vmatprep.subr.bf16.mxu0 0
        %553 = vmatpush1.bf16.msra.mxu0 %v530
        %554 = vmatprep.subr.bf16.mxu0 0
        %555 = vmatpush1.bf16.msra.mxu0 %v531
        %556 = vmatprep.subr.bf16.mxu0 0
        %557 = vmatpush1.bf16.msra.mxu0 0
        %558 = vmatprep.subr.bf16.mxu0 0
        %559 = vmatpush1.bf16.msra.mxu0 0
        %560 = vmatprep.subr.bf16.mxu0 0
        %561 = vmatpush1.bf16.msra.mxu0 0
        %562 = vmatprep.subr.bf16.mxu0 0
        %563 = vmatpush1.bf16.msra.mxu0 0
        %564 = vmatprep.subr.bf16.mxu0 0
        %565 = vmatpush1.bf16.msra.mxu0 0
        %566 = vmatprep.subr.bf16.mxu0 0
        %567 = vmatpush1.bf16.msra.mxu0 0
        %568 = vmatprep.subr.bf16.mxu0 0
        %569 = vmatpush1.bf16.msra.mxu0 0
        %570 = vmatprep.subr.bf16.mxu0 0
        %571 = vmatpush1.bf16.msra.mxu0 0
        %572 = vmatprep.mubr.bf16.mxu0 0
        %573 = vmatmul.mubr.bf16.gmra.mrb[0].mxu0 %v460
        %v574 = vpop.f32.mrb[0].mxu0
        %v575 = vadd.f32 %v394, %v574
        %v576 = vpop.f32.mrb[0].mxu0
        %v577 = vpop.f32.mrb[0].mxu0
        %v578 = vadd.f32 %v394, %v577
        %v579 = vpop.f32.mrb[0].mxu0
        %580 = vmatprep.mubr.bf16.mxu0 0
        %581 = vmatmul.mubr.bf16.gmra.mrb[0].mxu0 %v461
        %v582 = vpop.f32.mrb[0].mxu0
        %v583 = vadd.f32 %v394, %v582
        %v584 = vpop.f32.mrb[0].mxu0
        %v585 = vpop.f32.mrb[0].mxu0
        %v586 = vadd.f32 %v394, %v585
        %v587 = vpop.f32.mrb[0].mxu0
        %588 = vmatprep.mubr.bf16.mxu0 0
        %589 = vmatmul.mubr.bf16.gmra.mrb[0].mxu0 %v462
        %v590 = vpop.f32.mrb[0].mxu0
        %v591 = vadd.f32 %v394, %v590
        %v592 = vpop.f32.mrb[0].mxu0
        %v593 = vpop.f32.mrb[0].mxu0
        %v594 = vadd.f32 %v394, %v593
        %v595 = vpop.f32.mrb[0].mxu0
        %596 = vmatprep.mubr.bf16.mxu0 0
        %597 = vmatmul.mubr.bf16.gmra.mrb[0].mxu0 %v463
        %v598 = vpop.f32.mrb[0].mxu0
        %v599 = vadd.f32 %v394, %v598
        %v600 = vpop.f32.mrb[0].mxu0
        %v601 = vpop.f32.mrb[0].mxu0
        %v602 = vadd.f32 %v394, %v601
        %v603 = vpop.f32.mrb[0].mxu0
        %604 = vmatprep.mubr.bf16.mxu0 0
        %605 = vmatmul.mubr.bf16.gmra.mrb[0].mxu0 %v464
        %v606 = vpop.f32.mrb[0].mxu0
        %v607 = vadd.f32 %v394, %v606
        %v608 = vpop.f32.mrb[0].mxu0
        %v609 = vpop.f32.mrb[0].mxu0
        %v610 = vadd.f32 %v394, %v609
        %v611 = vpop.f32.mrb[0].mxu0
        %612 = vmatprep.mubr.bf16.mxu0 0
        %613 = vmatmul.mubr.bf16.gmra.mrb[0].mxu0 %v465
        %v614 = vpop.f32.mrb[0].mxu0
        %v615 = vadd.f32 %v394, %v614
        %v616 = vpop.f32.mrb[0].mxu0
        %v617 = vpop.f32.mrb[0].mxu0
        %v618 = vadd.f32 %v394, %v617
        %v619 = vpop.f32.mrb[0].mxu0
        %620 = vmatprep.mubr.bf16.mxu0 0
        %621 = vmatmul.mubr.bf16.gmra.mrb[0].mxu0 %v466
        %v622 = vpop.f32.mrb[0].mxu0
        %v623 = vadd.f32 %v394, %v622
        %v624 = vpop.f32.mrb[0].mxu0
        %v625 = vpop.f32.mrb[0].mxu0
        %v626 = vadd.f32 %v394, %v625
        %v627 = vpop.f32.mrb[0].mxu0
        %628 = vmatprep.mubr.bf16.mxu0 0
        %629 = vmatmul.mubr.bf16.gmra.mrb[0].mxu0 %v467
        %v630 = vpop.f32.mrb[0].mxu0
        %v631 = vadd.f32 %v394, %v630
        %v632 = vpop.f32.mrb[0].mxu0
        %v633 = vpop.f32.mrb[0].mxu0
        %v634 = vadd.f32 %v394, %v633
        %v635 = vpop.f32.mrb[0].mxu0
        %636 = vmatprep.mubr.bf16.mxu0 0
        %637 = vmatmul.mubr.bf16.gmra.mrb[0].mxu0 %v468
        %v638 = vpop.f32.mrb[0].mxu0
        %v639 = vadd.f32 %v394, %v638
        %v640 = vpop.f32.mrb[0].mxu0
        %v641 = vpop.f32.mrb[0].mxu0
        %v642 = vadd.f32 %v394, %v641
        %v643 = vpop.f32.mrb[0].mxu0
        %644 = vmatprep.mubr.bf16.mxu0 0
        %645 = vmatmul.mubr.bf16.gmra.mrb[0].mxu0 %v469
        %v646 = vpop.f32.mrb[0].mxu0
        %v647 = vadd.f32 %v394, %v646
        %v648 = vpop.f32.mrb[0].mxu0
        %v649 = vpop.f32.mrb[0].mxu0
        %v650 = vadd.f32 %v394, %v649
        %v651 = vpop.f32.mrb[0].mxu0
        %652 = vmatprep.mubr.bf16.mxu0 0
        %653 = vmatmul.mubr.bf16.gmra.mrb[0].mxu0 %v470
        %v654 = vpop.f32.mrb[0].mxu0
        %v655 = vadd.f32 %v394, %v654
        %v656 = vpop.f32.mrb[0].mxu0
        %v657 = vpop.f32.mrb[0].mxu0
        %v658 = vadd.f32 %v394, %v657
        %v659 = vpop.f32.mrb[0].mxu0
        %660 = vmatprep.mubr.bf16.mxu0 0
        %661 = vmatmul.mubr.bf16.gmra.mrb[0].mxu0 %v471
        %v662 = vpop.f32.mrb[0].mxu0
        %v663 = vadd.f32 %v394, %v662
        %v664 = vpop.f32.mrb[0].mxu0
        %v665 = vpop.f32.mrb[0].mxu0
        %v666 = vadd.f32 %v394, %v665
        %v667 = vpop.f32.mrb[0].mxu0
        %668 = vmatprep.mubr.bf16.mxu0 0
        %669 = vmatmul.mubr.bf16.gmra.mrb[0].mxu0 %v472
        %v670 = vpop.f32.mrb[0].mxu0
        %v671 = vadd.f32 %v394, %v670
        %v672 = vpop.f32.mrb[0].mxu0
        %v673 = vpop.f32.mrb[0].mxu0
        %v674 = vadd.f32 %v394, %v673
        %v675 = vpop.f32.mrb[0].mxu0
        %676 = vmatprep.mubr.bf16.mxu0 0
        %677 = vmatmul.mubr.bf16.gmra.mrb[0].mxu0 %v473
        %v678 = vpop.f32.mrb[0].mxu0
        %v679 = vadd.f32 %v394, %v678
        %v680 = vpop.f32.mrb[0].mxu0
        %v681 = vpop.f32.mrb[0].mxu0
        %v682 = vadd.f32 %v394, %v681
        %v683 = vpop.f32.mrb[0].mxu0
        %684 = vmatprep.mubr.bf16.mxu0 0
        %685 = vmatmul.mubr.bf16.gmra.mrb[0].mxu0 %v474
        %v686 = vpop.f32.mrb[0].mxu0
        %v687 = vadd.f32 %v394, %v686
        %v688 = vpop.f32.mrb[0].mxu0
        %v689 = vpop.f32.mrb[0].mxu0
        %v690 = vadd.f32 %v394, %v689
        %v691 = vpop.f32.mrb[0].mxu0
        %692 = vmatprep.mubr.bf16.mxu0 0
        %693 = vmatmul.mubr.bf16.gmra.mrb[0].mxu0 %v475
        %v694 = vpop.f32.mrb[0].mxu0
        %v695 = vadd.f32 %v394, %v694
        %v696 = vpop.f32.mrb[0].mxu0
        %v697 = vpop.f32.mrb[0].mxu0
        %v698 = vadd.f32 %v394, %v697
        %v699 = vpop.f32.mrb[0].mxu0
        %700 = vdwg.mxu0
        %v701 = vmax.f32 %v575, 0.0
        %v702 = vmax.f32 %v578, 0.0
        %v703 = vmax.f32 %v583, 0.0
        %v704 = vmax.f32 %v586, 0.0
        %v705 = vmax.f32 %v591, 0.0
        %v706 = vmax.f32 %v594, 0.0
        %v707 = vmax.f32 %v599, 0.0
        %v708 = vmax.f32 %v602, 0.0
        %v709 = vmax.f32 %v607, 0.0
        %v710 = vmax.f32 %v610, 0.0
        %v711 = vmax.f32 %v615, 0.0
        %v712 = vmax.f32 %v618, 0.0
        %v713 = vmax.f32 %v623, 0.0
        %v714 = vmax.f32 %v626, 0.0
        %v715 = vmax.f32 %v631, 0.0
        %v716 = vmax.f32 %v634, 0.0
        %v717 = vmax.f32 %v639, 0.0
        %v718 = vmax.f32 %v642, 0.0
        %v719 = vmax.f32 %v647, 0.0
        %v720 = vmax.f32 %v650, 0.0
        %v721 = vmax.f32 %v655, 0.0
        %v722 = vmax.f32 %v658, 0.0
        %v723 = vmax.f32 %v663, 0.0
        %v724 = vmax.f32 %v666, 0.0
        %v725 = vmax.f32 %v671, 0.0
        %v726 = vmax.f32 %v674, 0.0
        %v727 = vmax.f32 %v679, 0.0
        %v728 = vmax.f32 %v682, 0.0
        %v729 = vmax.f32 %v687, 0.0
        %v730 = vmax.f32 %v690, 0.0
        %v731 = vmax.f32 %v695, 0.0
        %v732 = vmax.f32 %v698, 0.0
        %733 = vst [vmem:[#allocation2] sm:$0xf] 0
        %734 = vst [vmem:[#allocation2 + $0x4] sm:$0xf] 0
        %735 = vst [vmem:[#allocation2 + $0x8] sm:$0x1] 0
        %s736 = scalar_lea.vmem [#allocation2], 204
        %737 = vst [vmem:[%s736] sm:$0xf] 0
        %738 = vst [vmem:[%s736 + $0x4] sm:$0xf] 0
        %739 = vst [vmem:[%s736 + $0x8] sm:$0x1] 0
        %s740 = scalar_lea.vmem [#allocation2], 12
        %vm741 = vcmask 1040384
        %vm742 = vsmask.f32 256
        %vm743 = vmand %vm741, %vm742
        %v744 = vld [vmem:[%s740] sm:$0x1]
        %v745 = vsel %vm743, 0, %v744
        %746 = vst [vmem:[%s740] sm:$0x1] %v745
        %v747 = vld [vmem:[%s740 + $0xc] sm:$0x1]
        %v748 = vsel %vm743, 0, %v747
        %749 = vst [vmem:[%s740 + $0xc] sm:$0x1] %v748
        %v750 = vld [vmem:[%s740 + $0x18] sm:$0x1]
        %v751 = vsel %vm743, 0, %v750
        %752 = vst [vmem:[%s740 + $0x18] sm:$0x1] %v751
        %v753 = vld [vmem:[%s740 + $0x24] sm:$0x1]
        %v754 = vsel %vm743, 0, %v753
        %755 = vst [vmem:[%s740 + $0x24] sm:$0x1] %v754
        %v756 = vld [vmem:[%s740 + $0x30] sm:$0x1]
        %v757 = vsel %vm743, 0, %v756
        %758 = vst [vmem:[%s740 + $0x30] sm:$0x1] %v757
        %v759 = vld [vmem:[%s740 + $0x3c] sm:$0x1]
        %v760 = vsel %vm743, 0, %v759
        %761 = vst [vmem:[%s740 + $0x3c] sm:$0x1] %v760
        %v762 = vld [vmem:[%s740 + $0x48] sm:$0x1]
        %v763 = vsel %vm743, 0, %v762
        %764 = vst [vmem:[%s740 + $0x48] sm:$0x1] %v763
        %v765 = vld [vmem:[%s740 + $0x54] sm:$0x1]
        %v766 = vsel %vm743, 0, %v765
        %767 = vst [vmem:[%s740 + $0x54] sm:$0x1] %v766
        %v768 = vld [vmem:[%s740 + $0x60] sm:$0x1]
        %v769 = vsel %vm743, 0, %v768
        %770 = vst [vmem:[%s740 + $0x60] sm:$0x1] %v769
        %v771 = vld [vmem:[%s740 + $0x6c] sm:$0x1]
        %v772 = vsel %vm743, 0, %v771
        %773 = vst [vmem:[%s740 + $0x6c] sm:$0x1] %v772
        %v774 = vld [vmem:[%s740 + $0x78] sm:$0x1]
        %v775 = vsel %vm743, 0, %v774
        %776 = vst [vmem:[%s740 + $0x78] sm:$0x1] %v775
        %v777 = vld [vmem:[%s740 + $0x84] sm:$0x1]
        %v778 = vsel %vm743, 0, %v777
        %779 = vst [vmem:[%s740 + $0x84] sm:$0x1] %v778
        %v780 = vld [vmem:[%s740 + $0x90] sm:$0x1]
        %v781 = vsel %vm743, 0, %v780
        %782 = vst [vmem:[%s740 + $0x90] sm:$0x1] %v781
        %v783 = vld [vmem:[%s740 + $0x9c] sm:$0x1]
        %v784 = vsel %vm743, 0, %v783
        %785 = vst [vmem:[%s740 + $0x9c] sm:$0x1] %v784
        %v786 = vld [vmem:[%s740 + $0xa8] sm:$0x1]
        %v787 = vsel %vm743, 0, %v786
        %788 = vst [vmem:[%s740 + $0xa8] sm:$0x1] %v787
        %v789 = vld [vmem:[%s740 + $0xb4] sm:$0x1]
        %v790 = vsel %vm743, 0, %v789
        %791 = vst [vmem:[%s740 + $0xb4] sm:$0x1] %v790
        %vm792 = vsmask.f32 7938
        %vm793 = vmand %vm741, %vm792
        %v794 = vld [vmem:[%s740 + $0x8] sm:$0x1]
        %v795 = vsel %vm793, 0, %v794
        %796 = vst [vmem:[%s740 + $0x8] sm:$0x1] %v795
        %v797 = vld [vmem:[%s740 + $0x14] sm:$0x1]
        %v798 = vsel %vm793, 0, %v797
        %799 = vst [vmem:[%s740 + $0x14] sm:$0x1] %v798
        %v800 = vld [vmem:[%s740 + $0x20] sm:$0x1]
        %v801 = vsel %vm793, 0, %v800
        %802 = vst [vmem:[%s740 + $0x20] sm:$0x1] %v801
        %v803 = vld [vmem:[%s740 + $0x2c] sm:$0x1]
        %v804 = vsel %vm793, 0, %v803
        %805 = vst [vmem:[%s740 + $0x2c] sm:$0x1] %v804
        %v806 = vld [vmem:[%s740 + $0x38] sm:$0x1]
        %v807 = vsel %vm793, 0, %v806
        %808 = vst [vmem:[%s740 + $0x38] sm:$0x1] %v807
        %v809 = vld [vmem:[%s740 + $0x44] sm:$0x1]
        %v810 = vsel %vm793, 0, %v809
        %811 = vst [vmem:[%s740 + $0x44] sm:$0x1] %v810
        %v812 = vld [vmem:[%s740 + $0x50] sm:$0x1]
        %v813 = vsel %vm793, 0, %v812
        %814 = vst [vmem:[%s740 + $0x50] sm:$0x1] %v813
        %v815 = vld [vmem:[%s740 + $0x5c] sm:$0x1]
        %v816 = vsel %vm793, 0, %v815
        %817 = vst [vmem:[%s740 + $0x5c] sm:$0x1] %v816
        %v818 = vld [vmem:[%s740 + $0x68] sm:$0x1]
        %v819 = vsel %vm793, 0, %v818
        %820 = vst [vmem:[%s740 + $0x68] sm:$0x1] %v819
        %v821 = vld [vmem:[%s740 + $0x74] sm:$0x1]
        %v822 = vsel %vm793, 0, %v821
        %823 = vst [vmem:[%s740 + $0x74] sm:$0x1] %v822
        %v824 = vld [vmem:[%s740 + $0x80] sm:$0x1]
        %v825 = vsel %vm793, 0, %v824
        %826 = vst [vmem:[%s740 + $0x80] sm:$0x1] %v825
        %v827 = vld [vmem:[%s740 + $0x8c] sm:$0x1]
        %v828 = vsel %vm793, 0, %v827
        %829 = vst [vmem:[%s740 + $0x8c] sm:$0x1] %v828
        %v830 = vld [vmem:[%s740 + $0x98] sm:$0x1]
        %v831 = vsel %vm793, 0, %v830
        %832 = vst [vmem:[%s740 + $0x98] sm:$0x1] %v831
        %v833 = vld [vmem:[%s740 + $0xa4] sm:$0x1]
        %v834 = vsel %vm793, 0, %v833
        %835 = vst [vmem:[%s740 + $0xa4] sm:$0x1] %v834
        %v836 = vld [vmem:[%s740 + $0xb0] sm:$0x1]
        %v837 = vsel %vm793, 0, %v836
        %838 = vst [vmem:[%s740 + $0xb0] sm:$0x1] %v837
        %v839 = vld [vmem:[%s740 + $0xbc] sm:$0x1]
        %v840 = vsel %vm793, 0, %v839
        %841 = vst [vmem:[%s740 + $0xbc] sm:$0x1] %v840
        %v842 = vpack.c.bf16 %v702, %v701
        %v843 = vpack.c.bf16 %v704, %v703
        %v844 = vpack.c.bf16 %v706, %v705
        %v845 = vpack.c.bf16 %v708, %v707
        %v846 = vpack.c.bf16 %v710, %v709
        %v847 = vpack.c.bf16 %v712, %v711
        %v848 = vpack.c.bf16 %v714, %v713
        %v849 = vpack.c.bf16 %v716, %v715
        %v850 = vpack.c.bf16 %v718, %v717
        %v851 = vpack.c.bf16 %v720, %v719
        %v852 = vpack.c.bf16 %v722, %v721
        %v853 = vpack.c.bf16 %v724, %v723
        %v854 = vpack.c.bf16 %v726, %v725
        %v855 = vpack.c.bf16 %v728, %v727
        %v856 = vpack.c.bf16 %v730, %v729
        %v857 = vpack.c.bf16 %v732, %v731
        %v874 = vunpack.c.l.b16 %v842
        %v875 = vunpack.c.h.b16 %v842
        %v876 = vunpack.c.l.b16 %v843
        %v877 = vunpack.c.h.b16 %v843
        %v878 = vunpack.c.l.b16 %v844
        %v879 = vunpack.c.h.b16 %v844
        %v880 = vunpack.c.l.b16 %v845
        %v881 = vunpack.c.h.b16 %v845
        %v882 = vunpack.c.l.b16 %v846
        %v883 = vunpack.c.h.b16 %v846
        %v884 = vunpack.c.l.b16 %v847
        %v885 = vunpack.c.h.b16 %v847
        %v886 = vunpack.c.l.b16 %v848
        %v887 = vunpack.c.h.b16 %v848
        %v888 = vunpack.c.l.b16 %v849
        %v889 = vunpack.c.h.b16 %v849
        %v890 = vunpack.c.l.b16 %v850
        %v891 = vunpack.c.h.b16 %v850
        %v892 = vunpack.c.l.b16 %v851
        %v893 = vunpack.c.h.b16 %v851
        %v894 = vunpack.c.l.b16 %v852
        %v895 = vunpack.c.h.b16 %v852
        %v896 = vunpack.c.l.b16 %v853
        %v897 = vunpack.c.h.b16 %v853
        %v898 = vunpack.c.l.b16 %v854
        %v899 = vunpack.c.h.b16 %v854
        %v900 = vunpack.c.l.b16 %v855
        %v901 = vunpack.c.h.b16 %v855
        %v902 = vunpack.c.l.b16 %v856
        %v903 = vunpack.c.h.b16 %v856
        %v904 = vunpack.c.l.b16 %v857
        %v905 = vunpack.c.h.b16 %v857
        %v906 = vpack.c.b16 %v874, %v874
        %v907 = vpack.c.b16 %v875, %v875
        %v908 = vpack.c.b16 %v876, %v876
        %v909 = vpack.c.b16 %v877, %v877
        %v910 = vpack.c.b16 %v878, %v878
        %v911 = vpack.c.b16 %v879, %v879
        %v912 = vpack.c.b16 %v880, %v880
        %v913 = vpack.c.b16 %v881, %v881
        %v914 = vpack.c.b16 %v882, %v882
        %v915 = vpack.c.b16 %v883, %v883
        %v916 = vpack.c.b16 %v884, %v884
        %v917 = vpack.c.b16 %v885, %v885
        %v918 = vpack.c.b16 %v886, %v886
        %v919 = vpack.c.b16 %v887, %v887
        %v920 = vpack.c.b16 %v888, %v888
        %v921 = vpack.c.b16 %v889, %v889
        %v922 = vpack.c.b16 %v890, %v890
        %v923 = vpack.c.b16 %v891, %v891
        %v924 = vpack.c.b16 %v892, %v892
        %v925 = vpack.c.b16 %v893, %v893
        %v926 = vpack.c.b16 %v894, %v894
        %v927 = vpack.c.b16 %v895, %v895
        %v928 = vpack.c.b16 %v896, %v896
        %v929 = vpack.c.b16 %v897, %v897
        %v930 = vpack.c.b16 %v898, %v898
        %v931 = vpack.c.b16 %v899, %v899
        %v932 = vpack.c.b16 %v900, %v900
        %v933 = vpack.c.b16 %v901, %v901
        %v934 = vpack.c.b16 %v902, %v902
        %v935 = vpack.c.b16 %v903, %v903
        %v936 = vpack.c.b16 %v904, %v904
        %v937 = vpack.c.b16 %v905, %v905
        %vm938 = vsmask.f32 4368
        %vm939 = vmor %vm742, %vm938
        %v941 = vshrl.u32 %v906, 16
        %v943 = vrot.slane %v941, 7
        %v944 = vshll.u32 %v906, 16
        %v946 = vor.u32 %v943, %v944
        %v947 = vrot.slane %v943, 4
        %v949 = vshrl.u32 %v907, 16
        %v951 = vrot.slane %v949, 7
        %v952 = vshll.u32 %v907, 16
        %v954 = vor.u32 %v951, %v952
        %v955 = vsel %vm939, %v947, %v954
        %v956 = vrot.slane %v951, 4
        %v958 = vshrl.u32 %v908, 16
        %v960 = vrot.slane %v958, 7
        %v961 = vshll.u32 %v908, 16
        %v963 = vor.u32 %v960, %v961
        %v964 = vrot.slane %v960, 4
        %v966 = vshrl.u32 %v909, 16
        %v968 = vrot.slane %v966, 7
        %v969 = vshll.u32 %v909, 16
        %v971 = vor.u32 %v968, %v969
        %v972 = vsel %vm939, %v964, %v971
        %v973 = vrot.slane %v968, 4
        %v975 = vshrl.u32 %v910, 16
        %v977 = vrot.slane %v975, 7
        %v978 = vshll.u32 %v910, 16
        %v980 = vor.u32 %v977, %v978
        %v981 = vrot.slane %v977, 4
        %v983 = vshrl.u32 %v911, 16
        %v985 = vrot.slane %v983, 7
        %v986 = vshll.u32 %v911, 16
        %v988 = vor.u32 %v985, %v986
        %v989 = vsel %vm939, %v981, %v988
        %v990 = vrot.slane %v985, 4
        %v992 = vshrl.u32 %v912, 16
        %v994 = vrot.slane %v992, 7
        %v995 = vshll.u32 %v912, 16
        %v997 = vor.u32 %v994, %v995
        %v998 = vrot.slane %v994, 4
        %v1000 = vshrl.u32 %v913, 16
        %v1002 = vrot.slane %v1000, 7
        %v1003 = vshll.u32 %v913, 16
        %v1005 = vor.u32 %v1002, %v1003
        %v1006 = vsel %vm939, %v998, %v1005
        %v1007 = vrot.slane %v1002, 4
        %v1009 = vshrl.u32 %v914, 16
        %v1011 = vrot.slane %v1009, 7
        %v1012 = vshll.u32 %v914, 16
        %v1014 = vor.u32 %v1011, %v1012
        %v1015 = vrot.slane %v1011, 4
        %v1017 = vshrl.u32 %v915, 16
        %v1019 = vrot.slane %v1017, 7
        %v1020 = vshll.u32 %v915, 16
        %v1022 = vor.u32 %v1019, %v1020
        %v1023 = vsel %vm939, %v1015, %v1022
        %v1024 = vrot.slane %v1019, 4
        %v1026 = vshrl.u32 %v916, 16
        %v1028 = vrot.slane %v1026, 7
        %v1029 = vshll.u32 %v916, 16
        %v1031 = vor.u32 %v1028, %v1029
        %v1032 = vrot.slane %v1028, 4
        %v1034 = vshrl.u32 %v917, 16
        %v1036 = vrot.slane %v1034, 7
        %v1037 = vshll.u32 %v917, 16
        %v1039 = vor.u32 %v1036, %v1037
        %v1040 = vsel %vm939, %v1032, %v1039
        %v1041 = vrot.slane %v1036, 4
        %v1043 = vshrl.u32 %v918, 16
        %v1045 = vrot.slane %v1043, 7
        %v1046 = vshll.u32 %v918, 16
        %v1048 = vor.u32 %v1045, %v1046
        %v1049 = vrot.slane %v1045, 4
        %v1051 = vshrl.u32 %v919, 16
        %v1053 = vrot.slane %v1051, 7
        %v1054 = vshll.u32 %v919, 16
        %v1056 = vor.u32 %v1053, %v1054
        %v1057 = vsel %vm939, %v1049, %v1056
        %v1058 = vrot.slane %v1053, 4
        %v1060 = vshrl.u32 %v920, 16
        %v1062 = vrot.slane %v1060, 7
        %v1063 = vshll.u32 %v920, 16
        %v1065 = vor.u32 %v1062, %v1063
        %v1066 = vrot.slane %v1062, 4
        %v1068 = vshrl.u32 %v921, 16
        %v1070 = vrot.slane %v1068, 7
        %v1071 = vshll.u32 %v921, 16
        %v1073 = vor.u32 %v1070, %v1071
        %v1074 = vsel %vm939, %v1066, %v1073
        %v1075 = vrot.slane %v1070, 4
        %v1077 = vshrl.u32 %v922, 16
        %v1079 = vrot.slane %v1077, 7
        %v1080 = vshll.u32 %v922, 16
        %v1082 = vor.u32 %v1079, %v1080
        %v1083 = vrot.slane %v1079, 4
        %v1085 = vshrl.u32 %v923, 16
        %v1087 = vrot.slane %v1085, 7
        %v1088 = vshll.u32 %v923, 16
        %v1090 = vor.u32 %v1087, %v1088
        %v1091 = vsel %vm939, %v1083, %v1090
        %v1092 = vrot.slane %v1087, 4
        %v1094 = vshrl.u32 %v924, 16
        %v1096 = vrot.slane %v1094, 7
        %v1097 = vshll.u32 %v924, 16
        %v1099 = vor.u32 %v1096, %v1097
        %v1100 = vrot.slane %v1096, 4
        %v1102 = vshrl.u32 %v925, 16
        %v1104 = vrot.slane %v1102, 7
        %v1105 = vshll.u32 %v925, 16
        %v1107 = vor.u32 %v1104, %v1105
        %v1108 = vsel %vm939, %v1100, %v1107
        %v1109 = vrot.slane %v1104, 4
        %v1111 = vshrl.u32 %v926, 16
        %v1113 = vrot.slane %v1111, 7
        %v1114 = vshll.u32 %v926, 16
        %v1116 = vor.u32 %v1113, %v1114
        %v1117 = vrot.slane %v1113, 4
        %v1119 = vshrl.u32 %v927, 16
        %v1121 = vrot.slane %v1119, 7
        %v1122 = vshll.u32 %v927, 16
        %v1124 = vor.u32 %v1121, %v1122
        %v1125 = vsel %vm939, %v1117, %v1124
        %v1126 = vrot.slane %v1121, 4
        %v1128 = vshrl.u32 %v928, 16
        %v1130 = vrot.slane %v1128, 7
        %v1131 = vshll.u32 %v928, 16
        %v1133 = vor.u32 %v1130, %v1131
        %v1134 = vrot.slane %v1130, 4
        %v1136 = vshrl.u32 %v929, 16
        %v1138 = vrot.slane %v1136, 7
        %v1139 = vshll.u32 %v929, 16
        %v1141 = vor.u32 %v1138, %v1139
        %v1142 = vsel %vm939, %v1134, %v1141
        %v1143 = vrot.slane %v1138, 4
        %v1145 = vshrl.u32 %v930, 16
        %v1147 = vrot.slane %v1145, 7
        %v1148 = vshll.u32 %v930, 16
        %v1150 = vor.u32 %v1147, %v1148
        %v1151 = vrot.slane %v1147, 4
        %v1153 = vshrl.u32 %v931, 16
        %v1155 = vrot.slane %v1153, 7
        %v1156 = vshll.u32 %v931, 16
        %v1158 = vor.u32 %v1155, %v1156
        %v1159 = vsel %vm939, %v1151, %v1158
        %v1160 = vrot.slane %v1155, 4
        %v1162 = vshrl.u32 %v932, 16
        %v1164 = vrot.slane %v1162, 7
        %v1165 = vshll.u32 %v932, 16
        %v1167 = vor.u32 %v1164, %v1165
        %v1168 = vrot.slane %v1164, 4
        %v1170 = vshrl.u32 %v933, 16
        %v1172 = vrot.slane %v1170, 7
        %v1173 = vshll.u32 %v933, 16
        %v1175 = vor.u32 %v1172, %v1173
        %v1176 = vsel %vm939, %v1168, %v1175
        %v1177 = vrot.slane %v1172, 4
        %v1179 = vshrl.u32 %v934, 16
        %v1181 = vrot.slane %v1179, 7
        %v1182 = vshll.u32 %v934, 16
        %v1184 = vor.u32 %v1181, %v1182
        %v1185 = vrot.slane %v1181, 4
        %v1187 = vshrl.u32 %v935, 16
        %v1189 = vrot.slane %v1187, 7
        %v1190 = vshll.u32 %v935, 16
        %v1192 = vor.u32 %v1189, %v1190
        %v1193 = vsel %vm939, %v1185, %v1192
        %v1194 = vrot.slane %v1189, 4
        %v1196 = vshrl.u32 %v936, 16
        %v1198 = vrot.slane %v1196, 7
        %v1199 = vshll.u32 %v936, 16
        %v1201 = vor.u32 %v1198, %v1199
        %v1202 = vrot.slane %v1198, 4
        %v1204 = vshrl.u32 %v937, 16
        %v1206 = vrot.slane %v1204, 7
        %v1207 = vshll.u32 %v937, 16
        %v1209 = vor.u32 %v1206, %v1207
        %v1210 = vsel %vm939, %v1202, %v1209
        %v1211 = vrot.slane %v1206, 4
        %vm1260 = vcmask 1043456
        %vm1261 = vmand %vm1260, %vm792
        %v1262 = vld [vmem:[%s740] sm:$0xf]
        %v1263 = vsel %vm1261, %v946, %v1262
        %1264 = vst [vmem:[%s740] sm:$0xf] %v1263
        %1265 = vst [vmem:[%s740 + $0x4] sm:$0xf] %v955
        %v1266 = vld [vmem:[%s740 + $0x8] sm:$0x1]
        %v1267 = vsel %vm743, %v956, %v1266
        %1268 = vst [vmem:[%s740 + $0x8] sm:$0x1] %v1267
        %v1269 = vld [vmem:[%s740 + $0xc] sm:$0xf]
        %v1270 = vsel %vm1261, %v963, %v1269
        %1271 = vst [vmem:[%s740 + $0xc] sm:$0xf] %v1270
        %1272 = vst [vmem:[%s740 + $0x10] sm:$0xf] %v972
        %v1273 = vld [vmem:[%s740 + $0x14] sm:$0x1]
        %v1274 = vsel %vm743, %v973, %v1273
        %1275 = vst [vmem:[%s740 + $0x14] sm:$0x1] %v1274
        %v1276 = vld [vmem:[%s740 + $0x18] sm:$0xf]
        %v1277 = vsel %vm1261, %v980, %v1276
        %1278 = vst [vmem:[%s740 + $0x18] sm:$0xf] %v1277
        %1279 = vst [vmem:[%s740 + $0x1c] sm:$0xf] %v989
        %v1280 = vld [vmem:[%s740 + $0x20] sm:$0x1]
        %v1281 = vsel %vm743, %v990, %v1280
        %1282 = vst [vmem:[%s740 + $0x20] sm:$0x1] %v1281
        %v1283 = vld [vmem:[%s740 + $0x24] sm:$0xf]
        %v1284 = vsel %vm1261, %v997, %v1283
        %1285 = vst [vmem:[%s740 + $0x24] sm:$0xf] %v1284
        %1286 = vst [vmem:[%s740 + $0x28] sm:$0xf] %v1006
        %v1287 = vld [vmem:[%s740 + $0x2c] sm:$0x1]
        %v1288 = vsel %vm743, %v1007, %v1287
        %1289 = vst [vmem:[%s740 + $0x2c] sm:$0x1] %v1288
        %v1290 = vld [vmem:[%s740 + $0x30] sm:$0xf]
        %v1291 = vsel %vm1261, %v1014, %v1290
        %1292 = vst [vmem:[%s740 + $0x30] sm:$0xf] %v1291
        %1293 = vst [vmem:[%s740 + $0x34] sm:$0xf] %v1023
        %v1294 = vld [vmem:[%s740 + $0x38] sm:$0x1]
        %v1295 = vsel %vm743, %v1024, %v1294
        %1296 = vst [vmem:[%s740 + $0x38] sm:$0x1] %v1295
        %v1297 = vld [vmem:[%s740 + $0x3c] sm:$0xf]
        %v1298 = vsel %vm1261, %v1031, %v1297
        %1299 = vst [vmem:[%s740 + $0x3c] sm:$0xf] %v1298
        %1300 = vst [vmem:[%s740 + $0x40] sm:$0xf] %v1040
        %v1301 = vld [vmem:[%s740 + $0x44] sm:$0x1]
        %v1302 = vsel %vm743, %v1041, %v1301
        %1303 = vst [vmem:[%s740 + $0x44] sm:$0x1] %v1302
        %v1304 = vld [vmem:[%s740 + $0x48] sm:$0xf]
        %v1305 = vsel %vm1261, %v1048, %v1304
        %1306 = vst [vmem:[%s740 + $0x48] sm:$0xf] %v1305
        %1307 = vst [vmem:[%s740 + $0x4c] sm:$0xf] %v1057
        %v1308 = vld [vmem:[%s740 + $0x50] sm:$0x1]
        %v1309 = vsel %vm743, %v1058, %v1308
        %1310 = vst [vmem:[%s740 + $0x50] sm:$0x1] %v1309
        %v1311 = vld [vmem:[%s740 + $0x54] sm:$0xf]
        %v1312 = vsel %vm1261, %v1065, %v1311
        %1313 = vst [vmem:[%s740 + $0x54] sm:$0xf] %v1312
        %1314 = vst [vmem:[%s740 + $0x58] sm:$0xf] %v1074
        %v1315 = vld [vmem:[%s740 + $0x5c] sm:$0x1]
        %v1316 = vsel %vm743, %v1075, %v1315
        %1317 = vst [vmem:[%s740 + $0x5c] sm:$0x1] %v1316
        %v1318 = vld [vmem:[%s740 + $0x60] sm:$0xf]
        %v1319 = vsel %vm1261, %v1082, %v1318
        %1320 = vst [vmem:[%s740 + $0x60] sm:$0xf] %v1319
        %1321 = vst [vmem:[%s740 + $0x64] sm:$0xf] %v1091
        %v1322 = vld [vmem:[%s740 + $0x68] sm:$0x1]
        %v1323 = vsel %vm743, %v1092, %v1322
        %1324 = vst [vmem:[%s740 + $0x68] sm:$0x1] %v1323
        %v1325 = vld [vmem:[%s740 + $0x6c] sm:$0xf]
        %v1326 = vsel %vm1261, %v1099, %v1325
        %1327 = vst [vmem:[%s740 + $0x6c] sm:$0xf] %v1326
        %1328 = vst [vmem:[%s740 + $0x70] sm:$0xf] %v1108
        %v1329 = vld [vmem:[%s740 + $0x74] sm:$0x1]
        %v1330 = vsel %vm743, %v1109, %v1329
        %1331 = vst [vmem:[%s740 + $0x74] sm:$0x1] %v1330
        %v1332 = vld [vmem:[%s740 + $0x78] sm:$0xf]
        %v1333 = vsel %vm1261, %v1116, %v1332
        %1334 = vst [vmem:[%s740 + $0x78] sm:$0xf] %v1333
        %1335 = vst [vmem:[%s740 + $0x7c] sm:$0xf] %v1125
        %v1336 = vld [vmem:[%s740 + $0x80] sm:$0x1]
        %v1337 = vsel %vm743, %v1126, %v1336
        %1338 = vst [vmem:[%s740 + $0x80] sm:$0x1] %v1337
        %v1339 = vld [vmem:[%s740 + $0x84] sm:$0xf]
        %v1340 = vsel %vm1261, %v1133, %v1339
        %1341 = vst [vmem:[%s740 + $0x84] sm:$0xf] %v1340
        %1342 = vst [vmem:[%s740 + $0x88] sm:$0xf] %v1142
        %v1343 = vld [vmem:[%s740 + $0x8c] sm:$0x1]
        %v1344 = vsel %vm743, %v1143, %v1343
        %1345 = vst [vmem:[%s740 + $0x8c] sm:$0x1] %v1344
        %v1346 = vld [vmem:[%s740 + $0x90] sm:$0xf]
        %v1347 = vsel %vm1261, %v1150, %v1346
        %1348 = vst [vmem:[%s740 + $0x90] sm:$0xf] %v1347
        %1349 = vst [vmem:[%s740 + $0x94] sm:$0xf] %v1159
        %v1350 = vld [vmem:[%s740 + $0x98] sm:$0x1]
        %v1351 = vsel %vm743, %v1160, %v1350
        %1352 = vst [vmem:[%s740 + $0x98] sm:$0x1] %v1351
        %v1353 = vld [vmem:[%s740 + $0x9c] sm:$0xf]
        %v1354 = vsel %vm1261, %v1167, %v1353
        %1355 = vst [vmem:[%s740 + $0x9c] sm:$0xf] %v1354
        %1356 = vst [vmem:[%s740 + $0xa0] sm:$0xf] %v1176
        %v1357 = vld [vmem:[%s740 + $0xa4] sm:$0x1]
        %v1358 = vsel %vm743, %v1177, %v1357
        %1359 = vst [vmem:[%s740 + $0xa4] sm:$0x1] %v1358
        %v1360 = vld [vmem:[%s740 + $0xa8] sm:$0xf]
        %v1361 = vsel %vm1261, %v1184, %v1360
        %1362 = vst [vmem:[%s740 + $0xa8] sm:$0xf] %v1361
        %1363 = vst [vmem:[%s740 + $0xac] sm:$0xf] %v1193
        %v1364 = vld [vmem:[%s740 + $0xb0] sm:$0x1]
        %v1365 = vsel %vm743, %v1194, %v1364
        %1366 = vst [vmem:[%s740 + $0xb0] sm:$0x1] %v1365
        %v1367 = vld [vmem:[%s740 + $0xb4] sm:$0xf]
        %v1368 = vsel %vm1261, %v1201, %v1367
        %1369 = vst [vmem:[%s740 + $0xb4] sm:$0xf] %v1368
        %1370 = vst [vmem:[%s740 + $0xb8] sm:$0xf] %v1210
        %v1371 = vld [vmem:[%s740 + $0xbc] sm:$0x1]
        %v1372 = vsel %vm743, %v1211, %v1371
        %1373 = vst [vmem:[%s740 + $0xbc] sm:$0x1] %v1372
        %v1374 = vld [vmem:[#allocation2] sm:$0xf]
        %v1375 = vld [vmem:[#allocation2 + $0x4] sm:$0xf]
        %v1376 = vld [vmem:[#allocation2 + $0xc] sm:$0xf]
        %v1377 = vld [vmem:[#allocation2 + $0x10] sm:$0xf]
        %v1378 = vld [vmem:[#allocation2 + $0x18] sm:$0xf]
        %v1379 = vld [vmem:[#allocation2 + $0x1c] sm:$0xf]
        %v1380 = vld [vmem:[#allocation2 + $0x24] sm:$0xf]
        %v1381 = vld [vmem:[#allocation2 + $0x28] sm:$0xf]
        %v1382 = vld [vmem:[#allocation2 + $0x30] sm:$0xf]
        %v1383 = vld [vmem:[#allocation2 + $0x34] sm:$0xf]
        %v1384 = vld [vmem:[#allocation2 + $0x3c] sm:$0xf]
        %v1385 = vld [vmem:[#allocation2 + $0x40] sm:$0xf]
        %v1386 = vld [vmem:[#allocation2 + $0x48] sm:$0xf]
        %v1387 = vld [vmem:[#allocation2 + $0x4c] sm:$0xf]
        %v1388 = vld [vmem:[#allocation2 + $0x54] sm:$0xf]
        %v1389 = vld [vmem:[#allocation2 + $0x58] sm:$0xf]
        %v1390 = vld [vmem:[#allocation2 + $0x60] sm:$0xf]
        %v1391 = vld [vmem:[#allocation2 + $0x64] sm:$0xf]
        %v1392 = vld [vmem:[#allocation2 + $0x6c] sm:$0xf]
        %v1393 = vld [vmem:[#allocation2 + $0x70] sm:$0xf]
        %v1394 = vld [vmem:[#allocation2 + $0x78] sm:$0xf]
        %v1395 = vld [vmem:[#allocation2 + $0x7c] sm:$0xf]
        %v1396 = vld [vmem:[#allocation2 + $0x84] sm:$0xf]
        %v1397 = vld [vmem:[#allocation2 + $0x88] sm:$0xf]
        %v1398 = vld [vmem:[#allocation2 + $0x90] sm:$0xf]
        %v1399 = vld [vmem:[#allocation2 + $0x94] sm:$0xf]
        %v1400 = vld [vmem:[#allocation2 + $0x9c] sm:$0xf]
        %v1401 = vld [vmem:[#allocation2 + $0xa0] sm:$0xf]
        %v1402 = vld [vmem:[#allocation2 + $0xa8] sm:$0xf]
        %v1403 = vld [vmem:[#allocation2 + $0xac] sm:$0xf]
        %v1404 = vld [vmem:[#allocation2 + $0xb4] sm:$0xf]
        %v1405 = vld [vmem:[#allocation2 + $0xb8] sm:$0xf]
        %v1406 = vld [vmem:[#allocation2 + $0x8] sm:$0x1]
        %v1407 = vld [vmem:[#allocation2 + $0x14] sm:$0x1]
        %v1408 = vld [vmem:[#allocation2 + $0x20] sm:$0x1]
        %v1409 = vld [vmem:[#allocation2 + $0x2c] sm:$0x1]
        %v1410 = vld [vmem:[#allocation2 + $0x38] sm:$0x1]
        %v1411 = vld [vmem:[#allocation2 + $0x44] sm:$0x1]
        %v1412 = vld [vmem:[#allocation2 + $0x50] sm:$0x1]
        %v1413 = vld [vmem:[#allocation2 + $0x5c] sm:$0x1]
        %v1414 = vld [vmem:[#allocation2 + $0x68] sm:$0x1]
        %v1415 = vld [vmem:[#allocation2 + $0x74] sm:$0x1]
        %v1416 = vld [vmem:[#allocation2 + $0x80] sm:$0x1]
        %v1417 = vld [vmem:[#allocation2 + $0x8c] sm:$0x1]
        %v1418 = vld [vmem:[#allocation2 + $0x98] sm:$0x1]
        %v1419 = vld [vmem:[#allocation2 + $0xa4] sm:$0x1]
        %v1420 = vld [vmem:[#allocation2 + $0xb0] sm:$0x1]
        %v1421 = vld [vmem:[#allocation2 + $0xbc] sm:$0x1]
        %vm1422 = vsmask.f32 3328
        %vm1423 = vsmask.f32 7440
        %vm1424 = vmor %vm1422, %vm1423
        %v1426 = vshrl.u32 %v1374, 16
        %v1428 = vrot.slane %v1426, 4
        %v1429 = vshll.u32 %v1374, 16
        %v1431 = vrot.slane %v1429, 5
        %v1432 = vor.u32 %v1428, %v1431
        %v1433 = vrot.slane %v1432, 4
        %v1435 = vshll.u32 %v1375, 16
        %v1437 = vrot.slane %v1435, 5
        %v1438 = vsel %vm1424, %v1433, %v1437
        %v1439 = vshrl.u32 %v1375, 16
        %v1441 = vrot.slane %v1439, 4
        %v1442 = vor.u32 %v1441, %v1437
        %v1443 = vrot.slane %v1442, 4
        %v1445 = vshll.u32 %v1406, 16
        %v1447 = vrot.slane %v1445, 5
        %v1448 = vsel %vm1424, %v1443, %v1447
        %v1450 = vshrl.u32 %v1376, 16
        %v1452 = vrot.slane %v1450, 4
        %v1453 = vshll.u32 %v1376, 16
        %v1455 = vrot.slane %v1453, 5
        %v1456 = vor.u32 %v1452, %v1455
        %v1457 = vrot.slane %v1456, 4
        %v1459 = vshll.u32 %v1377, 16
        %v1461 = vrot.slane %v1459, 5
        %v1462 = vsel %vm1424, %v1457, %v1461
        %v1463 = vshrl.u32 %v1377, 16
        %v1465 = vrot.slane %v1463, 4
        %v1466 = vor.u32 %v1465, %v1461
        %v1467 = vrot.slane %v1466, 4
        %v1469 = vshll.u32 %v1407, 16
        %v1471 = vrot.slane %v1469, 5
        %v1472 = vsel %vm1424, %v1467, %v1471
        %v1474 = vshrl.u32 %v1378, 16
        %v1476 = vrot.slane %v1474, 4
        %v1477 = vshll.u32 %v1378, 16
        %v1479 = vrot.slane %v1477, 5
        %v1480 = vor.u32 %v1476, %v1479
        %v1481 = vrot.slane %v1480, 4
        %v1483 = vshll.u32 %v1379, 16
        %v1485 = vrot.slane %v1483, 5
        %v1486 = vsel %vm1424, %v1481, %v1485
        %v1487 = vshrl.u32 %v1379, 16
        %v1489 = vrot.slane %v1487, 4
        %v1490 = vor.u32 %v1489, %v1485
        %v1491 = vrot.slane %v1490, 4
        %v1493 = vshll.u32 %v1408, 16
        %v1495 = vrot.slane %v1493, 5
        %v1496 = vsel %vm1424, %v1491, %v1495
        %v1498 = vshrl.u32 %v1380, 16
        %v1500 = vrot.slane %v1498, 4
        %v1501 = vshll.u32 %v1380, 16
        %v1503 = vrot.slane %v1501, 5
        %v1504 = vor.u32 %v1500, %v1503
        %v1505 = vrot.slane %v1504, 4
        %v1507 = vshll.u32 %v1381, 16
        %v1509 = vrot.slane %v1507, 5
        %v1510 = vsel %vm1424, %v1505, %v1509
        %v1511 = vshrl.u32 %v1381, 16
        %v1513 = vrot.slane %v1511, 4
        %v1514 = vor.u32 %v1513, %v1509
        %v1515 = vrot.slane %v1514, 4
        %v1517 = vshll.u32 %v1409, 16
        %v1519 = vrot.slane %v1517, 5
        %v1520 = vsel %vm1424, %v1515, %v1519
        %v1522 = vshrl.u32 %v1382, 16
        %v1524 = vrot.slane %v1522, 4
        %v1525 = vshll.u32 %v1382, 16
        %v1527 = vrot.slane %v1525, 5
        %v1528 = vor.u32 %v1524, %v1527
        %v1529 = vrot.slane %v1528, 4
        %v1531 = vshll.u32 %v1383, 16
        %v1533 = vrot.slane %v1531, 5
        %v1534 = vsel %vm1424, %v1529, %v1533
        %v1535 = vshrl.u32 %v1383, 16
        %v1537 = vrot.slane %v1535, 4
        %v1538 = vor.u32 %v1537, %v1533
        %v1539 = vrot.slane %v1538, 4
        %v1541 = vshll.u32 %v1410, 16
        %v1543 = vrot.slane %v1541, 5
        %v1544 = vsel %vm1424, %v1539, %v1543
        %v1546 = vshrl.u32 %v1384, 16
        %v1548 = vrot.slane %v1546, 4
        %v1549 = vshll.u32 %v1384, 16
        %v1551 = vrot.slane %v1549, 5
        %v1552 = vor.u32 %v1548, %v1551
        %v1553 = vrot.slane %v1552, 4
        %v1555 = vshll.u32 %v1385, 16
        %v1557 = vrot.slane %v1555, 5
        %v1558 = vsel %vm1424, %v1553, %v1557
        %v1559 = vshrl.u32 %v1385, 16
        %v1561 = vrot.slane %v1559, 4
        %v1562 = vor.u32 %v1561, %v1557
        %v1563 = vrot.slane %v1562, 4
        %v1565 = vshll.u32 %v1411, 16
        %v1567 = vrot.slane %v1565, 5
        %v1568 = vsel %vm1424, %v1563, %v1567
        %v1570 = vshrl.u32 %v1386, 16
        %v1572 = vrot.slane %v1570, 4
        %v1573 = vshll.u32 %v1386, 16
        %v1575 = vrot.slane %v1573, 5
        %v1576 = vor.u32 %v1572, %v1575
        %v1577 = vrot.slane %v1576, 4
        %v1579 = vshll.u32 %v1387, 16
        %v1581 = vrot.slane %v1579, 5
        %v1582 = vsel %vm1424, %v1577, %v1581
        %v1583 = vshrl.u32 %v1387, 16
        %v1585 = vrot.slane %v1583, 4
        %v1586 = vor.u32 %v1585, %v1581
        %v1587 = vrot.slane %v1586, 4
        %v1589 = vshll.u32 %v1412, 16
        %v1591 = vrot.slane %v1589, 5
        %v1592 = vsel %vm1424, %v1587, %v1591
        %v1594 = vshrl.u32 %v1388, 16
        %v1596 = vrot.slane %v1594, 4
        %v1597 = vshll.u32 %v1388, 16
        %v1599 = vrot.slane %v1597, 5
        %v1600 = vor.u32 %v1596, %v1599
        %v1601 = vrot.slane %v1600, 4
        %v1603 = vshll.u32 %v1389, 16
        %v1605 = vrot.slane %v1603, 5
        %v1606 = vsel %vm1424, %v1601, %v1605
        %v1607 = vshrl.u32 %v1389, 16
        %v1609 = vrot.slane %v1607, 4
        %v1610 = vor.u32 %v1609, %v1605
        %v1611 = vrot.slane %v1610, 4
        %v1613 = vshll.u32 %v1413, 16
        %v1615 = vrot.slane %v1613, 5
        %v1616 = vsel %vm1424, %v1611, %v1615
        %v1618 = vshrl.u32 %v1390, 16
        %v1620 = vrot.slane %v1618, 4
        %v1621 = vshll.u32 %v1390, 16
        %v1623 = vrot.slane %v1621, 5
        %v1624 = vor.u32 %v1620, %v1623
        %v1625 = vrot.slane %v1624, 4
        %v1627 = vshll.u32 %v1391, 16
        %v1629 = vrot.slane %v1627, 5
        %v1630 = vsel %vm1424, %v1625, %v1629
        %v1631 = vshrl.u32 %v1391, 16
        %v1633 = vrot.slane %v1631, 4
        %v1634 = vor.u32 %v1633, %v1629
        %v1635 = vrot.slane %v1634, 4
        %v1637 = vshll.u32 %v1414, 16
        %v1639 = vrot.slane %v1637, 5
        %v1640 = vsel %vm1424, %v1635, %v1639
        %v1642 = vshrl.u32 %v1392, 16
        %v1644 = vrot.slane %v1642, 4
        %v1645 = vshll.u32 %v1392, 16
        %v1647 = vrot.slane %v1645, 5
        %v1648 = vor.u32 %v1644, %v1647
        %v1649 = vrot.slane %v1648, 4
        %v1651 = vshll.u32 %v1393, 16
        %v1653 = vrot.slane %v1651, 5
        %v1654 = vsel %vm1424, %v1649, %v1653
        %v1655 = vshrl.u32 %v1393, 16
        %v1657 = vrot.slane %v1655, 4
        %v1658 = vor.u32 %v1657, %v1653
        %v1659 = vrot.slane %v1658, 4
        %v1661 = vshll.u32 %v1415, 16
        %v1663 = vrot.slane %v1661, 5
        %v1664 = vsel %vm1424, %v1659, %v1663
        %v1666 = vshrl.u32 %v1394, 16
        %v1668 = vrot.slane %v1666, 4
        %v1669 = vshll.u32 %v1394, 16
        %v1671 = vrot.slane %v1669, 5
        %v1672 = vor.u32 %v1668, %v1671
        %v1673 = vrot.slane %v1672, 4
        %v1675 = vshll.u32 %v1395, 16
        %v1677 = vrot.slane %v1675, 5
        %v1678 = vsel %vm1424, %v1673, %v1677
        %v1679 = vshrl.u32 %v1395, 16
        %v1681 = vrot.slane %v1679, 4
        %v1682 = vor.u32 %v1681, %v1677
        %v1683 = vrot.slane %v1682, 4
        %v1685 = vshll.u32 %v1416, 16
        %v1687 = vrot.slane %v1685, 5
        %v1688 = vsel %vm1424, %v1683, %v1687
        %v1690 = vshrl.u32 %v1396, 16
        %v1692 = vrot.slane %v1690, 4
        %v1693 = vshll.u32 %v1396, 16
        %v1695 = vrot.slane %v1693, 5
        %v1696 = vor.u32 %v1692, %v1695
        %v1697 = vrot.slane %v1696, 4
        %v1699 = vshll.u32 %v1397, 16
        %v1701 = vrot.slane %v1699, 5
        %v1702 = vsel %vm1424, %v1697, %v1701
        %v1703 = vshrl.u32 %v1397, 16
        %v1705 = vrot.slane %v1703, 4
        %v1706 = vor.u32 %v1705, %v1701
        %v1707 = vrot.slane %v1706, 4
        %v1709 = vshll.u32 %v1417, 16
        %v1711 = vrot.slane %v1709, 5
        %v1712 = vsel %vm1424, %v1707, %v1711
        %v1714 = vshrl.u32 %v1398, 16
        %v1716 = vrot.slane %v1714, 4
        %v1717 = vshll.u32 %v1398, 16
        %v1719 = vrot.slane %v1717, 5
        %v1720 = vor.u32 %v1716, %v1719
        %v1721 = vrot.slane %v1720, 4
        %v1723 = vshll.u32 %v1399, 16
        %v1725 = vrot.slane %v1723, 5
        %v1726 = vsel %vm1424, %v1721, %v1725
        %v1727 = vshrl.u32 %v1399, 16
        %v1729 = vrot.slane %v1727, 4
        %v1730 = vor.u32 %v1729, %v1725
        %v1731 = vrot.slane %v1730, 4
        %v1733 = vshll.u32 %v1418, 16
        %v1735 = vrot.slane %v1733, 5
        %v1736 = vsel %vm1424, %v1731, %v1735
        %v1738 = vshrl.u32 %v1400, 16
        %v1740 = vrot.slane %v1738, 4
        %v1741 = vshll.u32 %v1400, 16
        %v1743 = vrot.slane %v1741, 5
        %v1744 = vor.u32 %v1740, %v1743
        %v1745 = vrot.slane %v1744, 4
        %v1747 = vshll.u32 %v1401, 16
        %v1749 = vrot.slane %v1747, 5
        %v1750 = vsel %vm1424, %v1745, %v1749
        %v1751 = vshrl.u32 %v1401, 16
        %v1753 = vrot.slane %v1751, 4
        %v1754 = vor.u32 %v1753, %v1749
        %v1755 = vrot.slane %v1754, 4
        %v1757 = vshll.u32 %v1419, 16
        %v1759 = vrot.slane %v1757, 5
        %v1760 = vsel %vm1424, %v1755, %v1759
        %v1762 = vshrl.u32 %v1402, 16
        %v1764 = vrot.slane %v1762, 4
        %v1765 = vshll.u32 %v1402, 16
        %v1767 = vrot.slane %v1765, 5
        %v1768 = vor.u32 %v1764, %v1767
        %v1769 = vrot.slane %v1768, 4
        %v1771 = vshll.u32 %v1403, 16
        %v1773 = vrot.slane %v1771, 5
        %v1774 = vsel %vm1424, %v1769, %v1773
        %v1775 = vshrl.u32 %v1403, 16
        %v1777 = vrot.slane %v1775, 4
        %v1778 = vor.u32 %v1777, %v1773
        %v1779 = vrot.slane %v1778, 4
        %v1781 = vshll.u32 %v1420, 16
        %v1783 = vrot.slane %v1781, 5
        %v1784 = vsel %vm1424, %v1779, %v1783
        %v1786 = vshrl.u32 %v1404, 16
        %v1788 = vrot.slane %v1786, 4
        %v1789 = vshll.u32 %v1404, 16
        %v1791 = vrot.slane %v1789, 5
        %v1792 = vor.u32 %v1788, %v1791
        %v1793 = vrot.slane %v1792, 4
        %v1795 = vshll.u32 %v1405, 16
        %v1797 = vrot.slane %v1795, 5
        %v1798 = vsel %vm1424, %v1793, %v1797
        %v1799 = vshrl.u32 %v1405, 16
        %v1801 = vrot.slane %v1799, 4
        %v1802 = vor.u32 %v1801, %v1797
        %v1803 = vrot.slane %v1802, 4
        %v1805 = vshll.u32 %v1421, 16
        %v1807 = vrot.slane %v1805, 5
        %v1808 = vsel %vm1424, %v1803, %v1807
        %v1809 = vld [vmem:[#allocation2] sm:$0xe]
        %v1810 = vld [vmem:[#allocation2 + $0xc] sm:$0xe]
        %v1811 = vld [vmem:[#allocation2 + $0x18] sm:$0xe]
        %v1812 = vld [vmem:[#allocation2 + $0x24] sm:$0xe]
        %v1813 = vld [vmem:[#allocation2 + $0x30] sm:$0xe]
        %v1814 = vld [vmem:[#allocation2 + $0x3c] sm:$0xe]
        %v1815 = vld [vmem:[#allocation2 + $0x48] sm:$0xe]
        %v1816 = vld [vmem:[#allocation2 + $0x54] sm:$0xe]
        %v1817 = vld [vmem:[#allocation2 + $0x60] sm:$0xe]
        %v1818 = vld [vmem:[#allocation2 + $0x6c] sm:$0xe]
        %v1819 = vld [vmem:[#allocation2 + $0x78] sm:$0xe]
        %v1820 = vld [vmem:[#allocation2 + $0x84] sm:$0xe]
        %v1821 = vld [vmem:[#allocation2 + $0x90] sm:$0xe]
        %v1822 = vld [vmem:[#allocation2 + $0x9c] sm:$0xe]
        %v1823 = vld [vmem:[#allocation2 + $0xa8] sm:$0xe]
        %v1824 = vld [vmem:[#allocation2 + $0xb4] sm:$0xe]
        %vm1873 = vcmask 1042432
        %vm1874 = vcmask 1046532
        %vm1875 = vmor %vm1873, %vm1874
        %v1876 = vrot.slane %v1809, 5
        %v1877 = vrot.slane %v1876, 4
        %v1878 = vrot.slane %v1375, 5
        %v1879 = vsel %vm1875, %v1877, %v1878
        %v1880 = vrot.slane %v1878, 4
        %v1881 = vrot.slane %v1406, 5
        %v1882 = vsel %vm1875, %v1880, %v1881
        %v1883 = vrot.slane %v1810, 5
        %v1884 = vrot.slane %v1883, 4
        %v1885 = vrot.slane %v1377, 5
        %v1886 = vsel %vm1875, %v1884, %v1885
        %v1887 = vrot.slane %v1885, 4
        %v1888 = vrot.slane %v1407, 5
        %v1889 = vsel %vm1875, %v1887, %v1888
        %v1890 = vrot.slane %v1811, 5
        %v1891 = vrot.slane %v1890, 4
        %v1892 = vrot.slane %v1379, 5
        %v1893 = vsel %vm1875, %v1891, %v1892
        %v1894 = vrot.slane %v1892, 4
        %v1895 = vrot.slane %v1408, 5
        %v1896 = vsel %vm1875, %v1894, %v1895
        %v1897 = vrot.slane %v1812, 5
        %v1898 = vrot.slane %v1897, 4
        %v1899 = vrot.slane %v1381, 5
        %v1900 = vsel %vm1875, %v1898, %v1899
        %v1901 = vrot.slane %v1899, 4
        %v1902 = vrot.slane %v1409, 5
        %v1903 = vsel %vm1875, %v1901, %v1902
        %v1904 = vrot.slane %v1813, 5
        %v1905 = vrot.slane %v1904, 4
        %v1906 = vrot.slane %v1383, 5
        %v1907 = vsel %vm1875, %v1905, %v1906
        %v1908 = vrot.slane %v1906, 4
        %v1909 = vrot.slane %v1410, 5
        %v1910 = vsel %vm1875, %v1908, %v1909
        %v1911 = vrot.slane %v1814, 5
        %v1912 = vrot.slane %v1911, 4
        %v1913 = vrot.slane %v1385, 5
        %v1914 = vsel %vm1875, %v1912, %v1913
        %v1915 = vrot.slane %v1913, 4
        %v1916 = vrot.slane %v1411, 5
        %v1917 = vsel %vm1875, %v1915, %v1916
        %v1918 = vrot.slane %v1815, 5
        %v1919 = vrot.slane %v1918, 4
        %v1920 = vrot.slane %v1387, 5
        %v1921 = vsel %vm1875, %v1919, %v1920
        %v1922 = vrot.slane %v1920, 4
        %v1923 = vrot.slane %v1412, 5
        %v1924 = vsel %vm1875, %v1922, %v1923
        %v1925 = vrot.slane %v1816, 5
        %v1926 = vrot.slane %v1925, 4
        %v1927 = vrot.slane %v1389, 5
        %v1928 = vsel %vm1875, %v1926, %v1927
        %v1929 = vrot.slane %v1927, 4
        %v1930 = vrot.slane %v1413, 5
        %v1931 = vsel %vm1875, %v1929, %v1930
        %v1932 = vrot.slane %v1817, 5
        %v1933 = vrot.slane %v1932, 4
        %v1934 = vrot.slane %v1391, 5
        %v1935 = vsel %vm1875, %v1933, %v1934
        %v1936 = vrot.slane %v1934, 4
        %v1937 = vrot.slane %v1414, 5
        %v1938 = vsel %vm1875, %v1936, %v1937
        %v1939 = vrot.slane %v1818, 5
        %v1940 = vrot.slane %v1939, 4
        %v1941 = vrot.slane %v1393, 5
        %v1942 = vsel %vm1875, %v1940, %v1941
        %v1943 = vrot.slane %v1941, 4
        %v1944 = vrot.slane %v1415, 5
        %v1945 = vsel %vm1875, %v1943, %v1944
        %v1946 = vrot.slane %v1819, 5
        %v1947 = vrot.slane %v1946, 4
        %v1948 = vrot.slane %v1395, 5
        %v1949 = vsel %vm1875, %v1947, %v1948
        %v1950 = vrot.slane %v1948, 4
        %v1951 = vrot.slane %v1416, 5
        %v1952 = vsel %vm1875, %v1950, %v1951
        %v1953 = vrot.slane %v1820, 5
        %v1954 = vrot.slane %v1953, 4
        %v1955 = vrot.slane %v1397, 5
        %v1956 = vsel %vm1875, %v1954, %v1955
        %v1957 = vrot.slane %v1955, 4
        %v1958 = vrot.slane %v1417, 5
        %v1959 = vsel %vm1875, %v1957, %v1958
        %v1960 = vrot.slane %v1821, 5
        %v1961 = vrot.slane %v1960, 4
        %v1962 = vrot.slane %v1399, 5
        %v1963 = vsel %vm1875, %v1961, %v1962
        %v1964 = vrot.slane %v1962, 4
        %v1965 = vrot.slane %v1418, 5
        %v1966 = vsel %vm1875, %v1964, %v1965
        %v1967 = vrot.slane %v1822, 5
        %v1968 = vrot.slane %v1967, 4
        %v1969 = vrot.slane %v1401, 5
        %v1970 = vsel %vm1875, %v1968, %v1969
        %v1971 = vrot.slane %v1969, 4
        %v1972 = vrot.slane %v1419, 5
        %v1973 = vsel %vm1875, %v1971, %v1972
        %v1974 = vrot.slane %v1823, 5
        %v1975 = vrot.slane %v1974, 4
        %v1976 = vrot.slane %v1403, 5
        %v1977 = vsel %vm1875, %v1975, %v1976
        %v1978 = vrot.slane %v1976, 4
        %v1979 = vrot.slane %v1420, 5
        %v1980 = vsel %vm1875, %v1978, %v1979
        %v1981 = vrot.slane %v1824, 5
        %v1982 = vrot.slane %v1981, 4
        %v1983 = vrot.slane %v1405, 5
        %v1984 = vsel %vm1875, %v1982, %v1983
        %v1985 = vrot.slane %v1983, 4
        %v1986 = vrot.slane %v1421, 5
        %v1987 = vsel %vm1875, %v1985, %v1986
        %v1988 = vld [vmem:[%s740] sm:$0xf]
        %v1989 = vld [vmem:[%s740 + $0x4] sm:$0xf]
        %v1990 = vld [vmem:[%s740 + $0xc] sm:$0xf]
        %v1991 = vld [vmem:[%s740 + $0x10] sm:$0xf]
        %v1992 = vld [vmem:[%s740 + $0x18] sm:$0xf]
        %v1993 = vld [vmem:[%s740 + $0x1c] sm:$0xf]
        %v1994 = vld [vmem:[%s740 + $0x24] sm:$0xf]
        %v1995 = vld [vmem:[%s740 + $0x28] sm:$0xf]
        %v1996 = vld [vmem:[%s740 + $0x30] sm:$0xf]
        %v1997 = vld [vmem:[%s740 + $0x34] sm:$0xf]
        %v1998 = vld [vmem:[%s740 + $0x3c] sm:$0xf]
        %v1999 = vld [vmem:[%s740 + $0x40] sm:$0xf]
        %v2000 = vld [vmem:[%s740 + $0x48] sm:$0xf]
        %v2001 = vld [vmem:[%s740 + $0x4c] sm:$0xf]
        %v2002 = vld [vmem:[%s740 + $0x54] sm:$0xf]
        %v2003 = vld [vmem:[%s740 + $0x58] sm:$0xf]
        %v2004 = vld [vmem:[%s740 + $0x60] sm:$0xf]
        %v2005 = vld [vmem:[%s740 + $0x64] sm:$0xf]
        %v2006 = vld [vmem:[%s740 + $0x6c] sm:$0xf]
        %v2007 = vld [vmem:[%s740 + $0x70] sm:$0xf]
        %v2008 = vld [vmem:[%s740 + $0x78] sm:$0xf]
        %v2009 = vld [vmem:[%s740 + $0x7c] sm:$0xf]
        %v2010 = vld [vmem:[%s740 + $0x84] sm:$0xf]
        %v2011 = vld [vmem:[%s740 + $0x88] sm:$0xf]
        %v2012 = vld [vmem:[%s740 + $0x90] sm:$0xf]
        %v2013 = vld [vmem:[%s740 + $0x94] sm:$0xf]
        %v2014 = vld [vmem:[%s740 + $0x9c] sm:$0xf]
        %v2015 = vld [vmem:[%s740 + $0xa0] sm:$0xf]
        %v2016 = vld [vmem:[%s740 + $0xa8] sm:$0xf]
        %v2017 = vld [vmem:[%s740 + $0xac] sm:$0xf]
        %v2018 = vld [vmem:[%s740 + $0xb4] sm:$0xf]
        %v2019 = vld [vmem:[%s740 + $0xb8] sm:$0xf]
        %v2020 = vld [vmem:[%s740 + $0x8] sm:$0x1]
        %v2021 = vld [vmem:[%s740 + $0x14] sm:$0x1]
        %v2022 = vld [vmem:[%s740 + $0x20] sm:$0x1]
        %v2023 = vld [vmem:[%s740 + $0x2c] sm:$0x1]
        %v2024 = vld [vmem:[%s740 + $0x38] sm:$0x1]
        %v2025 = vld [vmem:[%s740 + $0x44] sm:$0x1]
        %v2026 = vld [vmem:[%s740 + $0x50] sm:$0x1]
        %v2027 = vld [vmem:[%s740 + $0x5c] sm:$0x1]
        %v2028 = vld [vmem:[%s740 + $0x68] sm:$0x1]
        %v2029 = vld [vmem:[%s740 + $0x74] sm:$0x1]
        %v2030 = vld [vmem:[%s740 + $0x80] sm:$0x1]
        %v2031 = vld [vmem:[%s740 + $0x8c] sm:$0x1]
        %v2032 = vld [vmem:[%s740 + $0x98] sm:$0x1]
        %v2033 = vld [vmem:[%s740 + $0xa4] sm:$0x1]
        %v2034 = vld [vmem:[%s740 + $0xb0] sm:$0x1]
        %v2035 = vld [vmem:[%s740 + $0xbc] sm:$0x1]
        %v2037 = vshrl.u32 %v1988, 16
        %v2039 = vrot.slane %v2037, 4
        %v2040 = vshll.u32 %v1988, 16
        %v2042 = vrot.slane %v2040, 5
        %v2043 = vor.u32 %v2039, %v2042
        %v2044 = vrot.slane %v2043, 4
        %v2046 = vshll.u32 %v1989, 16
        %v2048 = vrot.slane %v2046, 5
        %v2049 = vsel %vm1424, %v2044, %v2048
        %v2050 = vshrl.u32 %v1989, 16
        %v2052 = vrot.slane %v2050, 4
        %v2053 = vor.u32 %v2052, %v2048
        %v2054 = vrot.slane %v2053, 4
        %v2056 = vshll.u32 %v2020, 16
        %v2058 = vrot.slane %v2056, 5
        %v2059 = vsel %vm1424, %v2054, %v2058
        %v2061 = vshrl.u32 %v1990, 16
        %v2063 = vrot.slane %v2061, 4
        %v2064 = vshll.u32 %v1990, 16
        %v2066 = vrot.slane %v2064, 5
        %v2067 = vor.u32 %v2063, %v2066
        %v2068 = vrot.slane %v2067, 4
        %v2070 = vshll.u32 %v1991, 16
        %v2072 = vrot.slane %v2070, 5
        %v2073 = vsel %vm1424, %v2068, %v2072
        %v2074 = vshrl.u32 %v1991, 16
        %v2076 = vrot.slane %v2074, 4
        %v2077 = vor.u32 %v2076, %v2072
        %v2078 = vrot.slane %v2077, 4
        %v2080 = vshll.u32 %v2021, 16
        %v2082 = vrot.slane %v2080, 5
        %v2083 = vsel %vm1424, %v2078, %v2082
        %v2085 = vshrl.u32 %v1992, 16
        %v2087 = vrot.slane %v2085, 4
        %v2088 = vshll.u32 %v1992, 16
        %v2090 = vrot.slane %v2088, 5
        %v2091 = vor.u32 %v2087, %v2090
        %v2092 = vrot.slane %v2091, 4
        %v2094 = vshll.u32 %v1993, 16
        %v2096 = vrot.slane %v2094, 5
        %v2097 = vsel %vm1424, %v2092, %v2096
        %v2098 = vshrl.u32 %v1993, 16
        %v2100 = vrot.slane %v2098, 4
        %v2101 = vor.u32 %v2100, %v2096
        %v2102 = vrot.slane %v2101, 4
        %v2104 = vshll.u32 %v2022, 16
        %v2106 = vrot.slane %v2104, 5
        %v2107 = vsel %vm1424, %v2102, %v2106
        %v2109 = vshrl.u32 %v1994, 16
        %v2111 = vrot.slane %v2109, 4
        %v2112 = vshll.u32 %v1994, 16
        %v2114 = vrot.slane %v2112, 5
        %v2115 = vor.u32 %v2111, %v2114
        %v2116 = vrot.slane %v2115, 4
        %v2118 = vshll.u32 %v1995, 16
        %v2120 = vrot.slane %v2118, 5
        %v2121 = vsel %vm1424, %v2116, %v2120
        %v2122 = vshrl.u32 %v1995, 16
        %v2124 = vrot.slane %v2122, 4
        %v2125 = vor.u32 %v2124, %v2120
        %v2126 = vrot.slane %v2125, 4
        %v2128 = vshll.u32 %v2023, 16
        %v2130 = vrot.slane %v2128, 5
        %v2131 = vsel %vm1424, %v2126, %v2130
        %v2133 = vshrl.u32 %v1996, 16
        %v2135 = vrot.slane %v2133, 4
        %v2136 = vshll.u32 %v1996, 16
        %v2138 = vrot.slane %v2136, 5
        %v2139 = vor.u32 %v2135, %v2138
        %v2140 = vrot.slane %v2139, 4
        %v2142 = vshll.u32 %v1997, 16
        %v2144 = vrot.slane %v2142, 5
        %v2145 = vsel %vm1424, %v2140, %v2144
        %v2146 = vshrl.u32 %v1997, 16
        %v2148 = vrot.slane %v2146, 4
        %v2149 = vor.u32 %v2148, %v2144
        %v2150 = vrot.slane %v2149, 4
        %v2152 = vshll.u32 %v2024, 16
        %v2154 = vrot.slane %v2152, 5
        %v2155 = vsel %vm1424, %v2150, %v2154
        %v2157 = vshrl.u32 %v1998, 16
        %v2159 = vrot.slane %v2157, 4
        %v2160 = vshll.u32 %v1998, 16
        %v2162 = vrot.slane %v2160, 5
        %v2163 = vor.u32 %v2159, %v2162
        %v2164 = vrot.slane %v2163, 4
        %v2166 = vshll.u32 %v1999, 16
        %v2168 = vrot.slane %v2166, 5
        %v2169 = vsel %vm1424, %v2164, %v2168
        %v2170 = vshrl.u32 %v1999, 16
        %v2172 = vrot.slane %v2170, 4
        %v2173 = vor.u32 %v2172, %v2168
        %v2174 = vrot.slane %v2173, 4
        %v2176 = vshll.u32 %v2025, 16
        %v2178 = vrot.slane %v2176, 5
        %v2179 = vsel %vm1424, %v2174, %v2178
        %v2181 = vshrl.u32 %v2000, 16
        %v2183 = vrot.slane %v2181, 4
        %v2184 = vshll.u32 %v2000, 16
        %v2186 = vrot.slane %v2184, 5
        %v2187 = vor.u32 %v2183, %v2186
        %v2188 = vrot.slane %v2187, 4
        %v2190 = vshll.u32 %v2001, 16
        %v2192 = vrot.slane %v2190, 5
        %v2193 = vsel %vm1424, %v2188, %v2192
        %v2194 = vshrl.u32 %v2001, 16
        %v2196 = vrot.slane %v2194, 4
        %v2197 = vor.u32 %v2196, %v2192
        %v2198 = vrot.slane %v2197, 4
        %v2200 = vshll.u32 %v2026, 16
        %v2202 = vrot.slane %v2200, 5
        %v2203 = vsel %vm1424, %v2198, %v2202
        %v2205 = vshrl.u32 %v2002, 16
        %v2207 = vrot.slane %v2205, 4
        %v2208 = vshll.u32 %v2002, 16
        %v2210 = vrot.slane %v2208, 5
        %v2211 = vor.u32 %v2207, %v2210
        %v2212 = vrot.slane %v2211, 4
        %v2214 = vshll.u32 %v2003, 16
        %v2216 = vrot.slane %v2214, 5
        %v2217 = vsel %vm1424, %v2212, %v2216
        %v2218 = vshrl.u32 %v2003, 16
        %v2220 = vrot.slane %v2218, 4
        %v2221 = vor.u32 %v2220, %v2216
        %v2222 = vrot.slane %v2221, 4
        %v2224 = vshll.u32 %v2027, 16
        %v2226 = vrot.slane %v2224, 5
        %v2227 = vsel %vm1424, %v2222, %v2226
        %v2229 = vshrl.u32 %v2004, 16
        %v2231 = vrot.slane %v2229, 4
        %v2232 = vshll.u32 %v2004, 16
        %v2234 = vrot.slane %v2232, 5
        %v2235 = vor.u32 %v2231, %v2234
        %v2236 = vrot.slane %v2235, 4
        %v2238 = vshll.u32 %v2005, 16
        %v2240 = vrot.slane %v2238, 5
        %v2241 = vsel %vm1424, %v2236, %v2240
        %v2242 = vshrl.u32 %v2005, 16
        %v2244 = vrot.slane %v2242, 4
        %v2245 = vor.u32 %v2244, %v2240
        %v2246 = vrot.slane %v2245, 4
        %v2248 = vshll.u32 %v2028, 16
        %v2250 = vrot.slane %v2248, 5
        %v2251 = vsel %vm1424, %v2246, %v2250
        %v2253 = vshrl.u32 %v2006, 16
        %v2255 = vrot.slane %v2253, 4
        %v2256 = vshll.u32 %v2006, 16
        %v2258 = vrot.slane %v2256, 5
        %v2259 = vor.u32 %v2255, %v2258
        %v2260 = vrot.slane %v2259, 4
        %v2262 = vshll.u32 %v2007, 16
        %v2264 = vrot.slane %v2262, 5
        %v2265 = vsel %vm1424, %v2260, %v2264
        %v2266 = vshrl.u32 %v2007, 16
        %v2268 = vrot.slane %v2266, 4
        %v2269 = vor.u32 %v2268, %v2264
        %v2270 = vrot.slane %v2269, 4
        %v2272 = vshll.u32 %v2029, 16
        %v2274 = vrot.slane %v2272, 5
        %v2275 = vsel %vm1424, %v2270, %v2274
        %v2277 = vshrl.u32 %v2008, 16
        %v2279 = vrot.slane %v2277, 4
        %v2280 = vshll.u32 %v2008, 16
        %v2282 = vrot.slane %v2280, 5
        %v2283 = vor.u32 %v2279, %v2282
        %v2284 = vrot.slane %v2283, 4
        %v2286 = vshll.u32 %v2009, 16
        %v2288 = vrot.slane %v2286, 5
        %v2289 = vsel %vm1424, %v2284, %v2288
        %v2290 = vshrl.u32 %v2009, 16
        %v2292 = vrot.slane %v2290, 4
        %v2293 = vor.u32 %v2292, %v2288
        %v2294 = vrot.slane %v2293, 4
        %v2296 = vshll.u32 %v2030, 16
        %v2298 = vrot.slane %v2296, 5
        %v2299 = vsel %vm1424, %v2294, %v2298
        %v2301 = vshrl.u32 %v2010, 16
        %v2303 = vrot.slane %v2301, 4
        %v2304 = vshll.u32 %v2010, 16
        %v2306 = vrot.slane %v2304, 5
        %v2307 = vor.u32 %v2303, %v2306
        %v2308 = vrot.slane %v2307, 4
        %v2310 = vshll.u32 %v2011, 16
        %v2312 = vrot.slane %v2310, 5
        %v2313 = vsel %vm1424, %v2308, %v2312
        %v2314 = vshrl.u32 %v2011, 16
        %v2316 = vrot.slane %v2314, 4
        %v2317 = vor.u32 %v2316, %v2312
        %v2318 = vrot.slane %v2317, 4
        %v2320 = vshll.u32 %v2031, 16
        %v2322 = vrot.slane %v2320, 5
        %v2323 = vsel %vm1424, %v2318, %v2322
        %v2325 = vshrl.u32 %v2012, 16
        %v2327 = vrot.slane %v2325, 4
        %v2328 = vshll.u32 %v2012, 16
        %v2330 = vrot.slane %v2328, 5
        %v2331 = vor.u32 %v2327, %v2330
        %v2332 = vrot.slane %v2331, 4
        %v2334 = vshll.u32 %v2013, 16
        %v2336 = vrot.slane %v2334, 5
        %v2337 = vsel %vm1424, %v2332, %v2336
        %v2338 = vshrl.u32 %v2013, 16
        %v2340 = vrot.slane %v2338, 4
        %v2341 = vor.u32 %v2340, %v2336
        %v2342 = vrot.slane %v2341, 4
        %v2344 = vshll.u32 %v2032, 16
        %v2346 = vrot.slane %v2344, 5
        %v2347 = vsel %vm1424, %v2342, %v2346
        %v2349 = vshrl.u32 %v2014, 16
        %v2351 = vrot.slane %v2349, 4
        %v2352 = vshll.u32 %v2014, 16
        %v2354 = vrot.slane %v2352, 5
        %v2355 = vor.u32 %v2351, %v2354
        %v2356 = vrot.slane %v2355, 4
        %v2358 = vshll.u32 %v2015, 16
        %v2360 = vrot.slane %v2358, 5
        %v2361 = vsel %vm1424, %v2356, %v2360
        %v2362 = vshrl.u32 %v2015, 16
        %v2364 = vrot.slane %v2362, 4
        %v2365 = vor.u32 %v2364, %v2360
        %v2366 = vrot.slane %v2365, 4
        %v2368 = vshll.u32 %v2033, 16
        %v2370 = vrot.slane %v2368, 5
        %v2371 = vsel %vm1424, %v2366, %v2370
        %v2373 = vshrl.u32 %v2016, 16
        %v2375 = vrot.slane %v2373, 4
        %v2376 = vshll.u32 %v2016, 16
        %v2378 = vrot.slane %v2376, 5
        %v2379 = vor.u32 %v2375, %v2378
        %v2380 = vrot.slane %v2379, 4
        %v2382 = vshll.u32 %v2017, 16
        %v2384 = vrot.slane %v2382, 5
        %v2385 = vsel %vm1424, %v2380, %v2384
        %v2386 = vshrl.u32 %v2017, 16
        %v2388 = vrot.slane %v2386, 4
        %v2389 = vor.u32 %v2388, %v2384
        %v2390 = vrot.slane %v2389, 4
        %v2392 = vshll.u32 %v2034, 16
        %v2394 = vrot.slane %v2392, 5
        %v2395 = vsel %vm1424, %v2390, %v2394
        %v2397 = vshrl.u32 %v2018, 16
        %v2399 = vrot.slane %v2397, 4
        %v2400 = vshll.u32 %v2018, 16
        %v2402 = vrot.slane %v2400, 5
        %v2403 = vor.u32 %v2399, %v2402
        %v2404 = vrot.slane %v2403, 4
        %v2406 = vshll.u32 %v2019, 16
        %v2408 = vrot.slane %v2406, 5
        %v2409 = vsel %vm1424, %v2404, %v2408
        %v2410 = vshrl.u32 %v2019, 16
        %v2412 = vrot.slane %v2410, 4
        %v2413 = vor.u32 %v2412, %v2408
        %v2414 = vrot.slane %v2413, 4
        %v2416 = vshll.u32 %v2035, 16
        %v2418 = vrot.slane %v2416, 5
        %v2419 = vsel %vm1424, %v2414, %v2418
        %v2420 = vld [vmem:[%s740] sm:$0xe]
        %v2421 = vld [vmem:[%s740 + $0xc] sm:$0xe]
        %v2422 = vld [vmem:[%s740 + $0x18] sm:$0xe]
        %v2423 = vld [vmem:[%s740 + $0x24] sm:$0xe]
        %v2424 = vld [vmem:[%s740 + $0x30] sm:$0xe]
        %v2425 = vld [vmem:[%s740 + $0x3c] sm:$0xe]
        %v2426 = vld [vmem:[%s740 + $0x48] sm:$0xe]
        %v2427 = vld [vmem:[%s740 + $0x54] sm:$0xe]
        %v2428 = vld [vmem:[%s740 + $0x60] sm:$0xe]
        %v2429 = vld [vmem:[%s740 + $0x6c] sm:$0xe]
        %v2430 = vld [vmem:[%s740 + $0x78] sm:$0xe]
        %v2431 = vld [vmem:[%s740 + $0x84] sm:$0xe]
        %v2432 = vld [vmem:[%s740 + $0x90] sm:$0xe]
        %v2433 = vld [vmem:[%s740 + $0x9c] sm:$0xe]
        %v2434 = vld [vmem:[%s740 + $0xa8] sm:$0xe]
        %v2435 = vld [vmem:[%s740 + $0xb4] sm:$0xe]
        %v2484 = vrot.slane %v2420, 5
        %v2485 = vrot.slane %v2484, 4
        %v2486 = vrot.slane %v1989, 5
        %v2487 = vsel %vm1875, %v2485, %v2486
        %v2488 = vrot.slane %v2486, 4
        %v2489 = vrot.slane %v2020, 5
        %v2490 = vsel %vm1875, %v2488, %v2489
        %v2491 = vrot.slane %v2421, 5
        %v2492 = vrot.slane %v2491, 4
        %v2493 = vrot.slane %v1991, 5
        %v2494 = vsel %vm1875, %v2492, %v2493
        %v2495 = vrot.slane %v2493, 4
        %v2496 = vrot.slane %v2021, 5
        %v2497 = vsel %vm1875, %v2495, %v2496
        %v2498 = vrot.slane %v2422, 5
        %v2499 = vrot.slane %v2498, 4
        %v2500 = vrot.slane %v1993, 5
        %v2501 = vsel %vm1875, %v2499, %v2500
        %v2502 = vrot.slane %v2500, 4
        %v2503 = vrot.slane %v2022, 5
        %v2504 = vsel %vm1875, %v2502, %v2503
        %v2505 = vrot.slane %v2423, 5
        %v2506 = vrot.slane %v2505, 4
        %v2507 = vrot.slane %v1995, 5
        %v2508 = vsel %vm1875, %v2506, %v2507
        %v2509 = vrot.slane %v2507, 4
        %v2510 = vrot.slane %v2023, 5
        %v2511 = vsel %vm1875, %v2509, %v2510
        %v2512 = vrot.slane %v2424, 5
        %v2513 = vrot.slane %v2512, 4
        %v2514 = vrot.slane %v1997, 5
        %v2515 = vsel %vm1875, %v2513, %v2514
        %v2516 = vrot.slane %v2514, 4
        %v2517 = vrot.slane %v2024, 5
        %v2518 = vsel %vm1875, %v2516, %v2517
        %v2519 = vrot.slane %v2425, 5
        %v2520 = vrot.slane %v2519, 4
        %v2521 = vrot.slane %v1999, 5
        %v2522 = vsel %vm1875, %v2520, %v2521
        %v2523 = vrot.slane %v2521, 4
        %v2524 = vrot.slane %v2025, 5
        %v2525 = vsel %vm1875, %v2523, %v2524
        %v2526 = vrot.slane %v2426, 5
        %v2527 = vrot.slane %v2526, 4
        %v2528 = vrot.slane %v2001, 5
        %v2529 = vsel %vm1875, %v2527, %v2528
        %v2530 = vrot.slane %v2528, 4
        %v2531 = vrot.slane %v2026, 5
        %v2532 = vsel %vm1875, %v2530, %v2531
        %v2533 = vrot.slane %v2427, 5
        %v2534 = vrot.slane %v2533, 4
        %v2535 = vrot.slane %v2003, 5
        %v2536 = vsel %vm1875, %v2534, %v2535
        %v2537 = vrot.slane %v2535, 4
        %v2538 = vrot.slane %v2027, 5
        %v2539 = vsel %vm1875, %v2537, %v2538
        %v2540 = vrot.slane %v2428, 5
        %v2541 = vrot.slane %v2540, 4
        %v2542 = vrot.slane %v2005, 5
        %v2543 = vsel %vm1875, %v2541, %v2542
        %v2544 = vrot.slane %v2542, 4
        %v2545 = vrot.slane %v2028, 5
        %v2546 = vsel %vm1875, %v2544, %v2545
        %v2547 = vrot.slane %v2429, 5
        %v2548 = vrot.slane %v2547, 4
        %v2549 = vrot.slane %v2007, 5
        %v2550 = vsel %vm1875, %v2548, %v2549
        %v2551 = vrot.slane %v2549, 4
        %v2552 = vrot.slane %v2029, 5
        %v2553 = vsel %vm1875, %v2551, %v2552
        %v2554 = vrot.slane %v2430, 5
        %v2555 = vrot.slane %v2554, 4
        %v2556 = vrot.slane %v2009, 5
        %v2557 = vsel %vm1875, %v2555, %v2556
        %v2558 = vrot.slane %v2556, 4
        %v2559 = vrot.slane %v2030, 5
        %v2560 = vsel %vm1875, %v2558, %v2559
        %v2561 = vrot.slane %v2431, 5
        %v2562 = vrot.slane %v2561, 4
        %v2563 = vrot.slane %v2011, 5
        %v2564 = vsel %vm1875, %v2562, %v2563
        %v2565 = vrot.slane %v2563, 4
        %v2566 = vrot.slane %v2031, 5
        %v2567 = vsel %vm1875, %v2565, %v2566
        %v2568 = vrot.slane %v2432, 5
        %v2569 = vrot.slane %v2568, 4
        %v2570 = vrot.slane %v2013, 5
        %v2571 = vsel %vm1875, %v2569, %v2570
        %v2572 = vrot.slane %v2570, 4
        %v2573 = vrot.slane %v2032, 5
        %v2574 = vsel %vm1875, %v2572, %v2573
        %v2575 = vrot.slane %v2433, 5
        %v2576 = vrot.slane %v2575, 4
        %v2577 = vrot.slane %v2015, 5
        %v2578 = vsel %vm1875, %v2576, %v2577
        %v2579 = vrot.slane %v2577, 4
        %v2580 = vrot.slane %v2033, 5
        %v2581 = vsel %vm1875, %v2579, %v2580
        %v2582 = vrot.slane %v2434, 5
        %v2583 = vrot.slane %v2582, 4
        %v2584 = vrot.slane %v2017, 5
        %v2585 = vsel %vm1875, %v2583, %v2584
        %v2586 = vrot.slane %v2584, 4
        %v2587 = vrot.slane %v2034, 5
        %v2588 = vsel %vm1875, %v2586, %v2587
        %v2589 = vrot.slane %v2435, 5
        %v2590 = vrot.slane %v2589, 4
        %v2591 = vrot.slane %v2019, 5
        %v2592 = vsel %vm1875, %v2590, %v2591
        %v2593 = vrot.slane %v2591, 4
        %v2594 = vrot.slane %v2035, 5
        %v2595 = vsel %vm1875, %v2593, %v2594
        %s2596 = scalar_lea.vmem [#allocation2], 24
        %v2597 = vld [vmem:[%s2596] sm:$0xf]
        %v2598 = vld [vmem:[%s2596 + $0x4] sm:$0xf]
        %v2599 = vld [vmem:[%s2596 + $0xc] sm:$0xf]
        %v2600 = vld [vmem:[%s2596 + $0x10] sm:$0xf]
        %v2601 = vld [vmem:[%s2596 + $0x18] sm:$0xf]
        %v2602 = vld [vmem:[%s2596 + $0x1c] sm:$0xf]
        %v2603 = vld [vmem:[%s2596 + $0x24] sm:$0xf]
        %v2604 = vld [vmem:[%s2596 + $0x28] sm:$0xf]
        %v2605 = vld [vmem:[%s2596 + $0x30] sm:$0xf]
        %v2606 = vld [vmem:[%s2596 + $0x34] sm:$0xf]
        %v2607 = vld [vmem:[%s2596 + $0x3c] sm:$0xf]
        %v2608 = vld [vmem:[%s2596 + $0x40] sm:$0xf]
        %v2609 = vld [vmem:[%s2596 + $0x48] sm:$0xf]
        %v2610 = vld [vmem:[%s2596 + $0x4c] sm:$0xf]
        %v2611 = vld [vmem:[%s2596 + $0x54] sm:$0xf]
        %v2612 = vld [vmem:[%s2596 + $0x58] sm:$0xf]
        %v2613 = vld [vmem:[%s2596 + $0x60] sm:$0xf]
        %v2614 = vld [vmem:[%s2596 + $0x64] sm:$0xf]
        %v2615 = vld [vmem:[%s2596 + $0x6c] sm:$0xf]
        %v2616 = vld [vmem:[%s2596 + $0x70] sm:$0xf]
        %v2617 = vld [vmem:[%s2596 + $0x78] sm:$0xf]
        %v2618 = vld [vmem:[%s2596 + $0x7c] sm:$0xf]
        %v2619 = vld [vmem:[%s2596 + $0x84] sm:$0xf]
        %v2620 = vld [vmem:[%s2596 + $0x88] sm:$0xf]
        %v2621 = vld [vmem:[%s2596 + $0x90] sm:$0xf]
        %v2622 = vld [vmem:[%s2596 + $0x94] sm:$0xf]
        %v2623 = vld [vmem:[%s2596 + $0x9c] sm:$0xf]
        %v2624 = vld [vmem:[%s2596 + $0xa0] sm:$0xf]
        %v2625 = vld [vmem:[%s2596 + $0xa8] sm:$0xf]
        %v2626 = vld [vmem:[%s2596 + $0xac] sm:$0xf]
        %v2627 = vld [vmem:[%s2596 + $0xb4] sm:$0xf]
        %v2628 = vld [vmem:[%s2596 + $0xb8] sm:$0xf]
        %v2629 = vld [vmem:[%s2596 + $0x8] sm:$0x1]
        %v2630 = vld [vmem:[%s2596 + $0x14] sm:$0x1]
        %v2631 = vld [vmem:[%s2596 + $0x20] sm:$0x1]
        %v2632 = vld [vmem:[%s2596 + $0x2c] sm:$0x1]
        %v2633 = vld [vmem:[%s2596 + $0x38] sm:$0x1]
        %v2634 = vld [vmem:[%s2596 + $0x44] sm:$0x1]
        %v2635 = vld [vmem:[%s2596 + $0x50] sm:$0x1]
        %v2636 = vld [vmem:[%s2596 + $0x5c] sm:$0x1]
        %v2637 = vld [vmem:[%s2596 + $0x68] sm:$0x1]
        %v2638 = vld [vmem:[%s2596 + $0x74] sm:$0x1]
        %v2639 = vld [vmem:[%s2596 + $0x80] sm:$0x1]
        %v2640 = vld [vmem:[%s2596 + $0x8c] sm:$0x1]
        %v2641 = vld [vmem:[%s2596 + $0x98] sm:$0x1]
        %v2642 = vld [vmem:[%s2596 + $0xa4] sm:$0x1]
        %v2643 = vld [vmem:[%s2596 + $0xb0] sm:$0x1]
        %v2644 = vld [vmem:[%s2596 + $0xbc] sm:$0x1]
        %v2646 = vshrl.u32 %v2597, 16
        %v2648 = vrot.slane %v2646, 4
        %v2649 = vshll.u32 %v2597, 16
        %v2651 = vrot.slane %v2649, 5
        %v2652 = vor.u32 %v2648, %v2651
        %v2653 = vrot.slane %v2652, 4
        %v2655 = vshll.u32 %v2598, 16
        %v2657 = vrot.slane %v2655, 5
        %v2658 = vsel %vm1424, %v2653, %v2657
        %v2659 = vshrl.u32 %v2598, 16
        %v2661 = vrot.slane %v2659, 4
        %v2662 = vor.u32 %v2661, %v2657
        %v2663 = vrot.slane %v2662, 4
        %v2665 = vshll.u32 %v2629, 16
        %v2667 = vrot.slane %v2665, 5
        %v2668 = vsel %vm1424, %v2663, %v2667
        %v2670 = vshrl.u32 %v2599, 16
        %v2672 = vrot.slane %v2670, 4
        %v2673 = vshll.u32 %v2599, 16
        %v2675 = vrot.slane %v2673, 5
        %v2676 = vor.u32 %v2672, %v2675
        %v2677 = vrot.slane %v2676, 4
        %v2679 = vshll.u32 %v2600, 16
        %v2681 = vrot.slane %v2679, 5
        %v2682 = vsel %vm1424, %v2677, %v2681
        %v2683 = vshrl.u32 %v2600, 16
        %v2685 = vrot.slane %v2683, 4
        %v2686 = vor.u32 %v2685, %v2681
        %v2687 = vrot.slane %v2686, 4
        %v2689 = vshll.u32 %v2630, 16
        %v2691 = vrot.slane %v2689, 5
        %v2692 = vsel %vm1424, %v2687, %v2691
        %v2694 = vshrl.u32 %v2601, 16
        %v2696 = vrot.slane %v2694, 4
        %v2697 = vshll.u32 %v2601, 16
        %v2699 = vrot.slane %v2697, 5
        %v2700 = vor.u32 %v2696, %v2699
        %v2701 = vrot.slane %v2700, 4
        %v2703 = vshll.u32 %v2602, 16
        %v2705 = vrot.slane %v2703, 5
        %v2706 = vsel %vm1424, %v2701, %v2705
        %v2707 = vshrl.u32 %v2602, 16
        %v2709 = vrot.slane %v2707, 4
        %v2710 = vor.u32 %v2709, %v2705
        %v2711 = vrot.slane %v2710, 4
        %v2713 = vshll.u32 %v2631, 16
        %v2715 = vrot.slane %v2713, 5
        %v2716 = vsel %vm1424, %v2711, %v2715
        %v2718 = vshrl.u32 %v2603, 16
        %v2720 = vrot.slane %v2718, 4
        %v2721 = vshll.u32 %v2603, 16
        %v2723 = vrot.slane %v2721, 5
        %v2724 = vor.u32 %v2720, %v2723
        %v2725 = vrot.slane %v2724, 4
        %v2727 = vshll.u32 %v2604, 16
        %v2729 = vrot.slane %v2727, 5
        %v2730 = vsel %vm1424, %v2725, %v2729
        %v2731 = vshrl.u32 %v2604, 16
        %v2733 = vrot.slane %v2731, 4
        %v2734 = vor.u32 %v2733, %v2729
        %v2735 = vrot.slane %v2734, 4
        %v2737 = vshll.u32 %v2632, 16
        %v2739 = vrot.slane %v2737, 5
        %v2740 = vsel %vm1424, %v2735, %v2739
        %v2742 = vshrl.u32 %v2605, 16
        %v2744 = vrot.slane %v2742, 4
        %v2745 = vshll.u32 %v2605, 16
        %v2747 = vrot.slane %v2745, 5
        %v2748 = vor.u32 %v2744, %v2747
        %v2749 = vrot.slane %v2748, 4
        %v2751 = vshll.u32 %v2606, 16
        %v2753 = vrot.slane %v2751, 5
        %v2754 = vsel %vm1424, %v2749, %v2753
        %v2755 = vshrl.u32 %v2606, 16
        %v2757 = vrot.slane %v2755, 4
        %v2758 = vor.u32 %v2757, %v2753
        %v2759 = vrot.slane %v2758, 4
        %v2761 = vshll.u32 %v2633, 16
        %v2763 = vrot.slane %v2761, 5
        %v2764 = vsel %vm1424, %v2759, %v2763
        %v2766 = vshrl.u32 %v2607, 16
        %v2768 = vrot.slane %v2766, 4
        %v2769 = vshll.u32 %v2607, 16
        %v2771 = vrot.slane %v2769, 5
        %v2772 = vor.u32 %v2768, %v2771
        %v2773 = vrot.slane %v2772, 4
        %v2775 = vshll.u32 %v2608, 16
        %v2777 = vrot.slane %v2775, 5
        %v2778 = vsel %vm1424, %v2773, %v2777
        %v2779 = vshrl.u32 %v2608, 16
        %v2781 = vrot.slane %v2779, 4
        %v2782 = vor.u32 %v2781, %v2777
        %v2783 = vrot.slane %v2782, 4
        %v2785 = vshll.u32 %v2634, 16
        %v2787 = vrot.slane %v2785, 5
        %v2788 = vsel %vm1424, %v2783, %v2787
        %v2790 = vshrl.u32 %v2609, 16
        %v2792 = vrot.slane %v2790, 4
        %v2793 = vshll.u32 %v2609, 16
        %v2795 = vrot.slane %v2793, 5
        %v2796 = vor.u32 %v2792, %v2795
        %v2797 = vrot.slane %v2796, 4
        %v2799 = vshll.u32 %v2610, 16
        %v2801 = vrot.slane %v2799, 5
        %v2802 = vsel %vm1424, %v2797, %v2801
        %v2803 = vshrl.u32 %v2610, 16
        %v2805 = vrot.slane %v2803, 4
        %v2806 = vor.u32 %v2805, %v2801
        %v2807 = vrot.slane %v2806, 4
        %v2809 = vshll.u32 %v2635, 16
        %v2811 = vrot.slane %v2809, 5
        %v2812 = vsel %vm1424, %v2807, %v2811
        %v2814 = vshrl.u32 %v2611, 16
        %v2816 = vrot.slane %v2814, 4
        %v2817 = vshll.u32 %v2611, 16
        %v2819 = vrot.slane %v2817, 5
        %v2820 = vor.u32 %v2816, %v2819
        %v2821 = vrot.slane %v2820, 4
        %v2823 = vshll.u32 %v2612, 16
        %v2825 = vrot.slane %v2823, 5
        %v2826 = vsel %vm1424, %v2821, %v2825
        %v2827 = vshrl.u32 %v2612, 16
        %v2829 = vrot.slane %v2827, 4
        %v2830 = vor.u32 %v2829, %v2825
        %v2831 = vrot.slane %v2830, 4
        %v2833 = vshll.u32 %v2636, 16
        %v2835 = vrot.slane %v2833, 5
        %v2836 = vsel %vm1424, %v2831, %v2835
        %v2838 = vshrl.u32 %v2613, 16
        %v2840 = vrot.slane %v2838, 4
        %v2841 = vshll.u32 %v2613, 16
        %v2843 = vrot.slane %v2841, 5
        %v2844 = vor.u32 %v2840, %v2843
        %v2845 = vrot.slane %v2844, 4
        %v2847 = vshll.u32 %v2614, 16
        %v2849 = vrot.slane %v2847, 5
        %v2850 = vsel %vm1424, %v2845, %v2849
        %v2851 = vshrl.u32 %v2614, 16
        %v2853 = vrot.slane %v2851, 4
        %v2854 = vor.u32 %v2853, %v2849
        %v2855 = vrot.slane %v2854, 4
        %v2857 = vshll.u32 %v2637, 16
        %v2859 = vrot.slane %v2857, 5
        %v2860 = vsel %vm1424, %v2855, %v2859
        %v2862 = vshrl.u32 %v2615, 16
        %v2864 = vrot.slane %v2862, 4
        %v2865 = vshll.u32 %v2615, 16
        %v2867 = vrot.slane %v2865, 5
        %v2868 = vor.u32 %v2864, %v2867
        %v2869 = vrot.slane %v2868, 4
        %v2871 = vshll.u32 %v2616, 16
        %v2873 = vrot.slane %v2871, 5
        %v2874 = vsel %vm1424, %v2869, %v2873
        %v2875 = vshrl.u32 %v2616, 16
        %v2877 = vrot.slane %v2875, 4
        %v2878 = vor.u32 %v2877, %v2873
        %v2879 = vrot.slane %v2878, 4
        %v2881 = vshll.u32 %v2638, 16
        %v2883 = vrot.slane %v2881, 5
        %v2884 = vsel %vm1424, %v2879, %v2883
        %v2886 = vshrl.u32 %v2617, 16
        %v2888 = vrot.slane %v2886, 4
        %v2889 = vshll.u32 %v2617, 16
        %v2891 = vrot.slane %v2889, 5
        %v2892 = vor.u32 %v2888, %v2891
        %v2893 = vrot.slane %v2892, 4
        %v2895 = vshll.u32 %v2618, 16
        %v2897 = vrot.slane %v2895, 5
        %v2898 = vsel %vm1424, %v2893, %v2897
        %v2899 = vshrl.u32 %v2618, 16
        %v2901 = vrot.slane %v2899, 4
        %v2902 = vor.u32 %v2901, %v2897
        %v2903 = vrot.slane %v2902, 4
        %v2905 = vshll.u32 %v2639, 16
        %v2907 = vrot.slane %v2905, 5
        %v2908 = vsel %vm1424, %v2903, %v2907
        %v2910 = vshrl.u32 %v2619, 16
        %v2912 = vrot.slane %v2910, 4
        %v2913 = vshll.u32 %v2619, 16
        %v2915 = vrot.slane %v2913, 5
        %v2916 = vor.u32 %v2912, %v2915
        %v2917 = vrot.slane %v2916, 4
        %v2919 = vshll.u32 %v2620, 16
        %v2921 = vrot.slane %v2919, 5
        %v2922 = vsel %vm1424, %v2917, %v2921
        %v2923 = vshrl.u32 %v2620, 16
        %v2925 = vrot.slane %v2923, 4
        %v2926 = vor.u32 %v2925, %v2921
        %v2927 = vrot.slane %v2926, 4
        %v2929 = vshll.u32 %v2640, 16
        %v2931 = vrot.slane %v2929, 5
        %v2932 = vsel %vm1424, %v2927, %v2931
        %v2934 = vshrl.u32 %v2621, 16
        %v2936 = vrot.slane %v2934, 4
        %v2937 = vshll.u32 %v2621, 16
        %v2939 = vrot.slane %v2937, 5
        %v2940 = vor.u32 %v2936, %v2939
        %v2941 = vrot.slane %v2940, 4
        %v2943 = vshll.u32 %v2622, 16
        %v2945 = vrot.slane %v2943, 5
        %v2946 = vsel %vm1424, %v2941, %v2945
        %v2947 = vshrl.u32 %v2622, 16
        %v2949 = vrot.slane %v2947, 4
        %v2950 = vor.u32 %v2949, %v2945
        %v2951 = vrot.slane %v2950, 4
        %v2953 = vshll.u32 %v2641, 16
        %v2955 = vrot.slane %v2953, 5
        %v2956 = vsel %vm1424, %v2951, %v2955
        %v2958 = vshrl.u32 %v2623, 16
        %v2960 = vrot.slane %v2958, 4
        %v2961 = vshll.u32 %v2623, 16
        %v2963 = vrot.slane %v2961, 5
        %v2964 = vor.u32 %v2960, %v2963
        %v2965 = vrot.slane %v2964, 4
        %v2967 = vshll.u32 %v2624, 16
        %v2969 = vrot.slane %v2967, 5
        %v2970 = vsel %vm1424, %v2965, %v2969
        %v2971 = vshrl.u32 %v2624, 16
        %v2973 = vrot.slane %v2971, 4
        %v2974 = vor.u32 %v2973, %v2969
        %v2975 = vrot.slane %v2974, 4
        %v2977 = vshll.u32 %v2642, 16
        %v2979 = vrot.slane %v2977, 5
        %v2980 = vsel %vm1424, %v2975, %v2979
        %v2982 = vshrl.u32 %v2625, 16
        %v2984 = vrot.slane %v2982, 4
        %v2985 = vshll.u32 %v2625, 16
        %v2987 = vrot.slane %v2985, 5
        %v2988 = vor.u32 %v2984, %v2987
        %v2989 = vrot.slane %v2988, 4
        %v2991 = vshll.u32 %v2626, 16
        %v2993 = vrot.slane %v2991, 5
        %v2994 = vsel %vm1424, %v2989, %v2993
        %v2995 = vshrl.u32 %v2626, 16
        %v2997 = vrot.slane %v2995, 4
        %v2998 = vor.u32 %v2997, %v2993
        %v2999 = vrot.slane %v2998, 4
        %v3001 = vshll.u32 %v2643, 16
        %v3003 = vrot.slane %v3001, 5
        %v3004 = vsel %vm1424, %v2999, %v3003
        %v3006 = vshrl.u32 %v2627, 16
        %v3008 = vrot.slane %v3006, 4
        %v3009 = vshll.u32 %v2627, 16
        %v3011 = vrot.slane %v3009, 5
        %v3012 = vor.u32 %v3008, %v3011
        %v3013 = vrot.slane %v3012, 4
        %v3015 = vshll.u32 %v2628, 16
        %v3017 = vrot.slane %v3015, 5
        %v3018 = vsel %vm1424, %v3013, %v3017
        %v3019 = vshrl.u32 %v2628, 16
        %v3021 = vrot.slane %v3019, 4
        %v3022 = vor.u32 %v3021, %v3017
        %v3023 = vrot.slane %v3022, 4
        %v3025 = vshll.u32 %v2644, 16
        %v3027 = vrot.slane %v3025, 5
        %v3028 = vsel %vm1424, %v3023, %v3027
        %v3029 = vld [vmem:[%s2596] sm:$0xe]
        %v3030 = vld [vmem:[%s2596 + $0xc] sm:$0xe]
        %v3031 = vld [vmem:[%s2596 + $0x18] sm:$0xe]
        %v3032 = vld [vmem:[%s2596 + $0x24] sm:$0xe]
        %v3033 = vld [vmem:[%s2596 + $0x30] sm:$0xe]
        %v3034 = vld [vmem:[%s2596 + $0x3c] sm:$0xe]
        %v3035 = vld [vmem:[%s2596 + $0x48] sm:$0xe]
        %v3036 = vld [vmem:[%s2596 + $0x54] sm:$0xe]
        %v3037 = vld [vmem:[%s2596 + $0x60] sm:$0xe]
        %v3038 = vld [vmem:[%s2596 + $0x6c] sm:$0xe]
        %v3039 = vld [vmem:[%s2596 + $0x78] sm:$0xe]
        %v3040 = vld [vmem:[%s2596 + $0x84] sm:$0xe]
        %v3041 = vld [vmem:[%s2596 + $0x90] sm:$0xe]
        %v3042 = vld [vmem:[%s2596 + $0x9c] sm:$0xe]
        %v3043 = vld [vmem:[%s2596 + $0xa8] sm:$0xe]
        %v3044 = vld [vmem:[%s2596 + $0xb4] sm:$0xe]
        %v3093 = vrot.slane %v3029, 5
        %v3094 = vrot.slane %v3093, 4
        %v3095 = vrot.slane %v2598, 5
        %v3096 = vsel %vm1875, %v3094, %v3095
        %v3097 = vrot.slane %v3095, 4
        %v3098 = vrot.slane %v2629, 5
        %v3099 = vsel %vm1875, %v3097, %v3098
        %v3100 = vrot.slane %v3030, 5
        %v3101 = vrot.slane %v3100, 4
        %v3102 = vrot.slane %v2600, 5
        %v3103 = vsel %vm1875, %v3101, %v3102
        %v3104 = vrot.slane %v3102, 4
        %v3105 = vrot.slane %v2630, 5
        %v3106 = vsel %vm1875, %v3104, %v3105
        %v3107 = vrot.slane %v3031, 5
        %v3108 = vrot.slane %v3107, 4
        %v3109 = vrot.slane %v2602, 5
        %v3110 = vsel %vm1875, %v3108, %v3109
        %v3111 = vrot.slane %v3109, 4
        %v3112 = vrot.slane %v2631, 5
        %v3113 = vsel %vm1875, %v3111, %v3112
        %v3114 = vrot.slane %v3032, 5
        %v3115 = vrot.slane %v3114, 4
        %v3116 = vrot.slane %v2604, 5
        %v3117 = vsel %vm1875, %v3115, %v3116
        %v3118 = vrot.slane %v3116, 4
        %v3119 = vrot.slane %v2632, 5
        %v3120 = vsel %vm1875, %v3118, %v3119
        %v3121 = vrot.slane %v3033, 5
        %v3122 = vrot.slane %v3121, 4
        %v3123 = vrot.slane %v2606, 5
        %v3124 = vsel %vm1875, %v3122, %v3123
        %v3125 = vrot.slane %v3123, 4
        %v3126 = vrot.slane %v2633, 5
        %v3127 = vsel %vm1875, %v3125, %v3126
        %v3128 = vrot.slane %v3034, 5
        %v3129 = vrot.slane %v3128, 4
        %v3130 = vrot.slane %v2608, 5
        %v3131 = vsel %vm1875, %v3129, %v3130
        %v3132 = vrot.slane %v3130, 4
        %v3133 = vrot.slane %v2634, 5
        %v3134 = vsel %vm1875, %v3132, %v3133
        %v3135 = vrot.slane %v3035, 5
        %v3136 = vrot.slane %v3135, 4
        %v3137 = vrot.slane %v2610, 5
        %v3138 = vsel %vm1875, %v3136, %v3137
        %v3139 = vrot.slane %v3137, 4
        %v3140 = vrot.slane %v2635, 5
        %v3141 = vsel %vm1875, %v3139, %v3140
        %v3142 = vrot.slane %v3036, 5
        %v3143 = vrot.slane %v3142, 4
        %v3144 = vrot.slane %v2612, 5
        %v3145 = vsel %vm1875, %v3143, %v3144
        %v3146 = vrot.slane %v3144, 4
        %v3147 = vrot.slane %v2636, 5
        %v3148 = vsel %vm1875, %v3146, %v3147
        %v3149 = vrot.slane %v3037, 5
        %v3150 = vrot.slane %v3149, 4
        %v3151 = vrot.slane %v2614, 5
        %v3152 = vsel %vm1875, %v3150, %v3151
        %v3153 = vrot.slane %v3151, 4
        %v3154 = vrot.slane %v2637, 5
        %v3155 = vsel %vm1875, %v3153, %v3154
        %v3156 = vrot.slane %v3038, 5
        %v3157 = vrot.slane %v3156, 4
        %v3158 = vrot.slane %v2616, 5
        %v3159 = vsel %vm1875, %v3157, %v3158
        %v3160 = vrot.slane %v3158, 4
        %v3161 = vrot.slane %v2638, 5
        %v3162 = vsel %vm1875, %v3160, %v3161
        %v3163 = vrot.slane %v3039, 5
        %v3164 = vrot.slane %v3163, 4
        %v3165 = vrot.slane %v2618, 5
        %v3166 = vsel %vm1875, %v3164, %v3165
        %v3167 = vrot.slane %v3165, 4
        %v3168 = vrot.slane %v2639, 5
        %v3169 = vsel %vm1875, %v3167, %v3168
        %v3170 = vrot.slane %v3040, 5
        %v3171 = vrot.slane %v3170, 4
        %v3172 = vrot.slane %v2620, 5
        %v3173 = vsel %vm1875, %v3171, %v3172
        %v3174 = vrot.slane %v3172, 4
        %v3175 = vrot.slane %v2640, 5
        %v3176 = vsel %vm1875, %v3174, %v3175
        %v3177 = vrot.slane %v3041, 5
        %v3178 = vrot.slane %v3177, 4
        %v3179 = vrot.slane %v2622, 5
        %v3180 = vsel %vm1875, %v3178, %v3179
        %v3181 = vrot.slane %v3179, 4
        %v3182 = vrot.slane %v2641, 5
        %v3183 = vsel %vm1875, %v3181, %v3182
        %v3184 = vrot.slane %v3042, 5
        %v3185 = vrot.slane %v3184, 4
        %v3186 = vrot.slane %v2624, 5
        %v3187 = vsel %vm1875, %v3185, %v3186
        %v3188 = vrot.slane %v3186, 4
        %v3189 = vrot.slane %v2642, 5
        %v3190 = vsel %vm1875, %v3188, %v3189
        %v3191 = vrot.slane %v3043, 5
        %v3192 = vrot.slane %v3191, 4
        %v3193 = vrot.slane %v2626, 5
        %v3194 = vsel %vm1875, %v3192, %v3193
        %v3195 = vrot.slane %v3193, 4
        %v3196 = vrot.slane %v2643, 5
        %v3197 = vsel %vm1875, %v3195, %v3196
        %v3198 = vrot.slane %v3044, 5
        %v3199 = vrot.slane %v3198, 4
        %v3200 = vrot.slane %v2628, 5
        %v3201 = vsel %vm1875, %v3199, %v3200
        %v3202 = vrot.slane %v3200, 4
        %v3203 = vrot.slane %v2644, 5
        %v3204 = vsel %vm1875, %v3202, %v3203
        %v3221 = vunpack.c.l.b16 %v1374
        %v3222 = vunpack.c.l.b16 %v1375
        %v3223 = vunpack.c.l.b16 %v1376
        %v3224 = vunpack.c.l.b16 %v1377
        %v3225 = vunpack.c.l.b16 %v1378
        %v3226 = vunpack.c.l.b16 %v1379
        %v3227 = vunpack.c.l.b16 %v1380
        %v3228 = vunpack.c.l.b16 %v1381
        %v3229 = vunpack.c.l.b16 %v1382
        %v3230 = vunpack.c.l.b16 %v1383
        %v3231 = vunpack.c.l.b16 %v1384
        %v3232 = vunpack.c.l.b16 %v1385
        %v3233 = vunpack.c.l.b16 %v1386
        %v3234 = vunpack.c.l.b16 %v1387
        %v3235 = vunpack.c.l.b16 %v1388
        %v3236 = vunpack.c.l.b16 %v1389
        %v3237 = vunpack.c.l.b16 %v1390
        %v3238 = vunpack.c.l.b16 %v1391
        %v3239 = vunpack.c.l.b16 %v1392
        %v3240 = vunpack.c.l.b16 %v1393
        %v3241 = vunpack.c.l.b16 %v1394
        %v3242 = vunpack.c.l.b16 %v1395
        %v3243 = vunpack.c.l.b16 %v1396
        %v3244 = vunpack.c.l.b16 %v1397
        %v3245 = vunpack.c.l.b16 %v1398
        %v3246 = vunpack.c.l.b16 %v1399
        %v3247 = vunpack.c.l.b16 %v1400
        %v3248 = vunpack.c.l.b16 %v1401
        %v3249 = vunpack.c.l.b16 %v1402
        %v3250 = vunpack.c.l.b16 %v1403
        %v3251 = vunpack.c.l.b16 %v1404
        %v3252 = vunpack.c.l.b16 %v1405
        %v3253 = vpack.c.b16 %v3222, %v3221
        %v3254 = vpack.c.b16 %v3224, %v3223
        %v3255 = vpack.c.b16 %v3226, %v3225
        %v3256 = vpack.c.b16 %v3228, %v3227
        %v3257 = vpack.c.b16 %v3230, %v3229
        %v3258 = vpack.c.b16 %v3232, %v3231
        %v3259 = vpack.c.b16 %v3234, %v3233
        %v3260 = vpack.c.b16 %v3236, %v3235
        %v3261 = vpack.c.b16 %v3238, %v3237
        %v3262 = vpack.c.b16 %v3240, %v3239
        %v3263 = vpack.c.b16 %v3242, %v3241
        %v3264 = vpack.c.b16 %v3244, %v3243
        %v3265 = vpack.c.b16 %v3246, %v3245
        %v3266 = vpack.c.b16 %v3248, %v3247
        %v3267 = vpack.c.b16 %v3250, %v3249
        %v3268 = vpack.c.b16 %v3252, %v3251
        %v3285 = vunpack.c.l.b16 %v1438
        %v3286 = vunpack.c.l.b16 %v1448
        %v3287 = vunpack.c.l.b16 %v1462
        %v3288 = vunpack.c.l.b16 %v1472
        %v3289 = vunpack.c.l.b16 %v1486
        %v3290 = vunpack.c.l.b16 %v1496
        %v3291 = vunpack.c.l.b16 %v1510
        %v3292 = vunpack.c.l.b16 %v1520
        %v3293 = vunpack.c.l.b16 %v1534
        %v3294 = vunpack.c.l.b16 %v1544
        %v3295 = vunpack.c.l.b16 %v1558
        %v3296 = vunpack.c.l.b16 %v1568
        %v3297 = vunpack.c.l.b16 %v1582
        %v3298 = vunpack.c.l.b16 %v1592
        %v3299 = vunpack.c.l.b16 %v1606
        %v3300 = vunpack.c.l.b16 %v1616
        %v3301 = vunpack.c.l.b16 %v1630
        %v3302 = vunpack.c.l.b16 %v1640
        %v3303 = vunpack.c.l.b16 %v1654
        %v3304 = vunpack.c.l.b16 %v1664
        %v3305 = vunpack.c.l.b16 %v1678
        %v3306 = vunpack.c.l.b16 %v1688
        %v3307 = vunpack.c.l.b16 %v1702
        %v3308 = vunpack.c.l.b16 %v1712
        %v3309 = vunpack.c.l.b16 %v1726
        %v3310 = vunpack.c.l.b16 %v1736
        %v3311 = vunpack.c.l.b16 %v1750
        %v3312 = vunpack.c.l.b16 %v1760
        %v3313 = vunpack.c.l.b16 %v1774
        %v3314 = vunpack.c.l.b16 %v1784
        %v3315 = vunpack.c.l.b16 %v1798
        %v3316 = vunpack.c.l.b16 %v1808
        %v3317 = vpack.c.b16 %v3286, %v3285
        %v3318 = vpack.c.b16 %v3288, %v3287
        %v3319 = vpack.c.b16 %v3290, %v3289
        %v3320 = vpack.c.b16 %v3292, %v3291
        %v3321 = vpack.c.b16 %v3294, %v3293
        %v3322 = vpack.c.b16 %v3296, %v3295
        %v3323 = vpack.c.b16 %v3298, %v3297
        %v3324 = vpack.c.b16 %v3300, %v3299
        %v3325 = vpack.c.b16 %v3302, %v3301
        %v3326 = vpack.c.b16 %v3304, %v3303
        %v3327 = vpack.c.b16 %v3306, %v3305
        %v3328 = vpack.c.b16 %v3308, %v3307
        %v3329 = vpack.c.b16 %v3310, %v3309
        %v3330 = vpack.c.b16 %v3312, %v3311
        %v3331 = vpack.c.b16 %v3314, %v3313
        %v3332 = vpack.c.b16 %v3316, %v3315
        %v3349 = vunpack.c.l.b16 %v1879
        %v3350 = vunpack.c.l.b16 %v1882
        %v3351 = vunpack.c.l.b16 %v1886
        %v3352 = vunpack.c.l.b16 %v1889
        %v3353 = vunpack.c.l.b16 %v1893
        %v3354 = vunpack.c.l.b16 %v1896
        %v3355 = vunpack.c.l.b16 %v1900
        %v3356 = vunpack.c.l.b16 %v1903
        %v3357 = vunpack.c.l.b16 %v1907
        %v3358 = vunpack.c.l.b16 %v1910
        %v3359 = vunpack.c.l.b16 %v1914
        %v3360 = vunpack.c.l.b16 %v1917
        %v3361 = vunpack.c.l.b16 %v1921
        %v3362 = vunpack.c.l.b16 %v1924
        %v3363 = vunpack.c.l.b16 %v1928
        %v3364 = vunpack.c.l.b16 %v1931
        %v3365 = vunpack.c.l.b16 %v1935
        %v3366 = vunpack.c.l.b16 %v1938
        %v3367 = vunpack.c.l.b16 %v1942
        %v3368 = vunpack.c.l.b16 %v1945
        %v3369 = vunpack.c.l.b16 %v1949
        %v3370 = vunpack.c.l.b16 %v1952
        %v3371 = vunpack.c.l.b16 %v1956
        %v3372 = vunpack.c.l.b16 %v1959
        %v3373 = vunpack.c.l.b16 %v1963
        %v3374 = vunpack.c.l.b16 %v1966
        %v3375 = vunpack.c.l.b16 %v1970
        %v3376 = vunpack.c.l.b16 %v1973
        %v3377 = vunpack.c.l.b16 %v1977
        %v3378 = vunpack.c.l.b16 %v1980
        %v3379 = vunpack.c.l.b16 %v1984
        %v3380 = vunpack.c.l.b16 %v1987
        %v3381 = vpack.c.b16 %v3350, %v3349
        %v3382 = vpack.c.b16 %v3352, %v3351
        %v3383 = vpack.c.b16 %v3354, %v3353
        %v3384 = vpack.c.b16 %v3356, %v3355
        %v3385 = vpack.c.b16 %v3358, %v3357
        %v3386 = vpack.c.b16 %v3360, %v3359
        %v3387 = vpack.c.b16 %v3362, %v3361
        %v3388 = vpack.c.b16 %v3364, %v3363
        %v3389 = vpack.c.b16 %v3366, %v3365
        %v3390 = vpack.c.b16 %v3368, %v3367
        %v3391 = vpack.c.b16 %v3370, %v3369
        %v3392 = vpack.c.b16 %v3372, %v3371
        %v3393 = vpack.c.b16 %v3374, %v3373
        %v3394 = vpack.c.b16 %v3376, %v3375
        %v3395 = vpack.c.b16 %v3378, %v3377
        %v3396 = vpack.c.b16 %v3380, %v3379
        %v3429 = vunpack.c.l.b16 %v1988
        %v3430 = vunpack.c.l.b16 %v1989
        %v3431 = vunpack.c.l.b16 %v1990
        %v3432 = vunpack.c.l.b16 %v1991
        %v3433 = vunpack.c.l.b16 %v1992
        %v3434 = vunpack.c.l.b16 %v1993
        %v3435 = vunpack.c.l.b16 %v1994
        %v3436 = vunpack.c.l.b16 %v1995
        %v3437 = vunpack.c.l.b16 %v1996
        %v3438 = vunpack.c.l.b16 %v1997
        %v3439 = vunpack.c.l.b16 %v1998
        %v3440 = vunpack.c.l.b16 %v1999
        %v3441 = vunpack.c.l.b16 %v2000
        %v3442 = vunpack.c.l.b16 %v2001
        %v3443 = vunpack.c.l.b16 %v2002
        %v3444 = vunpack.c.l.b16 %v2003
        %v3445 = vunpack.c.l.b16 %v2004
        %v3446 = vunpack.c.l.b16 %v2005
        %v3447 = vunpack.c.l.b16 %v2006
        %v3448 = vunpack.c.l.b16 %v2007
        %v3449 = vunpack.c.l.b16 %v2008
        %v3450 = vunpack.c.l.b16 %v2009
        %v3451 = vunpack.c.l.b16 %v2010
        %v3452 = vunpack.c.l.b16 %v2011
        %v3453 = vunpack.c.l.b16 %v2012
        %v3454 = vunpack.c.l.b16 %v2013
        %v3455 = vunpack.c.l.b16 %v2014
        %v3456 = vunpack.c.l.b16 %v2015
        %v3457 = vunpack.c.l.b16 %v2016
        %v3458 = vunpack.c.l.b16 %v2017
        %v3459 = vunpack.c.l.b16 %v2018
        %v3460 = vunpack.c.l.b16 %v2019
        %v3461 = vpack.c.b16 %v3430, %v3429
        %v3462 = vpack.c.b16 %v3432, %v3431
        %v3463 = vpack.c.b16 %v3434, %v3433
        %v3464 = vpack.c.b16 %v3436, %v3435
        %v3465 = vpack.c.b16 %v3438, %v3437
        %v3466 = vpack.c.b16 %v3440, %v3439
        %v3467 = vpack.c.b16 %v3442, %v3441
        %v3468 = vpack.c.b16 %v3444, %v3443
        %v3469 = vpack.c.b16 %v3446, %v3445
        %v3470 = vpack.c.b16 %v3448, %v3447
        %v3471 = vpack.c.b16 %v3450, %v3449
        %v3472 = vpack.c.b16 %v3452, %v3451
        %v3473 = vpack.c.b16 %v3454, %v3453
        %v3474 = vpack.c.b16 %v3456, %v3455
        %v3475 = vpack.c.b16 %v3458, %v3457
        %v3476 = vpack.c.b16 %v3460, %v3459
        %v3493 = vunpack.c.l.b16 %v2049
        %v3494 = vunpack.c.l.b16 %v2059
        %v3495 = vunpack.c.l.b16 %v2073
        %v3496 = vunpack.c.l.b16 %v2083
        %v3497 = vunpack.c.l.b16 %v2097
        %v3498 = vunpack.c.l.b16 %v2107
        %v3499 = vunpack.c.l.b16 %v2121
        %v3500 = vunpack.c.l.b16 %v2131
        %v3501 = vunpack.c.l.b16 %v2145
        %v3502 = vunpack.c.l.b16 %v2155
        %v3503 = vunpack.c.l.b16 %v2169
        %v3504 = vunpack.c.l.b16 %v2179
        %v3505 = vunpack.c.l.b16 %v2193
        %v3506 = vunpack.c.l.b16 %v2203
        %v3507 = vunpack.c.l.b16 %v2217
        %v3508 = vunpack.c.l.b16 %v2227
        %v3509 = vunpack.c.l.b16 %v2241
        %v3510 = vunpack.c.l.b16 %v2251
        %v3511 = vunpack.c.l.b16 %v2265
        %v3512 = vunpack.c.l.b16 %v2275
        %v3513 = vunpack.c.l.b16 %v2289
        %v3514 = vunpack.c.l.b16 %v2299
        %v3515 = vunpack.c.l.b16 %v2313
        %v3516 = vunpack.c.l.b16 %v2323
        %v3517 = vunpack.c.l.b16 %v2337
        %v3518 = vunpack.c.l.b16 %v2347
        %v3519 = vunpack.c.l.b16 %v2361
        %v3520 = vunpack.c.l.b16 %v2371
        %v3521 = vunpack.c.l.b16 %v2385
        %v3522 = vunpack.c.l.b16 %v2395
        %v3523 = vunpack.c.l.b16 %v2409
        %v3524 = vunpack.c.l.b16 %v2419
        %v3525 = vpack.c.b16 %v3494, %v3493
        %v3526 = vpack.c.b16 %v3496, %v3495
        %v3527 = vpack.c.b16 %v3498, %v3497
        %v3528 = vpack.c.b16 %v3500, %v3499
        %v3529 = vpack.c.b16 %v3502, %v3501
        %v3530 = vpack.c.b16 %v3504, %v3503
        %v3531 = vpack.c.b16 %v3506, %v3505
        %v3532 = vpack.c.b16 %v3508, %v3507
        %v3533 = vpack.c.b16 %v3510, %v3509
        %v3534 = vpack.c.b16 %v3512, %v3511
        %v3535 = vpack.c.b16 %v3514, %v3513
        %v3536 = vpack.c.b16 %v3516, %v3515
        %v3537 = vpack.c.b16 %v3518, %v3517
        %v3538 = vpack.c.b16 %v3520, %v3519
        %v3539 = vpack.c.b16 %v3522, %v3521
        %v3540 = vpack.c.b16 %v3524, %v3523
        %v3557 = vunpack.c.l.b16 %v2487
        %v3558 = vunpack.c.l.b16 %v2490
        %v3559 = vunpack.c.l.b16 %v2494
        %v3560 = vunpack.c.l.b16 %v2497
        %v3561 = vunpack.c.l.b16 %v2501
        %v3562 = vunpack.c.l.b16 %v2504
        %v3563 = vunpack.c.l.b16 %v2508
        %v3564 = vunpack.c.l.b16 %v2511
        %v3565 = vunpack.c.l.b16 %v2515
        %v3566 = vunpack.c.l.b16 %v2518
        %v3567 = vunpack.c.l.b16 %v2522
        %v3568 = vunpack.c.l.b16 %v2525
        %v3569 = vunpack.c.l.b16 %v2529
        %v3570 = vunpack.c.l.b16 %v2532
        %v3571 = vunpack.c.l.b16 %v2536
        %v3572 = vunpack.c.l.b16 %v2539
        %v3573 = vunpack.c.l.b16 %v2543
        %v3574 = vunpack.c.l.b16 %v2546
        %v3575 = vunpack.c.l.b16 %v2550
        %v3576 = vunpack.c.l.b16 %v2553
        %v3577 = vunpack.c.l.b16 %v2557
        %v3578 = vunpack.c.l.b16 %v2560
        %v3579 = vunpack.c.l.b16 %v2564
        %v3580 = vunpack.c.l.b16 %v2567
        %v3581 = vunpack.c.l.b16 %v2571
        %v3582 = vunpack.c.l.b16 %v2574
        %v3583 = vunpack.c.l.b16 %v2578
        %v3584 = vunpack.c.l.b16 %v2581
        %v3585 = vunpack.c.l.b16 %v2585
        %v3586 = vunpack.c.l.b16 %v2588
        %v3587 = vunpack.c.l.b16 %v2592
        %v3588 = vunpack.c.l.b16 %v2595
        %v3589 = vpack.c.b16 %v3558, %v3557
        %v3590 = vpack.c.b16 %v3560, %v3559
        %v3591 = vpack.c.b16 %v3562, %v3561
        %v3592 = vpack.c.b16 %v3564, %v3563
        %v3593 = vpack.c.b16 %v3566, %v3565
        %v3594 = vpack.c.b16 %v3568, %v3567
        %v3595 = vpack.c.b16 %v3570, %v3569
        %v3596 = vpack.c.b16 %v3572, %v3571
        %v3597 = vpack.c.b16 %v3574, %v3573
        %v3598 = vpack.c.b16 %v3576, %v3575
        %v3599 = vpack.c.b16 %v3578, %v3577
        %v3600 = vpack.c.b16 %v3580, %v3579
        %v3601 = vpack.c.b16 %v3582, %v3581
        %v3602 = vpack.c.b16 %v3584, %v3583
        %v3603 = vpack.c.b16 %v3586, %v3585
        %v3604 = vpack.c.b16 %v3588, %v3587
        %v3637 = vunpack.c.l.b16 %v2597
        %v3638 = vunpack.c.l.b16 %v2598
        %v3639 = vunpack.c.l.b16 %v2599
        %v3640 = vunpack.c.l.b16 %v2600
        %v3641 = vunpack.c.l.b16 %v2601
        %v3642 = vunpack.c.l.b16 %v2602
        %v3643 = vunpack.c.l.b16 %v2603
        %v3644 = vunpack.c.l.b16 %v2604
        %v3645 = vunpack.c.l.b16 %v2605
        %v3646 = vunpack.c.l.b16 %v2606
        %v3647 = vunpack.c.l.b16 %v2607
        %v3648 = vunpack.c.l.b16 %v2608
        %v3649 = vunpack.c.l.b16 %v2609
        %v3650 = vunpack.c.l.b16 %v2610
        %v3651 = vunpack.c.l.b16 %v2611
        %v3652 = vunpack.c.l.b16 %v2612
        %v3653 = vunpack.c.l.b16 %v2613
        %v3654 = vunpack.c.l.b16 %v2614
        %v3655 = vunpack.c.l.b16 %v2615
        %v3656 = vunpack.c.l.b16 %v2616
        %v3657 = vunpack.c.l.b16 %v2617
        %v3658 = vunpack.c.l.b16 %v2618
        %v3659 = vunpack.c.l.b16 %v2619
        %v3660 = vunpack.c.l.b16 %v2620
        %v3661 = vunpack.c.l.b16 %v2621
        %v3662 = vunpack.c.l.b16 %v2622
        %v3663 = vunpack.c.l.b16 %v2623
        %v3664 = vunpack.c.l.b16 %v2624
        %v3665 = vunpack.c.l.b16 %v2625
        %v3666 = vunpack.c.l.b16 %v2626
        %v3667 = vunpack.c.l.b16 %v2627
        %v3668 = vunpack.c.l.b16 %v2628
        %v3669 = vpack.c.b16 %v3638, %v3637
        %v3670 = vpack.c.b16 %v3640, %v3639
        %v3671 = vpack.c.b16 %v3642, %v3641
        %v3672 = vpack.c.b16 %v3644, %v3643
        %v3673 = vpack.c.b16 %v3646, %v3645
        %v3674 = vpack.c.b16 %v3648, %v3647
        %v3675 = vpack.c.b16 %v3650, %v3649
        %v3676 = vpack.c.b16 %v3652, %v3651
        %v3677 = vpack.c.b16 %v3654, %v3653
        %v3678 = vpack.c.b16 %v3656, %v3655
        %v3679 = vpack.c.b16 %v3658, %v3657
        %v3680 = vpack.c.b16 %v3660, %v3659
        %v3681 = vpack.c.b16 %v3662, %v3661
        %v3682 = vpack.c.b16 %v3664, %v3663
        %v3683 = vpack.c.b16 %v3666, %v3665
        %v3684 = vpack.c.b16 %v3668, %v3667
        %v3701 = vunpack.c.l.b16 %v2658
        %v3702 = vunpack.c.l.b16 %v2668
        %v3703 = vunpack.c.l.b16 %v2682
        %v3704 = vunpack.c.l.b16 %v2692
        %v3705 = vunpack.c.l.b16 %v2706
        %v3706 = vunpack.c.l.b16 %v2716
        %v3707 = vunpack.c.l.b16 %v2730
        %v3708 = vunpack.c.l.b16 %v2740
        %v3709 = vunpack.c.l.b16 %v2754
        %v3710 = vunpack.c.l.b16 %v2764
        %v3711 = vunpack.c.l.b16 %v2778
        %v3712 = vunpack.c.l.b16 %v2788
        %v3713 = vunpack.c.l.b16 %v2802
        %v3714 = vunpack.c.l.b16 %v2812
        %v3715 = vunpack.c.l.b16 %v2826
        %v3716 = vunpack.c.l.b16 %v2836
        %v3717 = vunpack.c.l.b16 %v2850
        %v3718 = vunpack.c.l.b16 %v2860
        %v3719 = vunpack.c.l.b16 %v2874
        %v3720 = vunpack.c.l.b16 %v2884
        %v3721 = vunpack.c.l.b16 %v2898
        %v3722 = vunpack.c.l.b16 %v2908
        %v3723 = vunpack.c.l.b16 %v2922
        %v3724 = vunpack.c.l.b16 %v2932
        %v3725 = vunpack.c.l.b16 %v2946
        %v3726 = vunpack.c.l.b16 %v2956
        %v3727 = vunpack.c.l.b16 %v2970
        %v3728 = vunpack.c.l.b16 %v2980
        %v3729 = vunpack.c.l.b16 %v2994
        %v3730 = vunpack.c.l.b16 %v3004
        %v3731 = vunpack.c.l.b16 %v3018
        %v3732 = vunpack.c.l.b16 %v3028
        %v3733 = vpack.c.b16 %v3702, %v3701
        %v3734 = vpack.c.b16 %v3704, %v3703
        %v3735 = vpack.c.b16 %v3706, %v3705
        %v3736 = vpack.c.b16 %v3708, %v3707
        %v3737 = vpack.c.b16 %v3710, %v3709
        %v3738 = vpack.c.b16 %v3712, %v3711
        %v3739 = vpack.c.b16 %v3714, %v3713
        %v3740 = vpack.c.b16 %v3716, %v3715
        %v3741 = vpack.c.b16 %v3718, %v3717
        %v3742 = vpack.c.b16 %v3720, %v3719
        %v3743 = vpack.c.b16 %v3722, %v3721
        %v3744 = vpack.c.b16 %v3724, %v3723
        %v3745 = vpack.c.b16 %v3726, %v3725
        %v3746 = vpack.c.b16 %v3728, %v3727
        %v3747 = vpack.c.b16 %v3730, %v3729
        %v3748 = vpack.c.b16 %v3732, %v3731
        %v3765 = vunpack.c.l.b16 %v3096
        %v3766 = vunpack.c.l.b16 %v3099
        %v3767 = vunpack.c.l.b16 %v3103
        %v3768 = vunpack.c.l.b16 %v3106
        %v3769 = vunpack.c.l.b16 %v3110
        %v3770 = vunpack.c.l.b16 %v3113
        %v3771 = vunpack.c.l.b16 %v3117
        %v3772 = vunpack.c.l.b16 %v3120
        %v3773 = vunpack.c.l.b16 %v3124
        %v3774 = vunpack.c.l.b16 %v3127
        %v3775 = vunpack.c.l.b16 %v3131
        %v3776 = vunpack.c.l.b16 %v3134
        %v3777 = vunpack.c.l.b16 %v3138
        %v3778 = vunpack.c.l.b16 %v3141
        %v3779 = vunpack.c.l.b16 %v3145
        %v3780 = vunpack.c.l.b16 %v3148
        %v3781 = vunpack.c.l.b16 %v3152
        %v3782 = vunpack.c.l.b16 %v3155
        %v3783 = vunpack.c.l.b16 %v3159
        %v3784 = vunpack.c.l.b16 %v3162
        %v3785 = vunpack.c.l.b16 %v3166
        %v3786 = vunpack.c.l.b16 %v3169
        %v3787 = vunpack.c.l.b16 %v3173
        %v3788 = vunpack.c.l.b16 %v3176
        %v3789 = vunpack.c.l.b16 %v3180
        %v3790 = vunpack.c.l.b16 %v3183
        %v3791 = vunpack.c.l.b16 %v3187
        %v3792 = vunpack.c.l.b16 %v3190
        %v3793 = vunpack.c.l.b16 %v3194
        %v3794 = vunpack.c.l.b16 %v3197
        %v3795 = vunpack.c.l.b16 %v3201
        %v3796 = vunpack.c.l.b16 %v3204
        %v3797 = vpack.c.b16 %v3766, %v3765
        %v3798 = vpack.c.b16 %v3768, %v3767
        %v3799 = vpack.c.b16 %v3770, %v3769
        %v3800 = vpack.c.b16 %v3772, %v3771
        %v3801 = vpack.c.b16 %v3774, %v3773
        %v3802 = vpack.c.b16 %v3776, %v3775
        %v3803 = vpack.c.b16 %v3778, %v3777
        %v3804 = vpack.c.b16 %v3780, %v3779
        %v3805 = vpack.c.b16 %v3782, %v3781
        %v3806 = vpack.c.b16 %v3784, %v3783
        %v3807 = vpack.c.b16 %v3786, %v3785
        %v3808 = vpack.c.b16 %v3788, %v3787
        %v3809 = vpack.c.b16 %v3790, %v3789
        %v3810 = vpack.c.b16 %v3792, %v3791
        %v3811 = vpack.c.b16 %v3794, %v3793
        %v3812 = vpack.c.b16 %v3796, %v3795
        %v3829 = vld [vmem:[#allocation8] sm:$0xf]
        %v3830 = vld [vmem:[#allocation8 + $0x4] sm:$0xf]
        %v3831 = vld [vmem:[#allocation8 + $0x8] sm:$0xf]
        %v3832 = vld [vmem:[#allocation8 + $0xc] sm:$0xf]
        %v3833 = vld [vmem:[#allocation8 + $0x10] sm:$0xf]
        %v3834 = vld [vmem:[#allocation8 + $0x14] sm:$0xf]
        %v3835 = vld [vmem:[#allocation8 + $0x18] sm:$0xf]
        %v3836 = vld [vmem:[#allocation8 + $0x1c] sm:$0xf]
        %v3837 = vld [vmem:[#allocation8 + $0x20] sm:$0xf]
        %v3838 = vld [vmem:[#allocation8 + $0x24] sm:$0xf]
        %v3839 = vld [vmem:[#allocation8 + $0x28] sm:$0xf]
        %v3840 = vld [vmem:[#allocation8 + $0x2c] sm:$0xf]
        %v3841 = vld [vmem:[#allocation8 + $0x30] sm:$0xf]
        %v3842 = vld [vmem:[#allocation8 + $0x34] sm:$0xf]
        %v3843 = vld [vmem:[#allocation8 + $0x38] sm:$0xf]
        %v3844 = vld [vmem:[#allocation8 + $0x3c] sm:$0xf]
        %v3845 = vld [vmem:[#allocation8 + $0x40] sm:$0xf]
        %v3846 = vld [vmem:[#allocation8 + $0x44] sm:$0xf]
        %v3847 = vld [vmem:[#allocation8 + $0x48] sm:$0xf]
        %v3848 = vld [vmem:[#allocation8 + $0x4c] sm:$0xf]
        %v3849 = vld [vmem:[#allocation8 + $0x50] sm:$0xf]
        %v3850 = vld [vmem:[#allocation8 + $0x54] sm:$0xf]
        %v3851 = vld [vmem:[#allocation8 + $0x58] sm:$0xf]
        %v3852 = vld [vmem:[#allocation8 + $0x5c] sm:$0xf]
        %v3853 = vld [vmem:[#allocation8 + $0x60] sm:$0xf]
        %v3854 = vld [vmem:[#allocation8 + $0x64] sm:$0xf]
        %v3855 = vld [vmem:[#allocation8 + $0x68] sm:$0xf]
        %v3856 = vld [vmem:[#allocation8 + $0x6c] sm:$0xf]
        %v3857 = vld [vmem:[#allocation8 + $0x70] sm:$0xf]
        %v3858 = vld [vmem:[#allocation8 + $0x74] sm:$0xf]
        %v3859 = vld [vmem:[#allocation8 + $0x78] sm:$0xf]
        %v3860 = vld [vmem:[#allocation8 + $0x7c] sm:$0xf]
        %v3861 = vld [vmem:[#allocation8 + $0x80] sm:$0xf]
        %v3862 = vld [vmem:[#allocation8 + $0x84] sm:$0xf]
        %v3863 = vld [vmem:[#allocation8 + $0x88] sm:$0xf]
        %v3864 = vld [vmem:[#allocation8 + $0x8c] sm:$0xf]
        %v3865 = vld [vmem:[#allocation8 + $0x90] sm:$0xf]
        %v3866 = vld [vmem:[#allocation8 + $0x94] sm:$0xf]
        %v3867 = vld [vmem:[#allocation8 + $0x98] sm:$0xf]
        %v3868 = vld [vmem:[#allocation8 + $0x9c] sm:$0xf]
        %v3869 = vld [vmem:[#allocation8 + $0xa0] sm:$0xf]
        %v3870 = vld [vmem:[#allocation8 + $0xa4] sm:$0xf]
        %v3871 = vld [vmem:[#allocation8 + $0xa8] sm:$0xf]
        %v3872 = vld [vmem:[#allocation8 + $0xac] sm:$0xf]
        %v3873 = vld [vmem:[#allocation8 + $0xb0] sm:$0xf]
        %v3874 = vld [vmem:[#allocation8 + $0xb4] sm:$0xf]
        %v3875 = vld [vmem:[#allocation8 + $0xb8] sm:$0xf]
        %v3876 = vld [vmem:[#allocation8 + $0xbc] sm:$0xf]
        %v3877 = vld [vmem:[#allocation8 + $0xc0] sm:$0xf]
        %v3878 = vld [vmem:[#allocation8 + $0xc4] sm:$0xf]
        %v3879 = vld [vmem:[#allocation8 + $0xc8] sm:$0xf]
        %v3880 = vld [vmem:[#allocation8 + $0xcc] sm:$0xf]
        %v3881 = vld [vmem:[#allocation8 + $0xd0] sm:$0xf]
        %v3882 = vld [vmem:[#allocation8 + $0xd4] sm:$0xf]
        %v3883 = vld [vmem:[#allocation8 + $0xd8] sm:$0xf]
        %v3884 = vld [vmem:[#allocation8 + $0xdc] sm:$0xf]
        %v3885 = vld [vmem:[#allocation8 + $0xe0] sm:$0xf]
        %v3886 = vld [vmem:[#allocation8 + $0xe4] sm:$0xf]
        %v3887 = vld [vmem:[#allocation8 + $0xe8] sm:$0xf]
        %v3888 = vld [vmem:[#allocation8 + $0xec] sm:$0xf]
        %v3889 = vld [vmem:[#allocation8 + $0xf0] sm:$0xf]
        %v3890 = vld [vmem:[#allocation8 + $0xf4] sm:$0xf]
        %v3891 = vld [vmem:[#allocation8 + $0xf8] sm:$0xf]
        %v3892 = vld [vmem:[#allocation8 + $0xfc] sm:$0xf]
        %v3893 = vld [vmem:[#allocation8 + $0x100] sm:$0xf]
        %v3894 = vld [vmem:[#allocation8 + $0x104] sm:$0xf]
        %v3895 = vld [vmem:[#allocation8 + $0x108] sm:$0xf]
        %v3896 = vld [vmem:[#allocation8 + $0x10c] sm:$0xf]
        %v3897 = vld [vmem:[#allocation8 + $0x110] sm:$0xf]
        %v3898 = vld [vmem:[#allocation8 + $0x114] sm:$0xf]
        %v3899 = vld [vmem:[#allocation8 + $0x118] sm:$0xf]
        %v3900 = vld [vmem:[#allocation8 + $0x11c] sm:$0xf]
        %v3901 = vld [vmem:[#allocation8 + $0x120] sm:$0xf]
        %v3902 = vld [vmem:[#allocation8 + $0x124] sm:$0xf]
        %v3903 = vld [vmem:[#allocation8 + $0x128] sm:$0xf]
        %v3904 = vld [vmem:[#allocation8 + $0x12c] sm:$0xf]
        %v3905 = vld [vmem:[#allocation8 + $0x130] sm:$0xf]
        %v3906 = vld [vmem:[#allocation8 + $0x134] sm:$0xf]
        %v3907 = vld [vmem:[#allocation8 + $0x138] sm:$0xf]
        %v3908 = vld [vmem:[#allocation8 + $0x13c] sm:$0xf]
        %v3909 = vld [vmem:[#allocation8 + $0x140] sm:$0xf]
        %v3910 = vld [vmem:[#allocation8 + $0x144] sm:$0xf]
        %v3911 = vld [vmem:[#allocation8 + $0x148] sm:$0xf]
        %v3912 = vld [vmem:[#allocation8 + $0x14c] sm:$0xf]
        %v3913 = vld [vmem:[#allocation8 + $0x150] sm:$0xf]
        %v3914 = vld [vmem:[#allocation8 + $0x154] sm:$0xf]
        %v3915 = vld [vmem:[#allocation8 + $0x158] sm:$0xf]
        %v3916 = vld [vmem:[#allocation8 + $0x15c] sm:$0xf]
        %v3917 = vld [vmem:[#allocation8 + $0x160] sm:$0xf]
        %v3918 = vld [vmem:[#allocation8 + $0x164] sm:$0xf]
        %v3919 = vld [vmem:[#allocation8 + $0x168] sm:$0xf]
        %v3920 = vld [vmem:[#allocation8 + $0x16c] sm:$0xf]
        %v3921 = vld [vmem:[#allocation8 + $0x170] sm:$0xf]
        %v3922 = vld [vmem:[#allocation8 + $0x174] sm:$0xf]
        %v3923 = vld [vmem:[#allocation8 + $0x178] sm:$0xf]
        %v3924 = vld [vmem:[#allocation8 + $0x17c] sm:$0xf]
        %v3925 = vld [vmem:[#allocation8 + $0x180] sm:$0xf]
        %v3926 = vld [vmem:[#allocation8 + $0x184] sm:$0xf]
        %v3927 = vld [vmem:[#allocation8 + $0x188] sm:$0xf]
        %v3928 = vld [vmem:[#allocation8 + $0x18c] sm:$0xf]
        %v3929 = vld [vmem:[#allocation8 + $0x190] sm:$0xf]
        %v3930 = vld [vmem:[#allocation8 + $0x194] sm:$0xf]
        %v3931 = vld [vmem:[#allocation8 + $0x198] sm:$0xf]
        %v3932 = vld [vmem:[#allocation8 + $0x19c] sm:$0xf]
        %v3933 = vld [vmem:[#allocation8 + $0x1a0] sm:$0xf]
        %v3934 = vld [vmem:[#allocation8 + $0x1a4] sm:$0xf]
        %v3935 = vld [vmem:[#allocation8 + $0x1a8] sm:$0xf]
        %v3936 = vld [vmem:[#allocation8 + $0x1ac] sm:$0xf]
        %v3937 = vld [vmem:[#allocation8 + $0x1b0] sm:$0xf]
        %v3938 = vld [vmem:[#allocation8 + $0x1b4] sm:$0xf]
        %v3939 = vld [vmem:[#allocation8 + $0x1b8] sm:$0xf]
        %v3940 = vld [vmem:[#allocation8 + $0x1bc] sm:$0xf]
        %v3941 = vld [vmem:[#allocation8 + $0x1c0] sm:$0xf]
        %v3942 = vld [vmem:[#allocation8 + $0x1c4] sm:$0xf]
        %v3943 = vld [vmem:[#allocation8 + $0x1c8] sm:$0xf]
        %v3944 = vld [vmem:[#allocation8 + $0x1cc] sm:$0xf]
        %v3945 = vld [vmem:[#allocation8 + $0x1d0] sm:$0xf]
        %v3946 = vld [vmem:[#allocation8 + $0x1d4] sm:$0xf]
        %v3947 = vld [vmem:[#allocation8 + $0x1d8] sm:$0xf]
        %v3948 = vld [vmem:[#allocation8 + $0x1dc] sm:$0xf]
        %v3949 = vld [vmem:[#allocation8 + $0x1e0] sm:$0xf]
        %v3950 = vld [vmem:[#allocation8 + $0x1e4] sm:$0xf]
        %v3951 = vld [vmem:[#allocation8 + $0x1e8] sm:$0xf]
        %v3952 = vld [vmem:[#allocation8 + $0x1ec] sm:$0xf]
        %v3953 = vld [vmem:[#allocation8 + $0x1f0] sm:$0xf]
        %v3954 = vld [vmem:[#allocation8 + $0x1f4] sm:$0xf]
        %v3955 = vld [vmem:[#allocation8 + $0x1f8] sm:$0xf]
        %v3956 = vld [vmem:[#allocation8 + $0x1fc] sm:$0xf]
        %v3957 = vld [vmem:[#allocation8 + $0x200] sm:$0xf]
        %v3958 = vld [vmem:[#allocation8 + $0x204] sm:$0xf]
        %v3959 = vld [vmem:[#allocation8 + $0x208] sm:$0xf]
        %v3960 = vld [vmem:[#allocation8 + $0x20c] sm:$0xf]
        %v3961 = vld [vmem:[#allocation8 + $0x210] sm:$0xf]
        %v3962 = vld [vmem:[#allocation8 + $0x214] sm:$0xf]
        %v3963 = vld [vmem:[#allocation8 + $0x218] sm:$0xf]
        %v3964 = vld [vmem:[#allocation8 + $0x21c] sm:$0xf]
        %v3965 = vld [vmem:[#allocation8 + $0x220] sm:$0xf]
        %v3966 = vld [vmem:[#allocation8 + $0x224] sm:$0xf]
        %v3967 = vld [vmem:[#allocation8 + $0x228] sm:$0xf]
        %v3968 = vld [vmem:[#allocation8 + $0x22c] sm:$0xf]
        %v3969 = vld [vmem:[#allocation8 + $0x230] sm:$0xf]
        %v3970 = vld [vmem:[#allocation8 + $0x234] sm:$0xf]
        %v3971 = vld [vmem:[#allocation8 + $0x238] sm:$0xf]
        %v3972 = vld [vmem:[#allocation8 + $0x23c] sm:$0xf]
        %v3973 = vld [vmem:[%s4] sm:$0x1]
        %v3975 = vlaneseq
        %v3976 = vshrl.u32 %v3975, 7
        %v3977 = vsub.s32 0, %v3976
        %v3978 = vrot.slane %v3973, %v3977
        %v4124 = vunpack.c.l.b16 %v3829
        %v4125 = vunpack.c.l.b16 %v3830
        %v4126 = vunpack.c.l.b16 %v3831
        %v4127 = vunpack.c.l.b16 %v3832
        %v4128 = vunpack.c.l.b16 %v3833
        %v4129 = vunpack.c.l.b16 %v3834
        %v4130 = vunpack.c.l.b16 %v3835
        %v4131 = vunpack.c.l.b16 %v3836
        %v4132 = vunpack.c.l.b16 %v3837
        %v4133 = vunpack.c.l.b16 %v3838
        %v4134 = vunpack.c.l.b16 %v3839
        %v4135 = vunpack.c.l.b16 %v3840
        %v4136 = vunpack.c.l.b16 %v3841
        %v4137 = vunpack.c.l.b16 %v3842
        %v4138 = vunpack.c.l.b16 %v3843
        %v4139 = vunpack.c.l.b16 %v3844
        %v4140 = vunpack.c.l.b16 %v3845
        %v4141 = vunpack.c.l.b16 %v3846
        %v4142 = vunpack.c.l.b16 %v3847
        %v4143 = vunpack.c.l.b16 %v3848
        %v4144 = vunpack.c.l.b16 %v3849
        %v4145 = vunpack.c.l.b16 %v3850
        %v4146 = vunpack.c.l.b16 %v3851
        %v4147 = vunpack.c.l.b16 %v3852
        %v4148 = vunpack.c.l.b16 %v3853
        %v4149 = vunpack.c.l.b16 %v3854
        %v4150 = vunpack.c.l.b16 %v3855
        %v4151 = vunpack.c.l.b16 %v3856
        %v4152 = vunpack.c.l.b16 %v3857
        %v4153 = vunpack.c.l.b16 %v3858
        %v4154 = vunpack.c.l.b16 %v3859
        %v4155 = vunpack.c.l.b16 %v3860
        %v4156 = vunpack.c.l.b16 %v3861
        %v4157 = vunpack.c.l.b16 %v3862
        %v4158 = vunpack.c.l.b16 %v3863
        %v4159 = vunpack.c.l.b16 %v3864
        %v4160 = vunpack.c.l.b16 %v3865
        %v4161 = vunpack.c.l.b16 %v3866
        %v4162 = vunpack.c.l.b16 %v3867
        %v4163 = vunpack.c.l.b16 %v3868
        %v4164 = vunpack.c.l.b16 %v3869
        %v4165 = vunpack.c.l.b16 %v3870
        %v4166 = vunpack.c.l.b16 %v3871
        %v4167 = vunpack.c.l.b16 %v3872
        %v4168 = vunpack.c.l.b16 %v3873
        %v4169 = vunpack.c.l.b16 %v3874
        %v4170 = vunpack.c.l.b16 %v3875
        %v4171 = vunpack.c.l.b16 %v3876
        %v4172 = vunpack.c.l.b16 %v3877
        %v4173 = vunpack.c.l.b16 %v3878
        %v4174 = vunpack.c.l.b16 %v3879
        %v4175 = vunpack.c.l.b16 %v3880
        %v4176 = vunpack.c.l.b16 %v3881
        %v4177 = vunpack.c.l.b16 %v3882
        %v4178 = vunpack.c.l.b16 %v3883
        %v4179 = vunpack.c.l.b16 %v3884
        %v4180 = vunpack.c.l.b16 %v3885
        %v4181 = vunpack.c.l.b16 %v3886
        %v4182 = vunpack.c.l.b16 %v3887
        %v4183 = vunpack.c.l.b16 %v3888
        %v4184 = vunpack.c.l.b16 %v3889
        %v4185 = vunpack.c.l.b16 %v3890
        %v4186 = vunpack.c.l.b16 %v3891
        %v4187 = vunpack.c.l.b16 %v3892
        %v4188 = vunpack.c.l.b16 %v3893
        %v4189 = vunpack.c.l.b16 %v3894
        %v4190 = vunpack.c.l.b16 %v3895
        %v4191 = vunpack.c.l.b16 %v3896
        %v4192 = vunpack.c.l.b16 %v3897
        %v4193 = vunpack.c.l.b16 %v3898
        %v4194 = vunpack.c.l.b16 %v3899
        %v4195 = vunpack.c.l.b16 %v3900
        %v4196 = vunpack.c.l.b16 %v3901
        %v4197 = vunpack.c.l.b16 %v3902
        %v4198 = vunpack.c.l.b16 %v3903
        %v4199 = vunpack.c.l.b16 %v3904
        %v4200 = vunpack.c.l.b16 %v3905
        %v4201 = vunpack.c.l.b16 %v3906
        %v4202 = vunpack.c.l.b16 %v3907
        %v4203 = vunpack.c.l.b16 %v3908
        %v4204 = vunpack.c.l.b16 %v3909
        %v4205 = vunpack.c.l.b16 %v3910
        %v4206 = vunpack.c.l.b16 %v3911
        %v4207 = vunpack.c.l.b16 %v3912
        %v4208 = vunpack.c.l.b16 %v3913
        %v4209 = vunpack.c.l.b16 %v3914
        %v4210 = vunpack.c.l.b16 %v3915
        %v4211 = vunpack.c.l.b16 %v3916
        %v4212 = vunpack.c.l.b16 %v3917
        %v4213 = vunpack.c.l.b16 %v3918
        %v4214 = vunpack.c.l.b16 %v3919
        %v4215 = vunpack.c.l.b16 %v3920
        %v4216 = vunpack.c.l.b16 %v3921
        %v4217 = vunpack.c.l.b16 %v3922
        %v4218 = vunpack.c.l.b16 %v3923
        %v4219 = vunpack.c.l.b16 %v3924
        %v4220 = vunpack.c.l.b16 %v3925
        %v4221 = vunpack.c.l.b16 %v3926
        %v4222 = vunpack.c.l.b16 %v3927
        %v4223 = vunpack.c.l.b16 %v3928
        %v4224 = vunpack.c.l.b16 %v3929
        %v4225 = vunpack.c.l.b16 %v3930
        %v4226 = vunpack.c.l.b16 %v3931
        %v4227 = vunpack.c.l.b16 %v3932
        %v4228 = vunpack.c.l.b16 %v3933
        %v4229 = vunpack.c.l.b16 %v3934
        %v4230 = vunpack.c.l.b16 %v3935
        %v4231 = vunpack.c.l.b16 %v3936
        %v4232 = vunpack.c.l.b16 %v3937
        %v4233 = vunpack.c.l.b16 %v3938
        %v4234 = vunpack.c.l.b16 %v3939
        %v4235 = vunpack.c.l.b16 %v3940
        %v4236 = vunpack.c.l.b16 %v3941
        %v4237 = vunpack.c.l.b16 %v3942
        %v4238 = vunpack.c.l.b16 %v3943
        %v4239 = vunpack.c.l.b16 %v3944
        %v4240 = vunpack.c.l.b16 %v3945
        %v4241 = vunpack.c.l.b16 %v3946
        %v4242 = vunpack.c.l.b16 %v3947
        %v4243 = vunpack.c.l.b16 %v3948
        %v4244 = vunpack.c.l.b16 %v3949
        %v4245 = vunpack.c.l.b16 %v3950
        %v4246 = vunpack.c.l.b16 %v3951
        %v4247 = vunpack.c.l.b16 %v3952
        %v4248 = vunpack.c.l.b16 %v3953
        %v4249 = vunpack.c.l.b16 %v3954
        %v4250 = vunpack.c.l.b16 %v3955
        %v4251 = vunpack.c.l.b16 %v3956
        %v4252 = vunpack.c.l.b16 %v3957
        %v4253 = vunpack.c.l.b16 %v3958
        %v4254 = vunpack.c.l.b16 %v3959
        %v4255 = vunpack.c.l.b16 %v3960
        %v4256 = vunpack.c.l.b16 %v3961
        %v4257 = vunpack.c.l.b16 %v3962
        %v4258 = vunpack.c.l.b16 %v3963
        %v4259 = vunpack.c.l.b16 %v3964
        %v4260 = vunpack.c.l.b16 %v3965
        %v4261 = vunpack.c.l.b16 %v3966
        %v4262 = vunpack.c.l.b16 %v3967
        %v4263 = vunpack.c.l.b16 %v3968
        %v4264 = vunpack.c.l.b16 %v3969
        %v4265 = vunpack.c.l.b16 %v3970
        %v4266 = vunpack.c.l.b16 %v3971
        %v4267 = vunpack.c.l.b16 %v3972
        %v4268 = vpack.c.b16 %v4125, %v4124
        %v4269 = vpack.c.b16 %v4127, %v4126
        %v4270 = vpack.c.b16 %v4129, %v4128
        %v4271 = vpack.c.b16 %v4131, %v4130
        %v4272 = vpack.c.b16 %v4133, %v4132
        %v4273 = vpack.c.b16 %v4135, %v4134
        %v4274 = vpack.c.b16 %v4137, %v4136
        %v4275 = vpack.c.b16 %v4139, %v4138
        %v4276 = vpack.c.b16 %v4141, %v4140
        %v4277 = vpack.c.b16 %v4143, %v4142
        %v4278 = vpack.c.b16 %v4145, %v4144
        %v4279 = vpack.c.b16 %v4147, %v4146
        %v4280 = vpack.c.b16 %v4149, %v4148
        %v4281 = vpack.c.b16 %v4151, %v4150
        %v4282 = vpack.c.b16 %v4153, %v4152
        %v4283 = vpack.c.b16 %v4155, %v4154
        %v4284 = vpack.c.b16 %v4157, %v4156
        %v4285 = vpack.c.b16 %v4159, %v4158
        %v4286 = vpack.c.b16 %v4161, %v4160
        %v4287 = vpack.c.b16 %v4163, %v4162
        %v4288 = vpack.c.b16 %v4165, %v4164
        %v4289 = vpack.c.b16 %v4167, %v4166
        %v4290 = vpack.c.b16 %v4169, %v4168
        %v4291 = vpack.c.b16 %v4171, %v4170
        %v4292 = vpack.c.b16 %v4173, %v4172
        %v4293 = vpack.c.b16 %v4175, %v4174
        %v4294 = vpack.c.b16 %v4177, %v4176
        %v4295 = vpack.c.b16 %v4179, %v4178
        %v4296 = vpack.c.b16 %v4181, %v4180
        %v4297 = vpack.c.b16 %v4183, %v4182
        %v4298 = vpack.c.b16 %v4185, %v4184
        %v4299 = vpack.c.b16 %v4187, %v4186
        %v4300 = vpack.c.b16 %v4189, %v4188
        %v4301 = vpack.c.b16 %v4191, %v4190
        %v4302 = vpack.c.b16 %v4193, %v4192
        %v4303 = vpack.c.b16 %v4195, %v4194
        %v4304 = vpack.c.b16 %v4197, %v4196
        %v4305 = vpack.c.b16 %v4199, %v4198
        %v4306 = vpack.c.b16 %v4201, %v4200
        %v4307 = vpack.c.b16 %v4203, %v4202
        %v4308 = vpack.c.b16 %v4205, %v4204
        %v4309 = vpack.c.b16 %v4207, %v4206
        %v4310 = vpack.c.b16 %v4209, %v4208
        %v4311 = vpack.c.b16 %v4211, %v4210
        %v4312 = vpack.c.b16 %v4213, %v4212
        %v4313 = vpack.c.b16 %v4215, %v4214
        %v4314 = vpack.c.b16 %v4217, %v4216
        %v4315 = vpack.c.b16 %v4219, %v4218
        %v4316 = vpack.c.b16 %v4221, %v4220
        %v4317 = vpack.c.b16 %v4223, %v4222
        %v4318 = vpack.c.b16 %v4225, %v4224
        %v4319 = vpack.c.b16 %v4227, %v4226
        %v4320 = vpack.c.b16 %v4229, %v4228
        %v4321 = vpack.c.b16 %v4231, %v4230
        %v4322 = vpack.c.b16 %v4233, %v4232
        %v4323 = vpack.c.b16 %v4235, %v4234
        %v4324 = vpack.c.b16 %v4237, %v4236
        %v4325 = vpack.c.b16 %v4239, %v4238
        %v4326 = vpack.c.b16 %v4241, %v4240
        %v4327 = vpack.c.b16 %v4243, %v4242
        %v4328 = vpack.c.b16 %v4245, %v4244
        %v4329 = vpack.c.b16 %v4247, %v4246
        %v4330 = vpack.c.b16 %v4249, %v4248
        %v4331 = vpack.c.b16 %v4251, %v4250
        %v4332 = vpack.c.b16 %v4253, %v4252
        %v4333 = vpack.c.b16 %v4255, %v4254
        %v4334 = vpack.c.b16 %v4257, %v4256
        %v4335 = vpack.c.b16 %v4259, %v4258
        %v4336 = vpack.c.b16 %v4261, %v4260
        %v4337 = vpack.c.b16 %v4263, %v4262
        %v4338 = vpack.c.b16 %v4265, %v4264
        %v4339 = vpack.c.b16 %v4267, %v4266
        %4412 = vmatprep.subr.bf16.mxu0 0
        %4413 = vmatpush1.bf16.msra.mxu0 %v4268
        %4414 = vmatprep.subr.bf16.mxu0 0
        %4415 = vmatpush1.bf16.msra.mxu0 %v4269
        %4416 = vmatprep.subr.bf16.mxu0 0
        %4417 = vmatpush1.bf16.msra.mxu0 %v4270
        %4418 = vmatprep.subr.bf16.mxu0 0
        %4419 = vmatpush1.bf16.msra.mxu0 %v4271
        %4420 = vmatprep.subr.bf16.mxu0 0
        %4421 = vmatpush1.bf16.msra.mxu0 %v4272
        %4422 = vmatprep.subr.bf16.mxu0 0
        %4423 = vmatpush1.bf16.msra.mxu0 %v4273
        %4424 = vmatprep.subr.bf16.mxu0 0
        %4425 = vmatpush1.bf16.msra.mxu0 %v4274
        %4426 = vmatprep.subr.bf16.mxu0 0
        %4427 = vmatpush1.bf16.msra.mxu0 %v4275
        %4428 = vmatprep.subr.bf16.mxu0 0
        %4429 = vmatpush1.bf16.msra.mxu0 %v4276
        %4430 = vmatprep.subr.bf16.mxu0 0
        %4431 = vmatpush1.bf16.msra.mxu0 %v4277
        %4432 = vmatprep.subr.bf16.mxu0 0
        %4433 = vmatpush1.bf16.msra.mxu0 %v4278
        %4434 = vmatprep.subr.bf16.mxu0 0
        %4435 = vmatpush1.bf16.msra.mxu0 %v4279
        %4436 = vmatprep.subr.bf16.mxu0 0
        %4437 = vmatpush1.bf16.msra.mxu0 %v4280
        %4438 = vmatprep.subr.bf16.mxu0 0
        %4439 = vmatpush1.bf16.msra.mxu0 %v4281
        %4440 = vmatprep.subr.bf16.mxu0 0
        %4441 = vmatpush1.bf16.msra.mxu0 %v4282
        %4442 = vmatprep.subr.bf16.mxu0 0
        %4443 = vmatpush1.bf16.msra.mxu0 %v4283
        %4444 = vmatprep.mubr.bf16.mxu0 %v3317
        %4445 = vmatmul.mubr.bf16.gmra.mrb[0].mxu0 %v3253
        %v4446 = vpop.f32.mrb[0].mxu0
        %v4447 = vadd.f32 %v3978, %v4446
        %v4448 = vpop.f32.mrb[0].mxu0
        %v4449 = vpop.f32.mrb[0].mxu0
        %v4450 = vadd.f32 %v3978, %v4449
        %v4451 = vpop.f32.mrb[0].mxu0
        %4452 = vmatprep.mubr.bf16.mxu0 %v3318
        %4453 = vmatmul.mubr.bf16.gmra.mrb[0].mxu0 %v3254
        %v4454 = vpop.f32.mrb[0].mxu0
        %v4455 = vadd.f32 %v3978, %v4454
        %v4456 = vpop.f32.mrb[0].mxu0
        %v4457 = vpop.f32.mrb[0].mxu0
        %v4458 = vadd.f32 %v3978, %v4457
        %v4459 = vpop.f32.mrb[0].mxu0
        %4460 = vmatprep.mubr.bf16.mxu0 %v3319
        %4461 = vmatmul.mubr.bf16.gmra.mrb[0].mxu0 %v3255
        %v4462 = vpop.f32.mrb[0].mxu0
        %v4463 = vadd.f32 %v3978, %v4462
        %v4464 = vpop.f32.mrb[0].mxu0
        %v4465 = vpop.f32.mrb[0].mxu0
        %v4466 = vadd.f32 %v3978, %v4465
        %v4467 = vpop.f32.mrb[0].mxu0
        %4468 = vmatprep.mubr.bf16.mxu0 %v3320
        %4469 = vmatmul.mubr.bf16.gmra.mrb[0].mxu0 %v3256
        %v4470 = vpop.f32.mrb[0].mxu0
        %v4471 = vadd.f32 %v3978, %v4470
        %v4472 = vpop.f32.mrb[0].mxu0
        %v4473 = vpop.f32.mrb[0].mxu0
        %v4474 = vadd.f32 %v3978, %v4473
        %v4475 = vpop.f32.mrb[0].mxu0
        %4476 = vmatprep.mubr.bf16.mxu0 %v3321
        %4477 = vmatmul.mubr.bf16.gmra.mrb[0].mxu0 %v3257
        %v4478 = vpop.f32.mrb[0].mxu0
        %v4479 = vadd.f32 %v3978, %v4478
        %v4480 = vpop.f32.mrb[0].mxu0
        %v4481 = vpop.f32.mrb[0].mxu0
        %v4482 = vadd.f32 %v3978, %v4481
        %v4483 = vpop.f32.mrb[0].mxu0
        %4484 = vmatprep.mubr.bf16.mxu0 %v3322
        %4485 = vmatmul.mubr.bf16.gmra.mrb[0].mxu0 %v3258
        %v4486 = vpop.f32.mrb[0].mxu0
        %v4487 = vadd.f32 %v3978, %v4486
        %v4488 = vpop.f32.mrb[0].mxu0
        %v4489 = vpop.f32.mrb[0].mxu0
        %v4490 = vadd.f32 %v3978, %v4489
        %v4491 = vpop.f32.mrb[0].mxu0
        %4492 = vmatprep.mubr.bf16.mxu0 %v3323
        %4493 = vmatmul.mubr.bf16.gmra.mrb[0].mxu0 %v3259
        %v4494 = vpop.f32.mrb[0].mxu0
        %v4495 = vadd.f32 %v3978, %v4494
        %v4496 = vpop.f32.mrb[0].mxu0
        %v4497 = vpop.f32.mrb[0].mxu0
        %v4498 = vadd.f32 %v3978, %v4497
        %v4499 = vpop.f32.mrb[0].mxu0
        %4500 = vmatprep.mubr.bf16.mxu0 %v3324
        %4501 = vmatmul.mubr.bf16.gmra.mrb[0].mxu0 %v3260
        %v4502 = vpop.f32.mrb[0].mxu0
        %v4503 = vadd.f32 %v3978, %v4502
        %v4504 = vpop.f32.mrb[0].mxu0
        %v4505 = vpop.f32.mrb[0].mxu0
        %v4506 = vadd.f32 %v3978, %v4505
        %v4507 = vpop.f32.mrb[0].mxu0
        %4508 = vmatprep.mubr.bf16.mxu0 %v3325
        %4509 = vmatmul.mubr.bf16.gmra.mrb[0].mxu0 %v3261
        %v4510 = vpop.f32.mrb[0].mxu0
        %v4511 = vadd.f32 %v3978, %v4510
        %v4512 = vpop.f32.mrb[0].mxu0
        %v4513 = vpop.f32.mrb[0].mxu0
        %v4514 = vadd.f32 %v3978, %v4513
        %v4515 = vpop.f32.mrb[0].mxu0
        %4516 = vmatprep.mubr.bf16.mxu0 %v3326
        %4517 = vmatmul.mubr.bf16.gmra.mrb[0].mxu0 %v3262
        %v4518 = vpop.f32.mrb[0].mxu0
        %v4519 = vadd.f32 %v3978, %v4518
        %v4520 = vpop.f32.mrb[0].mxu0
        %v4521 = vpop.f32.mrb[0].mxu0
        %v4522 = vadd.f32 %v3978, %v4521
        %v4523 = vpop.f32.mrb[0].mxu0
        %4524 = vmatprep.mubr.bf16.mxu0 %v3327
        %4525 = vmatmul.mubr.bf16.gmra.mrb[0].mxu0 %v3263
        %v4526 = vpop.f32.mrb[0].mxu0
        %v4527 = vadd.f32 %v3978, %v4526
        %v4528 = vpop.f32.mrb[0].mxu0
        %v4529 = vpop.f32.mrb[0].mxu0
        %v4530 = vadd.f32 %v3978, %v4529
        %v4531 = vpop.f32.mrb[0].mxu0
        %4532 = vmatprep.mubr.bf16.mxu0 %v3328
        %4533 = vmatmul.mubr.bf16.gmra.mrb[0].mxu0 %v3264
        %v4534 = vpop.f32.mrb[0].mxu0
        %v4535 = vadd.f32 %v3978, %v4534
        %v4536 = vpop.f32.mrb[0].mxu0
        %v4537 = vpop.f32.mrb[0].mxu0
        %v4538 = vadd.f32 %v3978, %v4537
        %v4539 = vpop.f32.mrb[0].mxu0
        %4540 = vmatprep.mubr.bf16.mxu0 %v3329
        %4541 = vmatmul.mubr.bf16.gmra.mrb[0].mxu0 %v3265
        %v4542 = vpop.f32.mrb[0].mxu0
        %v4543 = vadd.f32 %v3978, %v4542
        %v4544 = vpop.f32.mrb[0].mxu0
        %v4545 = vpop.f32.mrb[0].mxu0
        %v4546 = vadd.f32 %v3978, %v4545
        %v4547 = vpop.f32.mrb[0].mxu0
        %4548 = vmatprep.mubr.bf16.mxu0 %v3330
        %4549 = vmatmul.mubr.bf16.gmra.mrb[0].mxu0 %v3266
        %v4550 = vpop.f32.mrb[0].mxu0
        %v4551 = vadd.f32 %v3978, %v4550
        %v4552 = vpop.f32.mrb[0].mxu0
        %v4553 = vpop.f32.mrb[0].mxu0
        %v4554 = vadd.f32 %v3978, %v4553
        %v4555 = vpop.f32.mrb[0].mxu0
        %4556 = vmatprep.mubr.bf16.mxu0 %v3331
        %4557 = vmatmul.mubr.bf16.gmra.mrb[0].mxu0 %v3267
        %v4558 = vpop.f32.mrb[0].mxu0
        %v4559 = vadd.f32 %v3978, %v4558
        %v4560 = vpop.f32.mrb[0].mxu0
        %v4561 = vpop.f32.mrb[0].mxu0
        %v4562 = vadd.f32 %v3978, %v4561
        %v4563 = vpop.f32.mrb[0].mxu0
        %4564 = vmatprep.mubr.bf16.mxu0 %v3332
        %4565 = vmatmul.mubr.bf16.gmra.mrb[0].mxu0 %v3268
        %v4566 = vpop.f32.mrb[0].mxu0
        %v4567 = vadd.f32 %v3978, %v4566
        %v4568 = vpop.f32.mrb[0].mxu0
        %v4569 = vpop.f32.mrb[0].mxu0
        %v4570 = vadd.f32 %v3978, %v4569
        %v4571 = vpop.f32.mrb[0].mxu0
        %4572 = vdwg.mxu0
        %4573 = vmatprep.subr.bf16.mxu0 0
        %4574 = vmatpush1.bf16.msra.mxu0 %v4284
        %4575 = vmatprep.subr.bf16.mxu0 0
        %4576 = vmatpush1.bf16.msra.mxu0 %v4285
        %4577 = vmatprep.subr.bf16.mxu0 0
        %4578 = vmatpush1.bf16.msra.mxu0 %v4286
        %4579 = vmatprep.subr.bf16.mxu0 0
        %4580 = vmatpush1.bf16.msra.mxu0 %v4287
        %4581 = vmatprep.subr.bf16.mxu0 0
        %4582 = vmatpush1.bf16.msra.mxu0 %v4288
        %4583 = vmatprep.subr.bf16.mxu0 0
        %4584 = vmatpush1.bf16.msra.mxu0 %v4289
        %4585 = vmatprep.subr.bf16.mxu0 0
        %4586 = vmatpush1.bf16.msra.mxu0 %v4290
        %4587 = vmatprep.subr.bf16.mxu0 0
        %4588 = vmatpush1.bf16.msra.mxu0 %v4291
        %4589 = vmatprep.subr.bf16.mxu0 0
        %4590 = vmatpush1.bf16.msra.mxu0 %v4292
        %4591 = vmatprep.subr.bf16.mxu0 0
        %4592 = vmatpush1.bf16.msra.mxu0 %v4293
        %4593 = vmatprep.subr.bf16.mxu0 0
        %4594 = vmatpush1.bf16.msra.mxu0 %v4294
        %4595 = vmatprep.subr.bf16.mxu0 0
        %4596 = vmatpush1.bf16.msra.mxu0 %v4295
        %4597 = vmatprep.subr.bf16.mxu0 0
        %4598 = vmatpush1.bf16.msra.mxu0 %v4296
        %4599 = vmatprep.subr.bf16.mxu0 0
        %4600 = vmatpush1.bf16.msra.mxu0 %v4297
        %4601 = vmatprep.subr.bf16.mxu0 0
        %4602 = vmatpush1.bf16.msra.mxu0 %v4298
        %4603 = vmatprep.subr.bf16.mxu0 0
        %4604 = vmatpush1.bf16.msra.mxu0 %v4299
        %4605 = vmatprep.mubr.bf16.mxu0 %v3461
        %4606 = vmatmul.mubr.bf16.gmra.mrb[0].mxu0 %v3381
        %v4607 = vpop.f32.mrb[0].mxu0
        %v4608 = vadd.f32 %v4447, %v4607
        %v4609 = vpop.f32.mrb[0].mxu0
        %v4610 = vpop.f32.mrb[0].mxu0
        %v4611 = vadd.f32 %v4450, %v4610
        %v4612 = vpop.f32.mrb[0].mxu0
        %4613 = vmatprep.mubr.bf16.mxu0 %v3462
        %4614 = vmatmul.mubr.bf16.gmra.mrb[0].mxu0 %v3382
        %v4615 = vpop.f32.mrb[0].mxu0
        %v4616 = vadd.f32 %v4455, %v4615
        %v4617 = vpop.f32.mrb[0].mxu0
        %v4618 = vpop.f32.mrb[0].mxu0
        %v4619 = vadd.f32 %v4458, %v4618
        %v4620 = vpop.f32.mrb[0].mxu0
        %4621 = vmatprep.mubr.bf16.mxu0 %v3463
        %4622 = vmatmul.mubr.bf16.gmra.mrb[0].mxu0 %v3383
        %v4623 = vpop.f32.mrb[0].mxu0
        %v4624 = vadd.f32 %v4463, %v4623
        %v4625 = vpop.f32.mrb[0].mxu0
        %v4626 = vpop.f32.mrb[0].mxu0
        %v4627 = vadd.f32 %v4466, %v4626
        %v4628 = vpop.f32.mrb[0].mxu0
        %4629 = vmatprep.mubr.bf16.mxu0 %v3464
        %4630 = vmatmul.mubr.bf16.gmra.mrb[0].mxu0 %v3384
        %v4631 = vpop.f32.mrb[0].mxu0
        %v4632 = vadd.f32 %v4471, %v4631
        %v4633 = vpop.f32.mrb[0].mxu0
        %v4634 = vpop.f32.mrb[0].mxu0
        %v4635 = vadd.f32 %v4474, %v4634
        %v4636 = vpop.f32.mrb[0].mxu0
        %4637 = vmatprep.mubr.bf16.mxu0 %v3465
        %4638 = vmatmul.mubr.bf16.gmra.mrb[0].mxu0 %v3385
        %v4639 = vpop.f32.mrb[0].mxu0
        %v4640 = vadd.f32 %v4479, %v4639
        %v4641 = vpop.f32.mrb[0].mxu0
        %v4642 = vpop.f32.mrb[0].mxu0
        %v4643 = vadd.f32 %v4482, %v4642
        %v4644 = vpop.f32.mrb[0].mxu0
        %4645 = vmatprep.mubr.bf16.mxu0 %v3466
        %4646 = vmatmul.mubr.bf16.gmra.mrb[0].mxu0 %v3386
        %v4647 = vpop.f32.mrb[0].mxu0
        %v4648 = vadd.f32 %v4487, %v4647
        %v4649 = vpop.f32.mrb[0].mxu0
        %v4650 = vpop.f32.mrb[0].mxu0
        %v4651 = vadd.f32 %v4490, %v4650
        %v4652 = vpop.f32.mrb[0].mxu0
        %4653 = vmatprep.mubr.bf16.mxu0 %v3467
        %4654 = vmatmul.mubr.bf16.gmra.mrb[0].mxu0 %v3387
        %v4655 = vpop.f32.mrb[0].mxu0
        %v4656 = vadd.f32 %v4495, %v4655
        %v4657 = vpop.f32.mrb[0].mxu0
        %v4658 = vpop.f32.mrb[0].mxu0
        %v4659 = vadd.f32 %v4498, %v4658
        %v4660 = vpop.f32.mrb[0].mxu0
        %4661 = vmatprep.mubr.bf16.mxu0 %v3468
        %4662 = vmatmul.mubr.bf16.gmra.mrb[0].mxu0 %v3388
        %v4663 = vpop.f32.mrb[0].mxu0
        %v4664 = vadd.f32 %v4503, %v4663
        %v4665 = vpop.f32.mrb[0].mxu0
        %v4666 = vpop.f32.mrb[0].mxu0
        %v4667 = vadd.f32 %v4506, %v4666
        %v4668 = vpop.f32.mrb[0].mxu0
        %4669 = vmatprep.mubr.bf16.mxu0 %v3469
        %4670 = vmatmul.mubr.bf16.gmra.mrb[0].mxu0 %v3389
        %v4671 = vpop.f32.mrb[0].mxu0
        %v4672 = vadd.f32 %v4511, %v4671
        %v4673 = vpop.f32.mrb[0].mxu0
        %v4674 = vpop.f32.mrb[0].mxu0
        %v4675 = vadd.f32 %v4514, %v4674
        %v4676 = vpop.f32.mrb[0].mxu0
        %4677 = vmatprep.mubr.bf16.mxu0 %v3470
        %4678 = vmatmul.mubr.bf16.gmra.mrb[0].mxu0 %v3390
        %v4679 = vpop.f32.mrb[0].mxu0
        %v4680 = vadd.f32 %v4519, %v4679
        %v4681 = vpop.f32.mrb[0].mxu0
        %v4682 = vpop.f32.mrb[0].mxu0
        %v4683 = vadd.f32 %v4522, %v4682
        %v4684 = vpop.f32.mrb[0].mxu0
        %4685 = vmatprep.mubr.bf16.mxu0 %v3471
        %4686 = vmatmul.mubr.bf16.gmra.mrb[0].mxu0 %v3391
        %v4687 = vpop.f32.mrb[0].mxu0
        %v4688 = vadd.f32 %v4527, %v4687
        %v4689 = vpop.f32.mrb[0].mxu0
        %v4690 = vpop.f32.mrb[0].mxu0
        %v4691 = vadd.f32 %v4530, %v4690
        %v4692 = vpop.f32.mrb[0].mxu0
        %4693 = vmatprep.mubr.bf16.mxu0 %v3472
        %4694 = vmatmul.mubr.bf16.gmra.mrb[0].mxu0 %v3392
        %v4695 = vpop.f32.mrb[0].mxu0
        %v4696 = vadd.f32 %v4535, %v4695
        %v4697 = vpop.f32.mrb[0].mxu0
        %v4698 = vpop.f32.mrb[0].mxu0
        %v4699 = vadd.f32 %v4538, %v4698
        %v4700 = vpop.f32.mrb[0].mxu0
        %4701 = vmatprep.mubr.bf16.mxu0 %v3473
        %4702 = vmatmul.mubr.bf16.gmra.mrb[0].mxu0 %v3393
        %v4703 = vpop.f32.mrb[0].mxu0
        %v4704 = vadd.f32 %v4543, %v4703
        %v4705 = vpop.f32.mrb[0].mxu0
        %v4706 = vpop.f32.mrb[0].mxu0
        %v4707 = vadd.f32 %v4546, %v4706
        %v4708 = vpop.f32.mrb[0].mxu0
        %4709 = vmatprep.mubr.bf16.mxu0 %v3474
        %4710 = vmatmul.mubr.bf16.gmra.mrb[0].mxu0 %v3394
        %v4711 = vpop.f32.mrb[0].mxu0
        %v4712 = vadd.f32 %v4551, %v4711
        %v4713 = vpop.f32.mrb[0].mxu0
        %v4714 = vpop.f32.mrb[0].mxu0
        %v4715 = vadd.f32 %v4554, %v4714
        %v4716 = vpop.f32.mrb[0].mxu0
        %4717 = vmatprep.mubr.bf16.mxu0 %v3475
        %4718 = vmatmul.mubr.bf16.gmra.mrb[0].mxu0 %v3395
        %v4719 = vpop.f32.mrb[0].mxu0
        %v4720 = vadd.f32 %v4559, %v4719
        %v4721 = vpop.f32.mrb[0].mxu0
        %v4722 = vpop.f32.mrb[0].mxu0
        %v4723 = vadd.f32 %v4562, %v4722
        %v4724 = vpop.f32.mrb[0].mxu0
        %4725 = vmatprep.mubr.bf16.mxu0 %v3476
        %4726 = vmatmul.mubr.bf16.gmra.mrb[0].mxu0 %v3396
        %v4727 = vpop.f32.mrb[0].mxu0
        %v4728 = vadd.f32 %v4567, %v4727
        %v4729 = vpop.f32.mrb[0].mxu0
        %v4730 = vpop.f32.mrb[0].mxu0
        %v4731 = vadd.f32 %v4570, %v4730
        %v4732 = vpop.f32.mrb[0].mxu0
        %4733 = vdwg.mxu0
        %4734 = vmatprep.subr.bf16.mxu0 0
        %4735 = vmatpush1.bf16.msra.mxu0 %v4300
        %4736 = vmatprep.subr.bf16.mxu0 0
        %4737 = vmatpush1.bf16.msra.mxu0 %v4301
        %4738 = vmatprep.subr.bf16.mxu0 0
        %4739 = vmatpush1.bf16.msra.mxu0 %v4302
        %4740 = vmatprep.subr.bf16.mxu0 0
        %4741 = vmatpush1.bf16.msra.mxu0 %v4303
        %4742 = vmatprep.subr.bf16.mxu0 0
        %4743 = vmatpush1.bf16.msra.mxu0 %v4304
        %4744 = vmatprep.subr.bf16.mxu0 0
        %4745 = vmatpush1.bf16.msra.mxu0 %v4305
        %4746 = vmatprep.subr.bf16.mxu0 0
        %4747 = vmatpush1.bf16.msra.mxu0 %v4306
        %4748 = vmatprep.subr.bf16.mxu0 0
        %4749 = vmatpush1.bf16.msra.mxu0 %v4307
        %4750 = vmatprep.subr.bf16.mxu0 0
        %4751 = vmatpush1.bf16.msra.mxu0 %v4308
        %4752 = vmatprep.subr.bf16.mxu0 0
        %4753 = vmatpush1.bf16.msra.mxu0 %v4309
        %4754 = vmatprep.subr.bf16.mxu0 0
        %4755 = vmatpush1.bf16.msra.mxu0 %v4310
        %4756 = vmatprep.subr.bf16.mxu0 0
        %4757 = vmatpush1.bf16.msra.mxu0 %v4311
        %4758 = vmatprep.subr.bf16.mxu0 0
        %4759 = vmatpush1.bf16.msra.mxu0 %v4312
        %4760 = vmatprep.subr.bf16.mxu0 0
        %4761 = vmatpush1.bf16.msra.mxu0 %v4313
        %4762 = vmatprep.subr.bf16.mxu0 0
        %4763 = vmatpush1.bf16.msra.mxu0 %v4314
        %4764 = vmatprep.subr.bf16.mxu0 0
        %4765 = vmatpush1.bf16.msra.mxu0 %v4315
        %4766 = vmatprep.mubr.bf16.mxu0 %v3589
        %4767 = vmatmul.mubr.bf16.gmra.mrb[0].mxu0 %v3525
        %v4768 = vpop.f32.mrb[0].mxu0
        %v4769 = vadd.f32 %v4608, %v4768
        %v4770 = vpop.f32.mrb[0].mxu0
        %v4771 = vpop.f32.mrb[0].mxu0
        %v4772 = vadd.f32 %v4611, %v4771
        %v4773 = vpop.f32.mrb[0].mxu0
        %4774 = vmatprep.mubr.bf16.mxu0 %v3590
        %4775 = vmatmul.mubr.bf16.gmra.mrb[0].mxu0 %v3526
        %v4776 = vpop.f32.mrb[0].mxu0
        %v4777 = vadd.f32 %v4616, %v4776
        %v4778 = vpop.f32.mrb[0].mxu0
        %v4779 = vpop.f32.mrb[0].mxu0
        %v4780 = vadd.f32 %v4619, %v4779
        %v4781 = vpop.f32.mrb[0].mxu0
        %4782 = vmatprep.mubr.bf16.mxu0 %v3591
        %4783 = vmatmul.mubr.bf16.gmra.mrb[0].mxu0 %v3527
        %v4784 = vpop.f32.mrb[0].mxu0
        %v4785 = vadd.f32 %v4624, %v4784
        %v4786 = vpop.f32.mrb[0].mxu0
        %v4787 = vpop.f32.mrb[0].mxu0
        %v4788 = vadd.f32 %v4627, %v4787
        %v4789 = vpop.f32.mrb[0].mxu0
        %4790 = vmatprep.mubr.bf16.mxu0 %v3592
        %4791 = vmatmul.mubr.bf16.gmra.mrb[0].mxu0 %v3528
        %v4792 = vpop.f32.mrb[0].mxu0
        %v4793 = vadd.f32 %v4632, %v4792
        %v4794 = vpop.f32.mrb[0].mxu0
        %v4795 = vpop.f32.mrb[0].mxu0
        %v4796 = vadd.f32 %v4635, %v4795
        %v4797 = vpop.f32.mrb[0].mxu0
        %4798 = vmatprep.mubr.bf16.mxu0 %v3593
        %4799 = vmatmul.mubr.bf16.gmra.mrb[0].mxu0 %v3529
        %v4800 = vpop.f32.mrb[0].mxu0
        %v4801 = vadd.f32 %v4640, %v4800
        %v4802 = vpop.f32.mrb[0].mxu0
        %v4803 = vpop.f32.mrb[0].mxu0
        %v4804 = vadd.f32 %v4643, %v4803
        %v4805 = vpop.f32.mrb[0].mxu0
        %4806 = vmatprep.mubr.bf16.mxu0 %v3594
        %4807 = vmatmul.mubr.bf16.gmra.mrb[0].mxu0 %v3530
        %v4808 = vpop.f32.mrb[0].mxu0
        %v4809 = vadd.f32 %v4648, %v4808
        %v4810 = vpop.f32.mrb[0].mxu0
        %v4811 = vpop.f32.mrb[0].mxu0
        %v4812 = vadd.f32 %v4651, %v4811
        %v4813 = vpop.f32.mrb[0].mxu0
        %4814 = vmatprep.mubr.bf16.mxu0 %v3595
        %4815 = vmatmul.mubr.bf16.gmra.mrb[0].mxu0 %v3531
        %v4816 = vpop.f32.mrb[0].mxu0
        %v4817 = vadd.f32 %v4656, %v4816
        %v4818 = vpop.f32.mrb[0].mxu0
        %v4819 = vpop.f32.mrb[0].mxu0
        %v4820 = vadd.f32 %v4659, %v4819
        %v4821 = vpop.f32.mrb[0].mxu0
        %4822 = vmatprep.mubr.bf16.mxu0 %v3596
        %4823 = vmatmul.mubr.bf16.gmra.mrb[0].mxu0 %v3532
        %v4824 = vpop.f32.mrb[0].mxu0
        %v4825 = vadd.f32 %v4664, %v4824
        %v4826 = vpop.f32.mrb[0].mxu0
        %v4827 = vpop.f32.mrb[0].mxu0
        %v4828 = vadd.f32 %v4667, %v4827
        %v4829 = vpop.f32.mrb[0].mxu0
        %4830 = vmatprep.mubr.bf16.mxu0 %v3597
        %4831 = vmatmul.mubr.bf16.gmra.mrb[0].mxu0 %v3533
        %v4832 = vpop.f32.mrb[0].mxu0
        %v4833 = vadd.f32 %v4672, %v4832
        %v4834 = vpop.f32.mrb[0].mxu0
        %v4835 = vpop.f32.mrb[0].mxu0
        %v4836 = vadd.f32 %v4675, %v4835
        %v4837 = vpop.f32.mrb[0].mxu0
        %4838 = vmatprep.mubr.bf16.mxu0 %v3598
        %4839 = vmatmul.mubr.bf16.gmra.mrb[0].mxu0 %v3534
        %v4840 = vpop.f32.mrb[0].mxu0
        %v4841 = vadd.f32 %v4680, %v4840
        %v4842 = vpop.f32.mrb[0].mxu0
        %v4843 = vpop.f32.mrb[0].mxu0
        %v4844 = vadd.f32 %v4683, %v4843
        %v4845 = vpop.f32.mrb[0].mxu0
        %4846 = vmatprep.mubr.bf16.mxu0 %v3599
        %4847 = vmatmul.mubr.bf16.gmra.mrb[0].mxu0 %v3535
        %v4848 = vpop.f32.mrb[0].mxu0
        %v4849 = vadd.f32 %v4688, %v4848
        %v4850 = vpop.f32.mrb[0].mxu0
        %v4851 = vpop.f32.mrb[0].mxu0
        %v4852 = vadd.f32 %v4691, %v4851
        %v4853 = vpop.f32.mrb[0].mxu0
        %4854 = vmatprep.mubr.bf16.mxu0 %v3600
        %4855 = vmatmul.mubr.bf16.gmra.mrb[0].mxu0 %v3536
        %v4856 = vpop.f32.mrb[0].mxu0
        %v4857 = vadd.f32 %v4696, %v4856
        %v4858 = vpop.f32.mrb[0].mxu0
        %v4859 = vpop.f32.mrb[0].mxu0
        %v4860 = vadd.f32 %v4699, %v4859
        %v4861 = vpop.f32.mrb[0].mxu0
        %4862 = vmatprep.mubr.bf16.mxu0 %v3601
        %4863 = vmatmul.mubr.bf16.gmra.mrb[0].mxu0 %v3537
        %v4864 = vpop.f32.mrb[0].mxu0
        %v4865 = vadd.f32 %v4704, %v4864
        %v4866 = vpop.f32.mrb[0].mxu0
        %v4867 = vpop.f32.mrb[0].mxu0
        %v4868 = vadd.f32 %v4707, %v4867
        %v4869 = vpop.f32.mrb[0].mxu0
        %4870 = vmatprep.mubr.bf16.mxu0 %v3602
        %4871 = vmatmul.mubr.bf16.gmra.mrb[0].mxu0 %v3538
        %v4872 = vpop.f32.mrb[0].mxu0
        %v4873 = vadd.f32 %v4712, %v4872
        %v4874 = vpop.f32.mrb[0].mxu0
        %v4875 = vpop.f32.mrb[0].mxu0
        %v4876 = vadd.f32 %v4715, %v4875
        %v4877 = vpop.f32.mrb[0].mxu0
        %4878 = vmatprep.mubr.bf16.mxu0 %v3603
        %4879 = vmatmul.mubr.bf16.gmra.mrb[0].mxu0 %v3539
        %v4880 = vpop.f32.mrb[0].mxu0
        %v4881 = vadd.f32 %v4720, %v4880
        %v4882 = vpop.f32.mrb[0].mxu0
        %v4883 = vpop.f32.mrb[0].mxu0
        %v4884 = vadd.f32 %v4723, %v4883
        %v4885 = vpop.f32.mrb[0].mxu0
        %4886 = vmatprep.mubr.bf16.mxu0 %v3604
        %4887 = vmatmul.mubr.bf16.gmra.mrb[0].mxu0 %v3540
        %v4888 = vpop.f32.mrb[0].mxu0
        %v4889 = vadd.f32 %v4728, %v4888
        %v4890 = vpop.f32.mrb[0].mxu0
        %v4891 = vpop.f32.mrb[0].mxu0
        %v4892 = vadd.f32 %v4731, %v4891
        %v4893 = vpop.f32.mrb[0].mxu0
        %4894 = vdwg.mxu0
        %4895 = vmatprep.subr.bf16.mxu0 0
        %4896 = vmatpush1.bf16.msra.mxu0 %v4316
        %4897 = vmatprep.subr.bf16.mxu0 0
        %4898 = vmatpush1.bf16.msra.mxu0 %v4317
        %4899 = vmatprep.subr.bf16.mxu0 0
        %4900 = vmatpush1.bf16.msra.mxu0 %v4318
        %4901 = vmatprep.subr.bf16.mxu0 0
        %4902 = vmatpush1.bf16.msra.mxu0 %v4319
        %4903 = vmatprep.subr.bf16.mxu0 0
        %4904 = vmatpush1.bf16.msra.mxu0 %v4320
        %4905 = vmatprep.subr.bf16.mxu0 0
        %4906 = vmatpush1.bf16.msra.mxu0 %v4321
        %4907 = vmatprep.subr.bf16.mxu0 0
        %4908 = vmatpush1.bf16.msra.mxu0 %v4322
        %4909 = vmatprep.subr.bf16.mxu0 0
        %4910 = vmatpush1.bf16.msra.mxu0 %v4323
        %4911 = vmatprep.subr.bf16.mxu0 0
        %4912 = vmatpush1.bf16.msra.mxu0 %v4324
        %4913 = vmatprep.subr.bf16.mxu0 0
        %4914 = vmatpush1.bf16.msra.mxu0 %v4325
        %4915 = vmatprep.subr.bf16.mxu0 0
        %4916 = vmatpush1.bf16.msra.mxu0 %v4326
        %4917 = vmatprep.subr.bf16.mxu0 0
        %4918 = vmatpush1.bf16.msra.mxu0 %v4327
        %4919 = vmatprep.subr.bf16.mxu0 0
        %4920 = vmatpush1.bf16.msra.mxu0 %v4328
        %4921 = vmatprep.subr.bf16.mxu0 0
        %4922 = vmatpush1.bf16.msra.mxu0 %v4329
        %4923 = vmatprep.subr.bf16.mxu0 0
        %4924 = vmatpush1.bf16.msra.mxu0 %v4330
        %4925 = vmatprep.subr.bf16.mxu0 0
        %4926 = vmatpush1.bf16.msra.mxu0 %v4331
        %4927 = vmatprep.mubr.bf16.mxu0 %v3733
        %4928 = vmatmul.mubr.bf16.gmra.mrb[0].mxu0 %v3669
        %v4929 = vpop.f32.mrb[0].mxu0
        %v4930 = vadd.f32 %v4769, %v4929
        %v4931 = vpop.f32.mrb[0].mxu0
        %v4932 = vpop.f32.mrb[0].mxu0
        %v4933 = vadd.f32 %v4772, %v4932
        %v4934 = vpop.f32.mrb[0].mxu0
        %4935 = vmatprep.mubr.bf16.mxu0 %v3734
        %4936 = vmatmul.mubr.bf16.gmra.mrb[0].mxu0 %v3670
        %v4937 = vpop.f32.mrb[0].mxu0
        %v4938 = vadd.f32 %v4777, %v4937
        %v4939 = vpop.f32.mrb[0].mxu0
        %v4940 = vpop.f32.mrb[0].mxu0
        %v4941 = vadd.f32 %v4780, %v4940
        %v4942 = vpop.f32.mrb[0].mxu0
        %4943 = vmatprep.mubr.bf16.mxu0 %v3735
        %4944 = vmatmul.mubr.bf16.gmra.mrb[0].mxu0 %v3671
        %v4945 = vpop.f32.mrb[0].mxu0
        %v4946 = vadd.f32 %v4785, %v4945
        %v4947 = vpop.f32.mrb[0].mxu0
        %v4948 = vpop.f32.mrb[0].mxu0
        %v4949 = vadd.f32 %v4788, %v4948
        %v4950 = vpop.f32.mrb[0].mxu0
        %4951 = vmatprep.mubr.bf16.mxu0 %v3736
        %4952 = vmatmul.mubr.bf16.gmra.mrb[0].mxu0 %v3672
        %v4953 = vpop.f32.mrb[0].mxu0
        %v4954 = vadd.f32 %v4793, %v4953
        %v4955 = vpop.f32.mrb[0].mxu0
        %v4956 = vpop.f32.mrb[0].mxu0
        %v4957 = vadd.f32 %v4796, %v4956
        %v4958 = vpop.f32.mrb[0].mxu0
        %4959 = vmatprep.mubr.bf16.mxu0 %v3737
        %4960 = vmatmul.mubr.bf16.gmra.mrb[0].mxu0 %v3673
        %v4961 = vpop.f32.mrb[0].mxu0
        %v4962 = vadd.f32 %v4801, %v4961
        %v4963 = vpop.f32.mrb[0].mxu0
        %v4964 = vpop.f32.mrb[0].mxu0
        %v4965 = vadd.f32 %v4804, %v4964
        %v4966 = vpop.f32.mrb[0].mxu0
        %4967 = vmatprep.mubr.bf16.mxu0 %v3738
        %4968 = vmatmul.mubr.bf16.gmra.mrb[0].mxu0 %v3674
        %v4969 = vpop.f32.mrb[0].mxu0
        %v4970 = vadd.f32 %v4809, %v4969
        %v4971 = vpop.f32.mrb[0].mxu0
        %v4972 = vpop.f32.mrb[0].mxu0
        %v4973 = vadd.f32 %v4812, %v4972
        %v4974 = vpop.f32.mrb[0].mxu0
        %4975 = vmatprep.mubr.bf16.mxu0 %v3739
        %4976 = vmatmul.mubr.bf16.gmra.mrb[0].mxu0 %v3675
        %v4977 = vpop.f32.mrb[0].mxu0
        %v4978 = vadd.f32 %v4817, %v4977
        %v4979 = vpop.f32.mrb[0].mxu0
        %v4980 = vpop.f32.mrb[0].mxu0
        %v4981 = vadd.f32 %v4820, %v4980
        %v4982 = vpop.f32.mrb[0].mxu0
        %4983 = vmatprep.mubr.bf16.mxu0 %v3740
        %4984 = vmatmul.mubr.bf16.gmra.mrb[0].mxu0 %v3676
        %v4985 = vpop.f32.mrb[0].mxu0
        %v4986 = vadd.f32 %v4825, %v4985
        %v4987 = vpop.f32.mrb[0].mxu0
        %v4988 = vpop.f32.mrb[0].mxu0
        %v4989 = vadd.f32 %v4828, %v4988
        %v4990 = vpop.f32.mrb[0].mxu0
        %4991 = vmatprep.mubr.bf16.mxu0 %v3741
        %4992 = vmatmul.mubr.bf16.gmra.mrb[0].mxu0 %v3677
        %v4993 = vpop.f32.mrb[0].mxu0
        %v4994 = vadd.f32 %v4833, %v4993
        %v4995 = vpop.f32.mrb[0].mxu0
        %v4996 = vpop.f32.mrb[0].mxu0
        %v4997 = vadd.f32 %v4836, %v4996
        %v4998 = vpop.f32.mrb[0].mxu0
        %4999 = vmatprep.mubr.bf16.mxu0 %v3742
        %5000 = vmatmul.mubr.bf16.gmra.mrb[0].mxu0 %v3678
        %v5001 = vpop.f32.mrb[0].mxu0
        %v5002 = vadd.f32 %v4841, %v5001
        %v5003 = vpop.f32.mrb[0].mxu0
        %v5004 = vpop.f32.mrb[0].mxu0
        %v5005 = vadd.f32 %v4844, %v5004
        %v5006 = vpop.f32.mrb[0].mxu0
        %5007 = vmatprep.mubr.bf16.mxu0 %v3743
        %5008 = vmatmul.mubr.bf16.gmra.mrb[0].mxu0 %v3679
        %v5009 = vpop.f32.mrb[0].mxu0
        %v5010 = vadd.f32 %v4849, %v5009
        %v5011 = vpop.f32.mrb[0].mxu0
        %v5012 = vpop.f32.mrb[0].mxu0
        %v5013 = vadd.f32 %v4852, %v5012
        %v5014 = vpop.f32.mrb[0].mxu0
        %5015 = vmatprep.mubr.bf16.mxu0 %v3744
        %5016 = vmatmul.mubr.bf16.gmra.mrb[0].mxu0 %v3680
        %v5017 = vpop.f32.mrb[0].mxu0
        %v5018 = vadd.f32 %v4857, %v5017
        %v5019 = vpop.f32.mrb[0].mxu0
        %v5020 = vpop.f32.mrb[0].mxu0
        %v5021 = vadd.f32 %v4860, %v5020
        %v5022 = vpop.f32.mrb[0].mxu0
        %5023 = vmatprep.mubr.bf16.mxu0 %v3745
        %5024 = vmatmul.mubr.bf16.gmra.mrb[0].mxu0 %v3681
        %v5025 = vpop.f32.mrb[0].mxu0
        %v5026 = vadd.f32 %v4865, %v5025
        %v5027 = vpop.f32.mrb[0].mxu0
        %v5028 = vpop.f32.mrb[0].mxu0
        %v5029 = vadd.f32 %v4868, %v5028
        %v5030 = vpop.f32.mrb[0].mxu0
        %5031 = vmatprep.mubr.bf16.mxu0 %v3746
        %5032 = vmatmul.mubr.bf16.gmra.mrb[0].mxu0 %v3682
        %v5033 = vpop.f32.mrb[0].mxu0
        %v5034 = vadd.f32 %v4873, %v5033
        %v5035 = vpop.f32.mrb[0].mxu0
        %v5036 = vpop.f32.mrb[0].mxu0
        %v5037 = vadd.f32 %v4876, %v5036
        %v5038 = vpop.f32.mrb[0].mxu0
        %5039 = vmatprep.mubr.bf16.mxu0 %v3747
        %5040 = vmatmul.mubr.bf16.gmra.mrb[0].mxu0 %v3683
        %v5041 = vpop.f32.mrb[0].mxu0
        %v5042 = vadd.f32 %v4881, %v5041
        %v5043 = vpop.f32.mrb[0].mxu0
        %v5044 = vpop.f32.mrb[0].mxu0
        %v5045 = vadd.f32 %v4884, %v5044
        %v5046 = vpop.f32.mrb[0].mxu0
        %5047 = vmatprep.mubr.bf16.mxu0 %v3748
        %5048 = vmatmul.mubr.bf16.gmra.mrb[0].mxu0 %v3684
        %v5049 = vpop.f32.mrb[0].mxu0
        %v5050 = vadd.f32 %v4889, %v5049
        %v5051 = vpop.f32.mrb[0].mxu0
        %v5052 = vpop.f32.mrb[0].mxu0
        %v5053 = vadd.f32 %v4892, %v5052
        %v5054 = vpop.f32.mrb[0].mxu0
        %5055 = vdwg.mxu0
        %5056 = vmatprep.subr.bf16.mxu0 0
        %5057 = vmatpush1.bf16.msra.mxu0 %v4332
        %5058 = vmatprep.subr.bf16.mxu0 0
        %5059 = vmatpush1.bf16.msra.mxu0 %v4333
        %5060 = vmatprep.subr.bf16.mxu0 0
        %5061 = vmatpush1.bf16.msra.mxu0 %v4334
        %5062 = vmatprep.subr.bf16.mxu0 0
        %5063 = vmatpush1.bf16.msra.mxu0 %v4335
        %5064 = vmatprep.subr.bf16.mxu0 0
        %5065 = vmatpush1.bf16.msra.mxu0 %v4336
        %5066 = vmatprep.subr.bf16.mxu0 0
        %5067 = vmatpush1.bf16.msra.mxu0 %v4337
        %5068 = vmatprep.subr.bf16.mxu0 0
        %5069 = vmatpush1.bf16.msra.mxu0 %v4338
        %5070 = vmatprep.subr.bf16.mxu0 0
        %5071 = vmatpush1.bf16.msra.mxu0 %v4339
        %5072 = vmatprep.subr.bf16.mxu0 0
        %5073 = vmatpush1.bf16.msra.mxu0 0
        %5074 = vmatprep.subr.bf16.mxu0 0
        %5075 = vmatpush1.bf16.msra.mxu0 0
        %5076 = vmatprep.subr.bf16.mxu0 0
        %5077 = vmatpush1.bf16.msra.mxu0 0
        %5078 = vmatprep.subr.bf16.mxu0 0
        %5079 = vmatpush1.bf16.msra.mxu0 0
        %5080 = vmatprep.subr.bf16.mxu0 0
        %5081 = vmatpush1.bf16.msra.mxu0 0
        %5082 = vmatprep.subr.bf16.mxu0 0
        %5083 = vmatpush1.bf16.msra.mxu0 0
        %5084 = vmatprep.subr.bf16.mxu0 0
        %5085 = vmatpush1.bf16.msra.mxu0 0
        %5086 = vmatprep.subr.bf16.mxu0 0
        %5087 = vmatpush1.bf16.msra.mxu0 0
        %5088 = vmatprep.mubr.bf16.mxu0 0
        %5089 = vmatmul.mubr.bf16.gmra.mrb[0].mxu0 %v3797
        %v5090 = vpop.f32.mrb[0].mxu0
        %v5091 = vadd.f32 %v4930, %v5090
        %v5092 = vpop.f32.mrb[0].mxu0
        %v5093 = vpop.f32.mrb[0].mxu0
        %v5094 = vadd.f32 %v4933, %v5093
        %v5095 = vpop.f32.mrb[0].mxu0
        %5096 = vmatprep.mubr.bf16.mxu0 0
        %5097 = vmatmul.mubr.bf16.gmra.mrb[0].mxu0 %v3798
        %v5098 = vpop.f32.mrb[0].mxu0
        %v5099 = vadd.f32 %v4938, %v5098
        %v5100 = vpop.f32.mrb[0].mxu0
        %v5101 = vpop.f32.mrb[0].mxu0
        %v5102 = vadd.f32 %v4941, %v5101
        %v5103 = vpop.f32.mrb[0].mxu0
        %5104 = vmatprep.mubr.bf16.mxu0 0
        %5105 = vmatmul.mubr.bf16.gmra.mrb[0].mxu0 %v3799
        %v5106 = vpop.f32.mrb[0].mxu0
        %v5107 = vadd.f32 %v4946, %v5106
        %v5108 = vpop.f32.mrb[0].mxu0
        %v5109 = vpop.f32.mrb[0].mxu0
        %v5110 = vadd.f32 %v4949, %v5109
        %v5111 = vpop.f32.mrb[0].mxu0
        %5112 = vmatprep.mubr.bf16.mxu0 0
        %5113 = vmatmul.mubr.bf16.gmra.mrb[0].mxu0 %v3800
        %v5114 = vpop.f32.mrb[0].mxu0
        %v5115 = vadd.f32 %v4954, %v5114
        %v5116 = vpop.f32.mrb[0].mxu0
        %v5117 = vpop.f32.mrb[0].mxu0
        %v5118 = vadd.f32 %v4957, %v5117
        %v5119 = vpop.f32.mrb[0].mxu0
        %5120 = vmatprep.mubr.bf16.mxu0 0
        %5121 = vmatmul.mubr.bf16.gmra.mrb[0].mxu0 %v3801
        %v5122 = vpop.f32.mrb[0].mxu0
        %v5123 = vadd.f32 %v4962, %v5122
        %v5124 = vpop.f32.mrb[0].mxu0
        %v5125 = vpop.f32.mrb[0].mxu0
        %v5126 = vadd.f32 %v4965, %v5125
        %v5127 = vpop.f32.mrb[0].mxu0
        %5128 = vmatprep.mubr.bf16.mxu0 0
        %5129 = vmatmul.mubr.bf16.gmra.mrb[0].mxu0 %v3802
        %v5130 = vpop.f32.mrb[0].mxu0
        %v5131 = vadd.f32 %v4970, %v5130
        %v5132 = vpop.f32.mrb[0].mxu0
        %v5133 = vpop.f32.mrb[0].mxu0
        %v5134 = vadd.f32 %v4973, %v5133
        %v5135 = vpop.f32.mrb[0].mxu0
        %5136 = vmatprep.mubr.bf16.mxu0 0
        %5137 = vmatmul.mubr.bf16.gmra.mrb[0].mxu0 %v3803
        %v5138 = vpop.f32.mrb[0].mxu0
        %v5139 = vadd.f32 %v4978, %v5138
        %v5140 = vpop.f32.mrb[0].mxu0
        %v5141 = vpop.f32.mrb[0].mxu0
        %v5142 = vadd.f32 %v4981, %v5141
        %v5143 = vpop.f32.mrb[0].mxu0
        %5144 = vmatprep.mubr.bf16.mxu0 0
        %5145 = vmatmul.mubr.bf16.gmra.mrb[0].mxu0 %v3804
        %v5146 = vpop.f32.mrb[0].mxu0
        %v5147 = vadd.f32 %v4986, %v5146
        %v5148 = vpop.f32.mrb[0].mxu0
        %v5149 = vpop.f32.mrb[0].mxu0
        %v5150 = vadd.f32 %v4989, %v5149
        %v5151 = vpop.f32.mrb[0].mxu0
        %5152 = vmatprep.mubr.bf16.mxu0 0
        %5153 = vmatmul.mubr.bf16.gmra.mrb[0].mxu0 %v3805
        %v5154 = vpop.f32.mrb[0].mxu0
        %v5155 = vadd.f32 %v4994, %v5154
        %v5156 = vpop.f32.mrb[0].mxu0
        %v5157 = vpop.f32.mrb[0].mxu0
        %v5158 = vadd.f32 %v4997, %v5157
        %v5159 = vpop.f32.mrb[0].mxu0
        %5160 = vmatprep.mubr.bf16.mxu0 0
        %5161 = vmatmul.mubr.bf16.gmra.mrb[0].mxu0 %v3806
        %v5162 = vpop.f32.mrb[0].mxu0
        %v5163 = vadd.f32 %v5002, %v5162
        %v5164 = vpop.f32.mrb[0].mxu0
        %v5165 = vpop.f32.mrb[0].mxu0
        %v5166 = vadd.f32 %v5005, %v5165
        %v5167 = vpop.f32.mrb[0].mxu0
        %5168 = vmatprep.mubr.bf16.mxu0 0
        %5169 = vmatmul.mubr.bf16.gmra.mrb[0].mxu0 %v3807
        %v5170 = vpop.f32.mrb[0].mxu0
        %v5171 = vadd.f32 %v5010, %v5170
        %v5172 = vpop.f32.mrb[0].mxu0
        %v5173 = vpop.f32.mrb[0].mxu0
        %v5174 = vadd.f32 %v5013, %v5173
        %v5175 = vpop.f32.mrb[0].mxu0
        %5176 = vmatprep.mubr.bf16.mxu0 0
        %5177 = vmatmul.mubr.bf16.gmra.mrb[0].mxu0 %v3808
        %v5178 = vpop.f32.mrb[0].mxu0
        %v5179 = vadd.f32 %v5018, %v5178
        %v5180 = vpop.f32.mrb[0].mxu0
        %v5181 = vpop.f32.mrb[0].mxu0
        %v5182 = vadd.f32 %v5021, %v5181
        %v5183 = vpop.f32.mrb[0].mxu0
        %5184 = vmatprep.mubr.bf16.mxu0 0
        %5185 = vmatmul.mubr.bf16.gmra.mrb[0].mxu0 %v3809
        %v5186 = vpop.f32.mrb[0].mxu0
        %v5187 = vadd.f32 %v5026, %v5186
        %v5188 = vpop.f32.mrb[0].mxu0
        %v5189 = vpop.f32.mrb[0].mxu0
        %v5190 = vadd.f32 %v5029, %v5189
        %v5191 = vpop.f32.mrb[0].mxu0
        %5192 = vmatprep.mubr.bf16.mxu0 0
        %5193 = vmatmul.mubr.bf16.gmra.mrb[0].mxu0 %v3810
        %v5194 = vpop.f32.mrb[0].mxu0
        %v5195 = vadd.f32 %v5034, %v5194
        %v5196 = vpop.f32.mrb[0].mxu0
        %v5197 = vpop.f32.mrb[0].mxu0
        %v5198 = vadd.f32 %v5037, %v5197
        %v5199 = vpop.f32.mrb[0].mxu0
        %5200 = vmatprep.mubr.bf16.mxu0 0
        %5201 = vmatmul.mubr.bf16.gmra.mrb[0].mxu0 %v3811
        %v5202 = vpop.f32.mrb[0].mxu0
        %v5203 = vadd.f32 %v5042, %v5202
        %v5204 = vpop.f32.mrb[0].mxu0
        %v5205 = vpop.f32.mrb[0].mxu0
        %v5206 = vadd.f32 %v5045, %v5205
        %v5207 = vpop.f32.mrb[0].mxu0
        %5208 = vmatprep.mubr.bf16.mxu0 0
        %5209 = vmatmul.mubr.bf16.gmra.mrb[0].mxu0 %v3812
        %v5210 = vpop.f32.mrb[0].mxu0
        %v5211 = vadd.f32 %v5050, %v5210
        %v5212 = vpop.f32.mrb[0].mxu0
        %v5213 = vpop.f32.mrb[0].mxu0
        %v5214 = vadd.f32 %v5053, %v5213
        %v5215 = vpop.f32.mrb[0].mxu0
        %5216 = vdwg.mxu0
        %v5217 = vmax.f32 %v5091, 0.0
        %v5218 = vmax.f32 %v5094, 0.0
        %v5219 = vmax.f32 %v5099, 0.0
        %v5220 = vmax.f32 %v5102, 0.0
        %v5221 = vmax.f32 %v5107, 0.0
        %v5222 = vmax.f32 %v5110, 0.0
        %v5223 = vmax.f32 %v5115, 0.0
        %v5224 = vmax.f32 %v5118, 0.0
        %v5225 = vmax.f32 %v5123, 0.0
        %v5226 = vmax.f32 %v5126, 0.0
        %v5227 = vmax.f32 %v5131, 0.0
        %v5228 = vmax.f32 %v5134, 0.0
        %v5229 = vmax.f32 %v5139, 0.0
        %v5230 = vmax.f32 %v5142, 0.0
        %v5231 = vmax.f32 %v5147, 0.0
        %v5232 = vmax.f32 %v5150, 0.0
        %v5233 = vmax.f32 %v5155, 0.0
        %v5234 = vmax.f32 %v5158, 0.0
        %v5235 = vmax.f32 %v5163, 0.0
        %v5236 = vmax.f32 %v5166, 0.0
        %v5237 = vmax.f32 %v5171, 0.0
        %v5238 = vmax.f32 %v5174, 0.0
        %v5239 = vmax.f32 %v5179, 0.0
        %v5240 = vmax.f32 %v5182, 0.0
        %v5241 = vmax.f32 %v5187, 0.0
        %v5242 = vmax.f32 %v5190, 0.0
        %v5243 = vmax.f32 %v5195, 0.0
        %v5244 = vmax.f32 %v5198, 0.0
        %v5245 = vmax.f32 %v5203, 0.0
        %v5246 = vmax.f32 %v5206, 0.0
        %v5247 = vmax.f32 %v5211, 0.0
        %v5248 = vmax.f32 %v5214, 0.0
        %v5249 = vadd.f32 %v5217, %v5218
        %v5250 = vadd.f32 %v5249, %v5219
        %v5251 = vadd.f32 %v5250, %v5220
        %v5252 = vadd.f32 %v5251, %v5221
        %v5253 = vadd.f32 %v5252, %v5222
        %v5254 = vadd.f32 %v5253, %v5223
        %v5255 = vadd.f32 %v5254, %v5224
        %v5256 = vadd.f32 %v5255, %v5225
        %v5257 = vadd.f32 %v5256, %v5226
        %v5258 = vadd.f32 %v5257, %v5227
        %v5259 = vadd.f32 %v5258, %v5228
        %v5260 = vadd.f32 %v5259, %v5229
        %v5261 = vadd.f32 %v5260, %v5230
        %v5262 = vadd.f32 %v5261, %v5231
        %v5263 = vadd.f32 %v5262, %v5232
        %v5264 = vadd.f32 %v5263, %v5233
        %v5265 = vadd.f32 %v5264, %v5234
        %v5266 = vadd.f32 %v5265, %v5235
        %v5267 = vadd.f32 %v5266, %v5236
        %v5268 = vadd.f32 %v5267, %v5237
        %v5269 = vadd.f32 %v5268, %v5238
        %v5270 = vadd.f32 %v5269, %v5239
        %v5271 = vadd.f32 %v5270, %v5240
        %v5272 = vadd.f32 %v5271, %v5241
        %v5273 = vadd.f32 %v5272, %v5242
        %v5274 = vadd.f32 %v5273, %v5243
        %v5275 = vadd.f32 %v5274, %v5244
        %v5276 = vadd.f32 %v5275, %v5245
        %v5277 = vadd.f32 %v5276, %v5246
        %v5278 = vadd.f32 %v5277, %v5247
        %v5279 = vadd.f32 %v5278, %v5248
        %v5280 = vrot.slane %v5279, 4
        %v5281 = vadd.f32 %v5279, %v5280
        %v5282 = vrot.slane %v5281, 2
        %v5283 = vadd.f32 %v5281, %v5282
        %v5284 = vrot.slane %v5283, 1
        %v5285 = vadd.f32 %v5283, %v5284
        %v5286 = vmul.f32 %v5285, 0.00390625
        %v5287 = vpack.c.bf16 %v5286, %v5286
        %v5288 = vld [vmem:[#allocation9] sm:$0xf]
        %v5289 = vld [vmem:[#allocation9 + $0x4] sm:$0xf]
        %v5290 = vld [vmem:[#allocation9 + $0x8] sm:$0xf]
        %v5291 = vld [vmem:[#allocation9 + $0xc] sm:$0xf]
        %v5292 = vld [vmem:[#allocation9 + $0x10] sm:$0xf]
        %v5293 = vld [vmem:[#allocation9 + $0x14] sm:$0xf]
        %v5294 = vld [vmem:[#allocation9 + $0x18] sm:$0xf]
        %v5295 = vld [vmem:[#allocation9 + $0x1c] sm:$0xf]
        %v5296 = vld [vmem:[#allocation9 + $0x20] sm:$0xf]
        %v5297 = vld [vmem:[#allocation9 + $0x24] sm:$0xf]
        %v5298 = vld [vmem:[#allocation9 + $0x28] sm:$0xf]
        %v5299 = vld [vmem:[#allocation9 + $0x2c] sm:$0xf]
        %v5300 = vld [vmem:[#allocation9 + $0x30] sm:$0xf]
        %v5301 = vld [vmem:[#allocation9 + $0x34] sm:$0xf]
        %v5302 = vld [vmem:[#allocation9 + $0x38] sm:$0xf]
        %v5303 = vld [vmem:[#allocation9 + $0x3c] sm:$0xf]
        %v5304 = vld [vmem:[%s6] sm:$0x1]
        %v5321 = vunpack.c.l.b16 %v5288
        %v5322 = vunpack.c.l.b16 %v5289
        %v5323 = vunpack.c.l.b16 %v5290
        %v5324 = vunpack.c.l.b16 %v5291
        %v5325 = vunpack.c.l.b16 %v5292
        %v5326 = vunpack.c.l.b16 %v5293
        %v5327 = vunpack.c.l.b16 %v5294
        %v5328 = vunpack.c.l.b16 %v5295
        %v5329 = vunpack.c.l.b16 %v5296
        %v5330 = vunpack.c.l.b16 %v5297
        %v5331 = vunpack.c.l.b16 %v5298
        %v5332 = vunpack.c.l.b16 %v5299
        %v5333 = vunpack.c.l.b16 %v5300
        %v5334 = vunpack.c.l.b16 %v5301
        %v5335 = vunpack.c.l.b16 %v5302
        %v5336 = vunpack.c.l.b16 %v5303
        %v5337 = vpack.c.b16 %v5322, %v5321
        %v5338 = vpack.c.b16 %v5324, %v5323
        %v5339 = vpack.c.b16 %v5326, %v5325
        %v5340 = vpack.c.b16 %v5328, %v5327
        %v5341 = vpack.c.b16 %v5330, %v5329
        %v5342 = vpack.c.b16 %v5332, %v5331
        %v5343 = vpack.c.b16 %v5334, %v5333
        %v5344 = vpack.c.b16 %v5336, %v5335
        %5353 = vmatprep.subr.bf16.mxu0 0
        %5354 = vmatpush1.bf16.msra.mxu0 %v5337
        %5355 = vmatprep.subr.bf16.mxu0 0
        %5356 = vmatpush1.bf16.msra.mxu0 %v5338
        %5357 = vmatprep.subr.bf16.mxu0 0
        %5358 = vmatpush1.bf16.msra.mxu0 %v5339
        %5359 = vmatprep.subr.bf16.mxu0 0
        %5360 = vmatpush1.bf16.msra.mxu0 %v5340
        %5361 = vmatprep.subr.bf16.mxu0 0
        %5362 = vmatpush1.bf16.msra.mxu0 %v5341
        %5363 = vmatprep.subr.bf16.mxu0 0
        %5364 = vmatpush1.bf16.msra.mxu0 %v5342
        %5365 = vmatprep.subr.bf16.mxu0 0
        %5366 = vmatpush1.bf16.msra.mxu0 %v5343
        %5367 = vmatprep.subr.bf16.mxu0 0
        %5368 = vmatpush1.bf16.msra.mxu0 %v5344
        %5369 = vmatprep.subr.bf16.mxu0 0
        %5370 = vmatpush1.bf16.msra.mxu0 0
        %5371 = vmatprep.subr.bf16.mxu0 0
        %5372 = vmatpush1.bf16.msra.mxu0 0
        %5373 = vmatprep.subr.bf16.mxu0 0
        %5374 = vmatpush1.bf16.msra.mxu0 0
        %5375 = vmatprep.subr.bf16.mxu0 0
        %5376 = vmatpush1.bf16.msra.mxu0 0
        %5377 = vmatprep.subr.bf16.mxu0 0
        %5378 = vmatpush1.bf16.msra.mxu0 0
        %5379 = vmatprep.subr.bf16.mxu0 0
        %5380 = vmatpush1.bf16.msra.mxu0 0
        %5381 = vmatprep.subr.bf16.mxu0 0
        %5382 = vmatpush1.bf16.msra.mxu0 0
        %5383 = vmatprep.subr.bf16.mxu0 0
        %5384 = vmatpush1.bf16.msra.mxu0 0
        %5385 = vmatprep.mubr.bf16.mxu0 0
        %5386 = vmatmul.mubr.bf16.gmra.mrb[0].mxu0 %v5287
        %v5387 = vpop.f32.mrb[0].mxu0
        %v5388 = vadd.f32 %v5304, %v5387
        %v5389 = vpop.f32.mrb[0].mxu0
        %v5390 = vpop.f32.mrb[0].mxu0
        %v5391 = vpop.f32.mrb[0].mxu0
        %5392 = vdwg.mxu0
        %v5393 = vxor.u32 %v5388, 2147483648
        %v5394 = vmul.f32 %v5393, 1.442695
        %v5395 = vpow.pop %v5394
        %v5396 = vadd.f32 %v5395, 1.0
        %v5397 = vrcp.pop %v5396
        %v5398 = vmul.f32 1.0, %v5397
        %5399 = vst [vmem:[%s339] sm:$0x1] %v5398
        %s5400 = sand.u32 %s186, 1
        %s5401 = scalar_lea.sflag [#allocation5], %s5400
        %s5402 = sand.u32 %s186, 1
        %s5403 = scalar_lea.vmem [#allocation11], %s5402
        // Predicated region
        $region65: #{tpu_custom_call.1} parent=47 // pred_check
          %p5404 = pneg %p196
        $region66: #{tpu_custom_call.1} parent=47 // pred_check_branch
          %5406 = sbr.rel (%p5404) target = $region68
        $region67: #{tpu_custom_call.1} parent=47 // pred_region
          %s5408 = ssub.s32 16, 16
          %5409 = vsyncadd %s5401, %s5408
          %s5410 = smul.addr %s26, 16
          %s5411 = scalar_lea.hbm %s7, %s5410
          %s5413 = sshll.u32 %s5403, 4
          %s5414 = int_to_ptr.vmem [resolvable:$true] %s5413
          %5416 = dma.vmem_to_hbm [thread:$0]  %s5414, 16, %s5411, %s5401
        $region68: #{tpu_custom_call.1} parent=47 // pred_fallthru
          _
      $region48: #{tpu_custom_call.1} parent=5 // pred_fallthru
        _
      %p5417 = scmp.le.s32.totalorder 2, %s21
      // Predicated region
      $region69: #{tpu_custom_call.1} parent=5 // pred_check
        %p5418 = pneg %p5417
      $region70: #{tpu_custom_call.1} parent=5 // pred_check_branch
        %5420 = sbr.rel (%p5418) target = $region72
      $region71: #{tpu_custom_call.1} parent=5 // pred_region
        %s5421 = ssub.s32 %s21, 2
        // Predicated region
        $region73: #{tpu_custom_call.1} parent=71 // pred_check
          %p5422 = pneg %p202
        $region74: #{tpu_custom_call.1} parent=71 // pred_check_branch
          %5424 = sbr.rel (%p5422) target = $region76
        $region75: #{tpu_custom_call.1} parent=71 // pred_region
          %s5425 = sand.u32 %s187, 1
          %s5426 = scalar_lea.sflag [#allocation5], %s5425
          %s5427 = sand.u32 %s187, 1
          %s5428 = scalar_lea.vmem [#allocation11], %s5427
          %5429 = dma.done %s5426, 16
        $region76: #{tpu_custom_call.1} parent=71 // pred_fallthru
          _
      $region72: #{tpu_custom_call.1} parent=5 // pred_fallthru
        _
    $region6: #{tpu_custom_call.1} parent=1 // loop_footer
      %s25 = sadd.s32 1, %s21
    $region7: #{tpu_custom_call.1} parent=1 // loop_footer_branch
      %20 = sbr.rel target = $region3
    $region8: #{tpu_custom_call.1} parent=1 // loop_exit
      _
    %5430 = vsyncpa [#allocation4], 1
    %s5431 = scalar_lea.sflag [#allocation4], 1
    %5432 = vsyncpa %s5431, 1
    %5433 = vsyncpa [#allocation7], 1
    %5434 = vsyncpa [#allocation10], 1
    %5435 = vsyncpa [#allocation5], 1
    %s5436 = scalar_lea.sflag [#allocation5], 1
    %5437 = vsyncpa %s5436, 1

</llo_original>
